<compile_context>
chip_gen: v7x
topology: tpu7x:2x2x1
jax: 0.10.0
libtpu: 0.0.40
codegen_flags: <defaults>
</compile_context>

<pallas_src>
import math

import jax
import jax.numpy as jnp
from jax.experimental import pallas as pl
from jax.experimental.pallas import tpu as pltpu

# ---- Config (matches the PyTorch Config; vocab/seq/depth kept small for the test) --
VOCAB = 128          # len(vocab) stand-in; 128 keeps the LM-logit store lane-dense
N_SEG = 2
N_LAYER = 2          # config.n_layer = 6; reduced for the small self-test
D_HIDN = 256
N_HEAD = 4
D_HEAD = 64
D_FF = 1024
EPS = 1e-12
I_PAD = 0
SCALE = 1.0 / (D_HEAD ** 0.5)
HD = N_HEAD * D_HEAD

LAYER_PARAM_ORDER = [
    "wqkv", "bqkv", "wo", "bo", "ln1_g", "ln1_b",
    "wf1", "bf1", "wf2", "bf2", "ln2_g", "ln2_b",
]


def _layer_norm(v, g, b):
    mu = jnp.mean(v, axis=-1, keepdims=True)
    var = jnp.mean((v - mu) ** 2, axis=-1, keepdims=True)
    return (v - mu) * jax.lax.rsqrt(var + EPS) * g + b


def _gelu(x):
    # exact (erf) GELU, matching torch.nn.functional.gelu default
    return 0.5 * x * (1.0 + jax.lax.erf(x * (1.0 / math.sqrt(2.0))))


# ---- Pallas kernel #1: one full EncoderLayer forward (whole batch per call) --------
def encoder_layer(x, attn_mask, lp):
    """x: (B,S,D) f32, attn_mask: (B,S,S) int32 (nonzero => padded key position)."""
    B, S, D = x.shape

    def kernel(x_ref, mask_ref,
               wqkv_ref, bqkv_ref, wo_ref, bo_ref, ln1g_ref, ln1b_ref,
               wf1_ref, bf1_ref, wf2_ref, bf2_ref, ln2g_ref, ln2b_ref,
               out_ref, attn_ref):
        x2d = x_ref[...].reshape(B * S, D)                  # f32 residual stream
        mask = mask_ref[...]                                # (B,S,S)

        # --- fused QKV projection: one MXU matmul, N = 3*H*Dh = 768 ------------
        qkv = jnp.dot(x2d.astype(jnp.bfloat16), wqkv_ref[...],
                      preferred_element_type=jnp.float32) + bqkv_ref[...]

        def split_heads(off):
            # (B*S, H*Dh) columns -> (H*B, S, Dh): head-major batch dim so the whole
            # attention is two batched einsums (no per-head matmul loop).
            cols = [qkv[:, off + h * D_HEAD: off + (h + 1) * D_HEAD]
                    for h in range(N_HEAD)]
            return jnp.stack(cols, axis=0).reshape(N_HEAD * B, S, D_HEAD)

        q = split_heads(0).astype(jnp.bfloat16)
        k = split_heads(HD).astype(jnp.bfloat16)
        v = split_heads(2 * HD).astype(jnp.bfloat16)

        # --- scaled dot-product attention, batched over (head, batch) ----------
        s = jnp.einsum("nqd,nkd->nqk", q, k,
                       preferred_element_type=jnp.float32) * SCALE
        s4 = s.reshape(N_HEAD, B, S, S)
        s4 = jnp.where(mask[None] != 0, jnp.float32(-1e9), s4)
        s4 = s4 - jnp.max(s4, axis=-1, keepdims=True)
        e = jnp.exp(s4)
        p4 = e * pl.reciprocal(jnp.sum(e, axis=-1, keepdims=True), approx=True)
        # TODO(synk): attention / output / FFN dropout omitted (eval-mode identity)
        attn_ref[...] = p4                                  # (H,B,S,S), host re-orders

        p = p4.reshape(N_HEAD * B, S, S).astype(jnp.bfloat16)
        ctx = jnp.einsum("nqk,nkd->nqd", p, v,
                         preferred_element_type=jnp.float32)        # (H*B,S,Dh)
        ctx3 = ctx.reshape(N_HEAD, B * S, D_HEAD)
        context = jnp.concatenate([ctx3[h] for h in range(N_HEAD)], axis=-1)

        att = jnp.dot(context.astype(jnp.bfloat16), wo_ref[...],
                      preferred_element_type=jnp.float32) + bo_ref[...]

        # --- residual + LayerNorm 1 ---------------------------------------------
        h1 = _layer_norm(x2d + att, ln1g_ref[...], ln1b_ref[...])

        # --- position-wise FFN (Conv1d k=1 == matmul over hidden) ----------------
        f = _gelu(jnp.dot(h1.astype(jnp.bfloat16), wf1_ref[...],
                          preferred_element_type=jnp.float32) + bf1_ref[...])
        f2 = jnp.dot(f.astype(jnp.bfloat16), wf2_ref[...],
                     preferred_element_type=jnp.float32) + bf2_ref[...]

        # --- residual + LayerNorm 2 ---------------------------------------------
        out_ref[...] = _layer_norm(f2 + h1, ln2g_ref[...],
                                   ln2b_ref[...]).reshape(B, S, D)

    weights = [lp[name] for name in LAYER_PARAM_ORDER]
    in_specs = [pl.BlockSpec(x.shape, lambda i: (0, 0, 0)),
                pl.BlockSpec(attn_mask.shape, lambda i: (0, 0, 0))]
    for w in weights:
        in_specs.append(pl.BlockSpec(w.shape, lambda i, n=w.ndim: (0,) * n))
    out_specs = [pl.BlockSpec((B, S, D), lambda i: (0, 0, 0)),
                 pl.BlockSpec((N_HEAD, B, S, S), lambda i: (0, 0, 0, 0))]

    out, attn = pl.pallas_call(
        kernel,
        grid=(1,),   # whole (tiny) batch in one step; tile (B*S) rows at real sizes
        in_specs=in_specs,
        out_specs=out_specs,
        out_shape=(jax.ShapeDtypeStruct((B, S, D), jnp.float32),
                   jax.ShapeDtypeStruct((N_HEAD, B, S, S), jnp.float32)),
        compiler_params=pltpu.CompilerParams(dimension_semantics=("arbitrary",)),
    )(x, attn_mask, *weights)
    # kernel stores attention probs head-major; present them (B,H,S,S) like PyTorch
    return out, jnp.transpose(attn, (1, 0, 2, 3))


# ---- Pallas kernel #2: BERT pooler + pretrain heads --------------------------------
def bert_heads(x, emb_t, w_lin, b_lin, w_cls):
    """Returns (logits_cls (B,2), logits_lm (B,S,V)); emb_t is the tied LM weight."""
    B, S, D = x.shape
    V = emb_t.shape[1]

    def kernel(x_ref, emb_t_ref, w_lin_ref, b_lin_ref, w_cls_ref, cls_ref, lm_ref):
        xf = x_ref[...]                                     # (B,S,D) f32
        x2d = xf.reshape(B * S, D).astype(jnp.bfloat16)
        lm = jnp.dot(x2d, emb_t_ref[...], preferred_element_type=jnp.float32)
        lm_ref[...] = lm.reshape(B, S, V)                   # tied-weight LM head

        cls_tok = xf[:, 0:1, :].reshape(B, D)               # outputs[:, 0]
        h = jnp.tanh(jnp.dot(cls_tok.astype(jnp.bfloat16), w_lin_ref[...],
                             preferred_element_type=jnp.float32) + b_lin_ref[...])
        cls_ref[...] = jnp.dot(h.astype(jnp.bfloat16), w_cls_ref[...],
                               preferred_element_type=jnp.float32)

    args = (x, emb_t, w_lin, b_lin, w_cls)
    in_specs = [pl.BlockSpec(a.shape, lambda i, n=a.ndim: (0,) * n) for a in args]
    out_specs = [pl.BlockSpec((B, 2), lambda i: (0, 0)),
                 pl.BlockSpec((B, S, V), lambda i: (0, 0, 0))]
    return pl.pallas_call(
        kernel,
        grid=(1,),
        in_specs=in_specs,
        out_specs=out_specs,
        out_shape=(jax.ShapeDtypeStruct((B, 2), jnp.float32),
                   jax.ShapeDtypeStruct((B, S, V), jnp.float32)),
        compiler_params=pltpu.CompilerParams(dimension_semantics=("arbitrary",)),
    )(*args)


# ---- BERTPretrain forward (embeddings in XLA, heavy math in Pallas) ----------------
def bert_pretrain_forward(params, inputs, segments):
    B, S = inputs.shape
    positions = (jnp.arange(1, S + 1, dtype=jnp.int32)[None, :]
                 * (inputs != I_PAD).astype(jnp.int32))
    # TODO(synk): embedding-table gathers left to XLA; a Pallas gather needs manual DMA
    x = (params["enc_emb"][inputs] + params["pos_emb"][positions]
         + params["seg_emb"][segments])
    attn_mask = jnp.broadcast_to((inputs == I_PAD)[:, None, :],
                                 (B, S, S)).astype(jnp.int32)

    attn_probs = []
    for lp in params["layers"]:
        x, ap = encoder_layer(x, attn_mask, lp)
        attn_probs.append(ap)

    emb_t = params["enc_emb"].astype(jnp.bfloat16).T        # tied LM projection (D,V)
    logits_cls, logits_lm = bert_heads(x, emb_t, params["w_lin"],
                                       params["b_lin"], params["w_cls"])
    return logits_cls, logits_lm, attn_probs


# ---- pure-JAX reference (same bf16 matmul discipline, exact softmax) ---------------
def _bdot(a, b):
    return jnp.dot(a.astype(jnp.bfloat16), b.astype(jnp.bfloat16),
                   preferred_element_type=jnp.float32)


def ref_encoder_layer(x, mask, lp):
    B, S, D = x.shape
    x2d = x.reshape(B * S, D)
    qkv = _bdot(x2d, lp["wqkv"]) + lp["bqkv"]

    def heads(off):
        m = qkv[:, off:off + HD].reshape(B, S, N_HEAD, D_HEAD)
        return jnp.transpose(m, (0, 2, 1, 3))               # (B,H,S,Dh)

    q, k, v = heads(0), heads(HD), heads(2 * HD)
    s = jnp.einsum("bhqd,bhkd->bhqk", q.astype(jnp.bfloat16), k.astype(jnp.bfloat16),
                   preferred_element_type=jnp.float32) * SCALE
    s = jnp.where(mask[:, None] != 0, -1e9, s)
    p = jax.nn.softmax(s, axis=-1)
    ctx = jnp.einsum("bhqk,bhkd->bhqd", p.astype(jnp.bfloat16), v.astype(jnp.bfloat16),
                     preferred_element_type=jnp.float32)
    context = jnp.transpose(ctx, (0, 2, 1, 3)).reshape(B * S, HD)
    att = _bdot(context, lp["wo"]) + lp["bo"]
    h1 = _layer_norm(x2d + att, lp["ln1_g"], lp["ln1_b"])
    f = _gelu(_bdot(h1, lp["wf1"]) + lp["bf1"])
    f2 = _bdot(f, lp["wf2"]) + lp["bf2"]
    out = _layer_norm(f2 + h1, lp["ln2_g"], lp["ln2_b"])
    return out.reshape(B, S, D), p


def ref_bert_pretrain(params, inputs, segments):
    B, S = inputs.shape
    positions = (jnp.arange(1, S + 1, dtype=jnp.int32)[None, :]
                 * (inputs != I_PAD).astype(jnp.int32))
    x = (params["enc_emb"][inputs] + params["pos_emb"][positions]
         + params["seg_emb"][segments])
    attn_mask = jnp.broadcast_to((inputs == I_PAD)[:, None, :],
                                 (B, S, S)).astype(jnp.int32)
    attn_probs = []
    for lp in params["layers"]:
        x, ap = ref_encoder_layer(x, attn_mask, lp)
        attn_probs.append(ap)
    emb_t = params["enc_emb"].astype(jnp.bfloat16).T
    cls = jnp.tanh(_bdot(x[:, 0], params["w_lin"]) + params["b_lin"])
    logits_cls = _bdot(cls, params["w_cls"])
    logits_lm = _bdot(x.reshape(B * S, -1), emb_t).reshape(B, S, -1)
    return logits_cls, logits_lm, attn_probs


# ---- parameter init ----------------------------------------------------------------
def init_params(key, max_seq, n_layer=N_LAYER):
    k_emb, k_pos, k_seg, k_lin, k_blin, k_cls, k_layers = jax.random.split(key, 7)

    def mat(k, din, dout):
        # matmul weights stored bf16 (halves DMA, MXU-friendly); accumulation stays f32
        return (jax.random.normal(k, (din, dout), jnp.float32) * 0.02).astype(jnp.bfloat16)

    def vec(k, dout):
        return jax.random.normal(k, (1, dout), jnp.float32) * 0.02

    def layer(k):
        ks = jax.random.split(k, 8)
        return {
            # wq/wk/wv fused host-side into one (D, 3*H*Dh) matrix
            "wqkv": mat(ks[0], D_HIDN, 3 * HD), "bqkv": vec(ks[1], 3 * HD),
            "wo": mat(ks[2], HD, D_HIDN), "bo": vec(ks[3], D_HIDN),
            "ln1_g": jnp.ones((1, D_HIDN), jnp.float32),
            "ln1_b": jnp.zeros((1, D_HIDN), jnp.float32),
            "wf1": mat(ks[4], D_HIDN, D_FF), "bf1": vec(ks[5], D_FF),
            "wf2": mat(ks[6], D_FF, D_HIDN), "bf2": vec(ks[7], D_HIDN),
            "ln2_g": jnp.ones((1, D_HIDN), jnp.float32),
            "ln2_b": jnp.zeros((1, D_HIDN), jnp.float32),
        }

    return {
        "enc_emb": jax.random.normal(k_emb, (VOCAB, D_HIDN), jnp.float32) * 0.02,
        "pos_emb": jax.random.normal(k_pos, (max_seq + 1, D_HIDN), jnp.float32) * 0.02,
        "seg_emb": jax.random.normal(k_seg, (N_SEG, D_HIDN), jnp.float32) * 0.02,
        "w_lin": mat(k_lin, D_HIDN, D_HIDN),
        "b_lin": vec(k_blin, D_HIDN),
        "w_cls": mat(k_cls, D_HIDN, 2),                     # projection_cls (no bias)
        "layers": [layer(k) for k in jax.random.split(k_layers, n_layer)],
    }


if __name__ == "__main__":
    B, S = 2, 16
    key = jax.random.PRNGKey(0)
    k_inp, k_seg, k_par = jax.random.split(key, 3)

    inputs = jax.random.randint(k_inp, (B, S), 1, VOCAB, dtype=jnp.int32)
    inputs = inputs.at[1, S - 3:].set(I_PAD)                # trailing padding in seq 1
    segments = jax.random.randint(k_seg, (B, S), 0, N_SEG, dtype=jnp.int32)
    params = init_params(k_par, max_seq=S)

    logits_cls, logits_lm, attn_probs = bert_pretrain_forward(params, inputs, segments)
    jax.block_until_ready((logits_cls, logits_lm, attn_probs))

    r_cls, r_lm, r_probs = ref_bert_pretrain(params, inputs, segments)
    assert jnp.allclose(logits_cls, r_cls, atol=2e-3, rtol=2e-3)
    assert jnp.allclose(logits_lm, r_lm, atol=2e-3, rtol=2e-3)
    for a, r in zip(attn_probs, r_probs):
        assert jnp.allclose(a, r, atol=2e-3, rtol=2e-3)
    print("KERNEL_OK")
</pallas_src>

<mosaic_0001>
module attributes {stable_mosaic.version = 11 : i64} {
  func.func @kernel(%arg0: i32, %arg1: memref<2x16x256xf32, #tpu.memory_space<vmem>>, %arg2: memref<2x16x16xi32, #tpu.memory_space<vmem>>, %arg3: memref<256x768xbf16, #tpu.memory_space<vmem>>, %arg4: memref<1x768xf32, #tpu.memory_space<vmem>>, %arg5: memref<256x256xbf16, #tpu.memory_space<vmem>>, %arg6: memref<1x256xf32, #tpu.memory_space<vmem>>, %arg7: memref<1x256xf32, #tpu.memory_space<vmem>>, %arg8: memref<1x256xf32, #tpu.memory_space<vmem>>, %arg9: memref<256x1024xbf16, #tpu.memory_space<vmem>>, %arg10: memref<1x1024xf32, #tpu.memory_space<vmem>>, %arg11: memref<1024x256xbf16, #tpu.memory_space<vmem>>, %arg12: memref<1x256xf32, #tpu.memory_space<vmem>>, %arg13: memref<1x256xf32, #tpu.memory_space<vmem>>, %arg14: memref<1x256xf32, #tpu.memory_space<vmem>>, %arg15: memref<2x16x256xf32, #tpu.memory_space<vmem>>, %arg16: memref<4x2x16x16xf32, #tpu.memory_space<vmem>>) attributes {dimension_semantics = [#tpu.dimension_semantics<arbitrary>], iteration_bounds = array<i64: 1>, scalar_prefetch = 0 : i64, scratch_operands = 0 : i64, tpu.core_type = #tpu.core_type<tc>, window_params = [{pipeline_mode = #tpu.pipeline_mode<synchronous>, transform_indices = @transform_0, window_bounds = array<i64: 2, 16, 256>}, {pipeline_mode = #tpu.pipeline_mode<synchronous>, transform_indices = @transform_1, window_bounds = array<i64: 2, 16, 16>}, {pipeline_mode = #tpu.pipeline_mode<synchronous>, transform_indices = @transform_2, window_bounds = array<i64: 256, 768>}, {pipeline_mode = #tpu.pipeline_mode<synchronous>, transform_indices = @transform_3, window_bounds = array<i64: 1, 768>}, {pipeline_mode = #tpu.pipeline_mode<synchronous>, transform_indices = @transform_4, window_bounds = array<i64: 256, 256>}, {pipeline_mode = #tpu.pipeline_mode<synchronous>, transform_indices = @transform_5, window_bounds = array<i64: 1, 256>}, {pipeline_mode = #tpu.pipeline_mode<synchronous>, transform_indices = @transform_6, window_bounds = array<i64: 1, 256>}, {pipeline_mode = #tpu.pipeline_mode<synchronous>, transform_indices = @transform_7, window_bounds = array<i64: 1, 256>}, {pipeline_mode = #tpu.pipeline_mode<synchronous>, transform_indices = @transform_8, window_bounds = array<i64: 256, 1024>}, {pipeline_mode = #tpu.pipeline_mode<synchronous>, transform_indices = @transform_9, window_bounds = array<i64: 1, 1024>}, {pipeline_mode = #tpu.pipeline_mode<synchronous>, transform_indices = @transform_10, window_bounds = array<i64: 1024, 256>}, {pipeline_mode = #tpu.pipeline_mode<synchronous>, transform_indices = @transform_11, window_bounds = array<i64: 1, 256>}, {pipeline_mode = #tpu.pipeline_mode<synchronous>, transform_indices = @transform_12, window_bounds = array<i64: 1, 256>}, {pipeline_mode = #tpu.pipeline_mode<synchronous>, transform_indices = @transform_13, window_bounds = array<i64: 1, 256>}, {pipeline_mode = #tpu.pipeline_mode<synchronous>, transform_indices = @transform_14, window_bounds = array<i64: 2, 16, 256>}, {pipeline_mode = #tpu.pipeline_mode<synchronous>, transform_indices = @transform_15, window_bounds = array<i64: 4, 2, 16, 16>}]} {
    %c0 = arith.constant 0 : index
    %c0_0 = arith.constant 0 : index
    %c0_1 = arith.constant 0 : index
    %0 = vector.load %arg1[%c0, %c0_0, %c0_1] : memref<2x16x256xf32, #tpu.memory_space<vmem>>, vector<2x16x256xf32>
    %1 = vector.shape_cast %0 : vector<2x16x256xf32> to vector<32x256xf32>
    %c0_2 = arith.constant 0 : index
    %c0_3 = arith.constant 0 : index
    %c0_4 = arith.constant 0 : index
    %2 = vector.load %arg2[%c0_2, %c0_3, %c0_4] : memref<2x16x16xi32, #tpu.memory_space<vmem>>, vector<2x16x16xi32>
    %3 = arith.truncf %1 : vector<32x256xf32> to vector<32x256xbf16>
    %c0_5 = arith.constant 0 : index
    %c0_6 = arith.constant 0 : index
    %4 = vector.load %arg3[%c0_5, %c0_6] : memref<256x768xbf16, #tpu.memory_space<vmem>>, vector<256x768xbf16>
    %cst = arith.constant dense<0.000000e+00> : vector<32x768xf32>
    %5 = tpu.matmul %3, %4, %cst {dimension_numbers = #tpu.dot_dimension_numbers<[1], [0], [0], [1], [0, 0, 1, 1], [], []>} : vector<32x256xbf16>, vector<256x768xbf16>, vector<32x768xf32> -> vector<32x768xf32>
    %c0_7 = arith.constant 0 : index
    %c0_8 = arith.constant 0 : index
    %6 = vector.load %arg4[%c0_7, %c0_8] : memref<1x768xf32, #tpu.memory_space<vmem>>, vector<1x768xf32>
    %7 = vector.broadcast %6 : vector<1x768xf32> to vector<32x768xf32>
    %8 = arith.addf %5, %7 : vector<32x768xf32>
    %9 = vector.extract_strided_slice %8 {offsets = [0, 0], sizes = [32, 64], strides = [1, 1]} : vector<32x768xf32> to vector<32x64xf32>
    %10 = vector.extract_strided_slice %8 {offsets = [0, 64], sizes = [32, 64], strides = [1, 1]} : vector<32x768xf32> to vector<32x64xf32>
    %11 = vector.extract_strided_slice %8 {offsets = [0, 128], sizes = [32, 64], strides = [1, 1]} : vector<32x768xf32> to vector<32x64xf32>
    %12 = vector.extract_strided_slice %8 {offsets = [0, 192], sizes = [32, 64], strides = [1, 1]} : vector<32x768xf32> to vector<32x64xf32>
    %13 = vector.shape_cast %9 : vector<32x64xf32> to vector<1x32x64xf32>
    %14 = vector.shape_cast %10 : vector<32x64xf32> to vector<1x32x64xf32>
    %15 = vector.shape_cast %11 : vector<32x64xf32> to vector<1x32x64xf32>
    %16 = vector.shape_cast %12 : vector<32x64xf32> to vector<1x32x64xf32>
    %17 = tpu.concatenate %13, %14, %15, %16 in 0 : vector<1x32x64xf32>, vector<1x32x64xf32>, vector<1x32x64xf32>, vector<1x32x64xf32> -> vector<4x32x64xf32>
    %18 = vector.shape_cast %17 : vector<4x32x64xf32> to vector<8x16x64xf32>
    %19 = arith.truncf %18 : vector<8x16x64xf32> to vector<8x16x64xbf16>
    %20 = vector.extract_strided_slice %8 {offsets = [0, 256], sizes = [32, 64], strides = [1, 1]} : vector<32x768xf32> to vector<32x64xf32>
    %21 = vector.extract_strided_slice %8 {offsets = [0, 320], sizes = [32, 64], strides = [1, 1]} : vector<32x768xf32> to vector<32x64xf32>
    %22 = vector.extract_strided_slice %8 {offsets = [0, 384], sizes = [32, 64], strides = [1, 1]} : vector<32x768xf32> to vector<32x64xf32>
    %23 = vector.extract_strided_slice %8 {offsets = [0, 448], sizes = [32, 64], strides = [1, 1]} : vector<32x768xf32> to vector<32x64xf32>
    %24 = vector.shape_cast %20 : vector<32x64xf32> to vector<1x32x64xf32>
    %25 = vector.shape_cast %21 : vector<32x64xf32> to vector<1x32x64xf32>
    %26 = vector.shape_cast %22 : vector<32x64xf32> to vector<1x32x64xf32>
    %27 = vector.shape_cast %23 : vector<32x64xf32> to vector<1x32x64xf32>
    %28 = tpu.concatenate %24, %25, %26, %27 in 0 : vector<1x32x64xf32>, vector<1x32x64xf32>, vector<1x32x64xf32>, vector<1x32x64xf32> -> vector<4x32x64xf32>
    %29 = vector.shape_cast %28 : vector<4x32x64xf32> to vector<8x16x64xf32>
    %30 = arith.truncf %29 : vector<8x16x64xf32> to vector<8x16x64xbf16>
    %31 = vector.extract_strided_slice %8 {offsets = [0, 512], sizes = [32, 64], strides = [1, 1]} : vector<32x768xf32> to vector<32x64xf32>
    %32 = vector.extract_strided_slice %8 {offsets = [0, 576], sizes = [32, 64], strides = [1, 1]} : vector<32x768xf32> to vector<32x64xf32>
    %33 = vector.extract_strided_slice %8 {offsets = [0, 640], sizes = [32, 64], strides = [1, 1]} : vector<32x768xf32> to vector<32x64xf32>
    %34 = vector.extract_strided_slice %8 {offsets = [0, 704], sizes = [32, 64], strides = [1, 1]} : vector<32x768xf32> to vector<32x64xf32>
    %35 = vector.shape_cast %31 : vector<32x64xf32> to vector<1x32x64xf32>
    %36 = vector.shape_cast %32 : vector<32x64xf32> to vector<1x32x64xf32>
    %37 = vector.shape_cast %33 : vector<32x64xf32> to vector<1x32x64xf32>
    %38 = vector.shape_cast %34 : vector<32x64xf32> to vector<1x32x64xf32>
    %39 = tpu.concatenate %35, %36, %37, %38 in 0 : vector<1x32x64xf32>, vector<1x32x64xf32>, vector<1x32x64xf32>, vector<1x32x64xf32> -> vector<4x32x64xf32>
    %40 = vector.shape_cast %39 : vector<4x32x64xf32> to vector<8x16x64xf32>
    %41 = arith.truncf %40 : vector<8x16x64xf32> to vector<8x16x64xbf16>
    "tpu.trace_start"() <{level = 10 : i32, message = "nqd,nkd->nqk"}> : () -> ()
    %cst_9 = arith.constant dense<0.000000e+00> : vector<8x16x16xf32>
    %42 = tpu.matmul %19, %30, %cst_9 {dimension_numbers = #tpu.dot_dimension_numbers<[2], [2], [1], [1], [0, 0, 0, 1, 1, 1], [0], [0]>} : vector<8x16x64xbf16>, vector<8x16x64xbf16>, vector<8x16x16xf32> -> vector<8x16x16xf32>
    "tpu.trace_stop"() : () -> ()
    %cst_10 = arith.constant 1.250000e-01 : f32
    %43 = vector.broadcast %cst_10 : f32 to vector<8x16x16xf32>
    %44 = arith.mulf %42, %43 : vector<8x16x16xf32>
    %45 = vector.shape_cast %44 : vector<8x16x16xf32> to vector<4x2x16x16xf32>
    %46 = vector.shape_cast %2 : vector<2x16x16xi32> to vector<1x2x16x16xi32>
    %c0_i32 = arith.constant 0 : i32
    %47 = vector.broadcast %c0_i32 : i32 to vector<1x2x16x16xi32>
    %48 = arith.cmpi ne, %46, %47 : vector<1x2x16x16xi32>
    %cst_11 = arith.constant -1.000000e+09 : f32
    %49 = vector.shape_cast %48 : vector<1x2x16x16xi1> to vector<1x2x16x16xi1>
    %50 = vector.broadcast %49 : vector<1x2x16x16xi1> to vector<4x2x16x16xi1>
    %51 = vector.broadcast %cst_11 : f32 to vector<4x2x16x16xf32>
    %52 = arith.select %50, %51, %45 : vector<4x2x16x16xi1>, vector<4x2x16x16xf32>
    %cst_12 = arith.constant dense<0xFF800000> : vector<4x2x16xf32>
    %53 = vector.multi_reduction <maximumf>, %52, %cst_12 [3] : vector<4x2x16x16xf32> to vector<4x2x16xf32>
    %54 = vector.shape_cast %53 : vector<4x2x16xf32> to vector<4x2x16x1xf32>
    %55 = vector.broadcast %54 : vector<4x2x16x1xf32> to vector<4x2x16x16xf32>
    %56 = arith.subf %52, %55 : vector<4x2x16x16xf32>
    %57 = math.exp %56 : vector<4x2x16x16xf32>
    %cst_13 = arith.constant dense<0.000000e+00> : vector<4x2x16xf32>
    %58 = vector.multi_reduction <add>, %57, %cst_13 [3] : vector<4x2x16x16xf32> to vector<4x2x16xf32>
    %59 = vector.shape_cast %58 : vector<4x2x16xf32> to vector<4x2x16x1xf32>
    %60 = tpu.reciprocal %59 {approx = true} : vector<4x2x16x1xf32> -> vector<4x2x16x1xf32>
    %61 = vector.broadcast %60 : vector<4x2x16x1xf32> to vector<4x2x16x16xf32>
    %62 = arith.mulf %57, %61 : vector<4x2x16x16xf32>
    %c0_14 = arith.constant 0 : index
    %c0_15 = arith.constant 0 : index
    %c0_16 = arith.constant 0 : index
    %c0_17 = arith.constant 0 : index
    %63 = vector.load %arg16[%c0_14, %c0_15, %c0_16, %c0_17] : memref<4x2x16x16xf32, #tpu.memory_space<vmem>>, vector<4x2x16x16xf32>
    tpu.vector_store %arg16[%c0_14, %c0_15, %c0_16, %c0_17], %62 {strides = array<i32>} : memref<4x2x16x16xf32, #tpu.memory_space<vmem>>, vector<4x2x16x16xf32>,
    %64 = vector.shape_cast %62 : vector<4x2x16x16xf32> to vector<8x16x16xf32>
    %65 = arith.truncf %64 : vector<8x16x16xf32> to vector<8x16x16xbf16>
    "tpu.trace_start"() <{level = 10 : i32, message = "nqk,nkd->nqd"}> : () -> ()
    %cst_18 = arith.constant dense<0.000000e+00> : vector<8x16x64xf32>
    %66 = tpu.matmul %65, %41, %cst_18 {dimension_numbers = #tpu.dot_dimension_numbers<[2], [1], [1], [2], [0, 0, 0, 1, 1, 2], [0], [0]>} : vector<8x16x16xbf16>, vector<8x16x64xbf16>, vector<8x16x64xf32> -> vector<8x16x64xf32>
    "tpu.trace_stop"() : () -> ()
    %67 = vector.shape_cast %66 : vector<8x16x64xf32> to vector<4x32x64xf32>
    %68 = vector.extract_strided_slice %67 {offsets = [0, 0, 0], sizes = [1, 32, 64], strides = [1, 1, 1]} : vector<4x32x64xf32> to vector<1x32x64xf32>
    %69 = vector.shape_cast %68 : vector<1x32x64xf32> to vector<32x64xf32>
    %70 = vector.extract_strided_slice %67 {offsets = [1, 0, 0], sizes = [1, 32, 64], strides = [1, 1, 1]} : vector<4x32x64xf32> to vector<1x32x64xf32>
    %71 = vector.shape_cast %70 : vector<1x32x64xf32> to vector<32x64xf32>
    %72 = vector.extract_strided_slice %67 {offsets = [2, 0, 0], sizes = [1, 32, 64], strides = [1, 1, 1]} : vector<4x32x64xf32> to vector<1x32x64xf32>
    %73 = vector.shape_cast %72 : vector<1x32x64xf32> to vector<32x64xf32>
    %74 = vector.extract_strided_slice %67 {offsets = [3, 0, 0], sizes = [1, 32, 64], strides = [1, 1, 1]} : vector<4x32x64xf32> to vector<1x32x64xf32>
    %75 = vector.shape_cast %74 : vector<1x32x64xf32> to vector<32x64xf32>
    %76 = tpu.concatenate %69, %71, %73, %75 in 1 : vector<32x64xf32>, vector<32x64xf32>, vector<32x64xf32>, vector<32x64xf32> -> vector<32x256xf32>
    %77 = arith.truncf %76 : vector<32x256xf32> to vector<32x256xbf16>
    %c0_19 = arith.constant 0 : index
    %c0_20 = arith.constant 0 : index
    %78 = vector.load %arg5[%c0_19, %c0_20] : memref<256x256xbf16, #tpu.memory_space<vmem>>, vector<256x256xbf16>
    %cst_21 = arith.constant dense<0.000000e+00> : vector<32x256xf32>
    %79 = tpu.matmul %77, %78, %cst_21 {dimension_numbers = #tpu.dot_dimension_numbers<[1], [0], [0], [1], [0, 0, 1, 1], [], []>} : vector<32x256xbf16>, vector<256x256xbf16>, vector<32x256xf32> -> vector<32x256xf32>
    %c0_22 = arith.constant 0 : index
    %c0_23 = arith.constant 0 : index
    %80 = vector.load %arg6[%c0_22, %c0_23] : memref<1x256xf32, #tpu.memory_space<vmem>>, vector<1x256xf32>
    %81 = vector.broadcast %80 : vector<1x256xf32> to vector<32x256xf32>
    %82 = arith.addf %79, %81 : vector<32x256xf32>
    %83 = arith.addf %1, %82 : vector<32x256xf32>
    %c0_24 = arith.constant 0 : index
    %c0_25 = arith.constant 0 : index
    %84 = vector.load %arg7[%c0_24, %c0_25] : memref<1x256xf32, #tpu.memory_space<vmem>>, vector<1x256xf32>
    %c0_26 = arith.constant 0 : index
    %c0_27 = arith.constant 0 : index
    %85 = vector.load %arg8[%c0_26, %c0_27] : memref<1x256xf32, #tpu.memory_space<vmem>>, vector<1x256xf32>
    %cst_28 = arith.constant dense<0.000000e+00> : vector<32xf32>
    %86 = vector.multi_reduction <add>, %83, %cst_28 [1] : vector<32x256xf32> to vector<32xf32>
    %87 = vector.shape_cast %86 : vector<32xf32> to vector<32x1xf32>
    %cst_29 = arith.constant 2.560000e+02 : f32
    %88 = vector.broadcast %cst_29 : f32 to vector<32x1xf32>
    %89 = arith.divf %87, %88 : vector<32x1xf32>
    %90 = vector.broadcast %89 : vector<32x1xf32> to vector<32x256xf32>
    %91 = arith.subf %83, %90 : vector<32x256xf32>
    %92 = arith.mulf %91, %91 : vector<32x256xf32>
    %cst_30 = arith.constant dense<0.000000e+00> : vector<32xf32>
    %93 = vector.multi_reduction <add>, %92, %cst_30 [1] : vector<32x256xf32> to vector<32xf32>
    %94 = vector.shape_cast %93 : vector<32xf32> to vector<32x1xf32>
    %cst_31 = arith.constant 2.560000e+02 : f32
    %95 = vector.broadcast %cst_31 : f32 to vector<32x1xf32>
    %96 = arith.divf %94, %95 : vector<32x1xf32>
    %97 = vector.broadcast %89 : vector<32x1xf32> to vector<32x256xf32>
    %98 = arith.subf %83, %97 : vector<32x256xf32>
    %cst_32 = arith.constant 9.99999996E-13 : f32
    %99 = vector.broadcast %cst_32 : f32 to vector<32x1xf32>
    %100 = arith.addf %96, %99 : vector<32x1xf32>
    %101 = math.rsqrt %100 : vector<32x1xf32>
    %102 = vector.broadcast %101 : vector<32x1xf32> to vector<32x256xf32>
    %103 = arith.mulf %98, %102 : vector<32x256xf32>
    %104 = vector.broadcast %84 : vector<1x256xf32> to vector<32x256xf32>
    %105 = arith.mulf %103, %104 : vector<32x256xf32>
    %106 = vector.broadcast %85 : vector<1x256xf32> to vector<32x256xf32>
    %107 = arith.addf %105, %106 : vector<32x256xf32>
    %108 = arith.truncf %107 : vector<32x256xf32> to vector<32x256xbf16>
    %c0_33 = arith.constant 0 : index
    %c0_34 = arith.constant 0 : index
    %109 = vector.load %arg9[%c0_33, %c0_34] : memref<256x1024xbf16, #tpu.memory_space<vmem>>, vector<256x1024xbf16>
    %cst_35 = arith.constant dense<0.000000e+00> : vector<32x1024xf32>
    %110 = tpu.matmul %108, %109, %cst_35 {dimension_numbers = #tpu.dot_dimension_numbers<[1], [0], [0], [1], [0, 0, 1, 1], [], []>} : vector<32x256xbf16>, vector<256x1024xbf16>, vector<32x1024xf32> -> vector<32x1024xf32>
    %c0_36 = arith.constant 0 : index
    %c0_37 = arith.constant 0 : index
    %111 = vector.load %arg10[%c0_36, %c0_37] : memref<1x1024xf32, #tpu.memory_space<vmem>>, vector<1x1024xf32>
    %112 = vector.broadcast %111 : vector<1x1024xf32> to vector<32x1024xf32>
    %113 = arith.addf %110, %112 : vector<32x1024xf32>
    %cst_38 = arith.constant 5.000000e-01 : f32
    %114 = vector.broadcast %cst_38 : f32 to vector<32x1024xf32>
    %115 = arith.mulf %114, %113 : vector<32x1024xf32>
    %cst_39 = arith.constant 0.707106769 : f32
    %116 = vector.broadcast %cst_39 : f32 to vector<32x1024xf32>
    %117 = arith.mulf %113, %116 : vector<32x1024xf32>
    %118 = math.erf %117 : vector<32x1024xf32>
    %cst_40 = arith.constant 1.000000e+00 : f32
    %119 = vector.broadcast %cst_40 : f32 to vector<32x1024xf32>
    %120 = arith.addf %119, %118 : vector<32x1024xf32>
    %121 = arith.mulf %115, %120 : vector<32x1024xf32>
    %122 = arith.truncf %121 : vector<32x1024xf32> to vector<32x1024xbf16>
    %c0_41 = arith.constant 0 : index
    %c0_42 = arith.constant 0 : index
    %123 = vector.load %arg11[%c0_41, %c0_42] : memref<1024x256xbf16, #tpu.memory_space<vmem>>, vector<1024x256xbf16>
    %cst_43 = arith.constant dense<0.000000e+00> : vector<32x256xf32>
    %124 = tpu.matmul %122, %123, %cst_43 {dimension_numbers = #tpu.dot_dimension_numbers<[1], [0], [0], [1], [0, 0, 1, 1], [], []>} : vector<32x1024xbf16>, vector<1024x256xbf16>, vector<32x256xf32> -> vector<32x256xf32>
    %c0_44 = arith.constant 0 : index
    %c0_45 = arith.constant 0 : index
    %125 = vector.load %arg12[%c0_44, %c0_45] : memref<1x256xf32, #tpu.memory_space<vmem>>, vector<1x256xf32>
    %126 = vector.broadcast %125 : vector<1x256xf32> to vector<32x256xf32>
    %127 = arith.addf %124, %126 : vector<32x256xf32>
    %128 = arith.addf %127, %107 : vector<32x256xf32>
    %c0_46 = arith.constant 0 : index
    %c0_47 = arith.constant 0 : index
    %129 = vector.load %arg13[%c0_46, %c0_47] : memref<1x256xf32, #tpu.memory_space<vmem>>, vector<1x256xf32>
    %c0_48 = arith.constant 0 : index
    %c0_49 = arith.constant 0 : index
    %130 = vector.load %arg14[%c0_48, %c0_49] : memref<1x256xf32, #tpu.memory_space<vmem>>, vector<1x256xf32>
    %cst_50 = arith.constant dense<0.000000e+00> : vector<32xf32>
    %131 = vector.multi_reduction <add>, %128, %cst_50 [1] : vector<32x256xf32> to vector<32xf32>
    %132 = vector.shape_cast %131 : vector<32xf32> to vector<32x1xf32>
    %cst_51 = arith.constant 2.560000e+02 : f32
    %133 = vector.broadcast %cst_51 : f32 to vector<32x1xf32>
    %134 = arith.divf %132, %133 : vector<32x1xf32>
    %135 = vector.broadcast %134 : vector<32x1xf32> to vector<32x256xf32>
    %136 = arith.subf %128, %135 : vector<32x256xf32>
    %137 = arith.mulf %136, %136 : vector<32x256xf32>
    %cst_52 = arith.constant dense<0.000000e+00> : vector<32xf32>
    %138 = vector.multi_reduction <add>, %137, %cst_52 [1] : vector<32x256xf32> to vector<32xf32>
    %139 = vector.shape_cast %138 : vector<32xf32> to vector<32x1xf32>
    %cst_53 = arith.constant 2.560000e+02 : f32
    %140 = vector.broadcast %cst_53 : f32 to vector<32x1xf32>
    %141 = arith.divf %139, %140 : vector<32x1xf32>
    %142 = vector.broadcast %134 : vector<32x1xf32> to vector<32x256xf32>
    %143 = arith.subf %128, %142 : vector<32x256xf32>
    %cst_54 = arith.constant 9.99999996E-13 : f32
    %144 = vector.broadcast %cst_54 : f32 to vector<32x1xf32>
    %145 = arith.addf %141, %144 : vector<32x1xf32>
    %146 = math.rsqrt %145 : vector<32x1xf32>
    %147 = vector.broadcast %146 : vector<32x1xf32> to vector<32x256xf32>
    %148 = arith.mulf %143, %147 : vector<32x256xf32>
    %149 = vector.broadcast %129 : vector<1x256xf32> to vector<32x256xf32>
    %150 = arith.mulf %148, %149 : vector<32x256xf32>
    %151 = vector.broadcast %130 : vector<1x256xf32> to vector<32x256xf32>
    %152 = arith.addf %150, %151 : vector<32x256xf32>
    %153 = vector.shape_cast %152 : vector<32x256xf32> to vector<2x16x256xf32>
    %c0_55 = arith.constant 0 : index
    %c0_56 = arith.constant 0 : index
    %c0_57 = arith.constant 0 : index
    %154 = vector.load %arg15[%c0_55, %c0_56, %c0_57] : memref<2x16x256xf32, #tpu.memory_space<vmem>>, vector<2x16x256xf32>
    tpu.vector_store %arg15[%c0_55, %c0_56, %c0_57], %153 {strides = array<i32>} : memref<2x16x256xf32, #tpu.memory_space<vmem>>, vector<2x16x256xf32>,
    return
  }
  func.func @transform_0(%arg0: i32) -> (i32, i32, i32) {
    %c0_i32 = arith.constant 0 : i32
    %c0_i32_0 = arith.constant 0 : i32
    %c0_i32_1 = arith.constant 0 : i32
    %c0_i32_2 = arith.constant 0 : i32
    return %c0_i32, %c0_i32_0, %c0_i32_1 : i32, i32, i32
  }
  func.func @transform_1(%arg0: i32) -> (i32, i32, i32) {
    %c0_i32 = arith.constant 0 : i32
    %c0_i32_0 = arith.constant 0 : i32
    %c0_i32_1 = arith.constant 0 : i32
    %c0_i32_2 = arith.constant 0 : i32
    return %c0_i32, %c0_i32_0, %c0_i32_1 : i32, i32, i32
  }
  func.func @transform_2(%arg0: i32) -> (i32, i32) {
    %c0_i32 = arith.constant 0 : i32
    %c0_i32_0 = arith.constant 0 : i32
    %c0_i32_1 = arith.constant 0 : i32
    return %c0_i32, %c0_i32_0 : i32, i32
  }
  func.func @transform_3(%arg0: i32) -> (i32, i32) {
    %c0_i32 = arith.constant 0 : i32
    %c0_i32_0 = arith.constant 0 : i32
    %c0_i32_1 = arith.constant 0 : i32
    return %c0_i32, %c0_i32_0 : i32, i32
  }
  func.func @transform_4(%arg0: i32) -> (i32, i32) {
    %c0_i32 = arith.constant 0 : i32
    %c0_i32_0 = arith.constant 0 : i32
    %c0_i32_1 = arith.constant 0 : i32
    return %c0_i32, %c0_i32_0 : i32, i32
  }
  func.func @transform_5(%arg0: i32) -> (i32, i32) {
    %c0_i32 = arith.constant 0 : i32
    %c0_i32_0 = arith.constant 0 : i32
    %c0_i32_1 = arith.constant 0 : i32
    return %c0_i32, %c0_i32_0 : i32, i32
  }
  func.func @transform_6(%arg0: i32) -> (i32, i32) {
    %c0_i32 = arith.constant 0 : i32
    %c0_i32_0 = arith.constant 0 : i32
    %c0_i32_1 = arith.constant 0 : i32
    return %c0_i32, %c0_i32_0 : i32, i32
  }
  func.func @transform_7(%arg0: i32) -> (i32, i32) {
    %c0_i32 = arith.constant 0 : i32
    %c0_i32_0 = arith.constant 0 : i32
    %c0_i32_1 = arith.constant 0 : i32
    return %c0_i32, %c0_i32_0 : i32, i32
  }
  func.func @transform_8(%arg0: i32) -> (i32, i32) {
    %c0_i32 = arith.constant 0 : i32
    %c0_i32_0 = arith.constant 0 : i32
    %c0_i32_1 = arith.constant 0 : i32
    return %c0_i32, %c0_i32_0 : i32, i32
  }
  func.func @transform_9(%arg0: i32) -> (i32, i32) {
    %c0_i32 = arith.constant 0 : i32
    %c0_i32_0 = arith.constant 0 : i32
    %c0_i32_1 = arith.constant 0 : i32
    return %c0_i32, %c0_i32_0 : i32, i32
  }
  func.func @transform_10(%arg0: i32) -> (i32, i32) {
    %c0_i32 = arith.constant 0 : i32
    %c0_i32_0 = arith.constant 0 : i32
    %c0_i32_1 = arith.constant 0 : i32
    return %c0_i32, %c0_i32_0 : i32, i32
  }
  func.func @transform_11(%arg0: i32) -> (i32, i32) {
    %c0_i32 = arith.constant 0 : i32
    %c0_i32_0 = arith.constant 0 : i32
    %c0_i32_1 = arith.constant 0 : i32
    return %c0_i32, %c0_i32_0 : i32, i32
  }
  func.func @transform_12(%arg0: i32) -> (i32, i32) {
    %c0_i32 = arith.constant 0 : i32
    %c0_i32_0 = arith.constant 0 : i32
    %c0_i32_1 = arith.constant 0 : i32
    return %c0_i32, %c0_i32_0 : i32, i32
  }
  func.func @transform_13(%arg0: i32) -> (i32, i32) {
    %c0_i32 = arith.constant 0 : i32
    %c0_i32_0 = arith.constant 0 : i32
    %c0_i32_1 = arith.constant 0 : i32
    return %c0_i32, %c0_i32_0 : i32, i32
  }
  func.func @transform_14(%arg0: i32) -> (i32, i32, i32) {
    %c0_i32 = arith.constant 0 : i32
    %c0_i32_0 = arith.constant 0 : i32
    %c0_i32_1 = arith.constant 0 : i32
    %c0_i32_2 = arith.constant 0 : i32
    return %c0_i32, %c0_i32_0, %c0_i32_1 : i32, i32, i32
  }
  func.func @transform_15(%arg0: i32) -> (i32, i32, i32, i32) {
    %c0_i32 = arith.constant 0 : i32
    %c0_i32_0 = arith.constant 0 : i32
    %c0_i32_1 = arith.constant 0 : i32
    %c0_i32_2 = arith.constant 0 : i32
    %c0_i32_3 = arith.constant 0 : i32
    return %c0_i32, %c0_i32_0, %c0_i32_1, %c0_i32_2 : i32, i32, i32, i32
  }
}

</mosaic_0001>

<llo_original>
// kernel: tpu_custom_call.1
$region0: #{tpu_custom_call.1}
  #allocation0 [shape = 'u32[]', space=smem, size = 0x4, offset = 0x4, fixed_abs, tag = 'smem constant byte address 0x4 - core index']
  #allocation1 [shape = 'u32[144,128]{1,0:T(1,128)}', space=vmem, size = 0x12000, scoped, tag = 'internal scratch']
  %s0 = inlined_call_operand.hbm [shape: f32[2,16,256], index: 0, kind: input, shape index: {}]
  %s1 = inlined_call_operand.hbm [shape: s32[2,16,16], index: 1, kind: input, shape index: {}]
  %s2 = inlined_call_operand.hbm [shape: bf16[256,768], index: 2, kind: input, shape index: {}]
  %s3 = inlined_call_operand.vmem [shape: f32[1,768], index: 3, kind: input, shape index: {}]
  %s4 = inlined_call_operand.hbm [shape: bf16[256,256], index: 4, kind: input, shape index: {}]
  %s5 = inlined_call_operand.vmem [shape: f32[1,256], index: 5, kind: input, shape index: {}]
  %s6 = inlined_call_operand.vmem [shape: f32[1,256], index: 6, kind: input, shape index: {}]
  %s7 = inlined_call_operand.vmem [shape: f32[1,256], index: 7, kind: input, shape index: {}]
  %s8 = inlined_call_operand.hbm [shape: bf16[256,1024], index: 8, kind: input, shape index: {}]
  %s9 = inlined_call_operand.vmem [shape: f32[1,1024], index: 9, kind: input, shape index: {}]
  %s10 = inlined_call_operand.hbm [shape: bf16[1024,256], index: 10, kind: input, shape index: {}]
  %s11 = inlined_call_operand.vmem [shape: f32[1,256], index: 11, kind: input, shape index: {}]
  %s12 = inlined_call_operand.vmem [shape: f32[1,256], index: 12, kind: input, shape index: {}]
  %s13 = inlined_call_operand.vmem [shape: f32[1,256], index: 13, kind: input, shape index: {}]
  %s14 = inlined_call_operand.hbm [shape: f32[2,16,256], index: 14, kind: output, shape index: {0}]
  %s15 = inlined_call_operand.hbm [shape: f32[4,2,16,16], index: 15, kind: output, shape index: {1}]
  %16 = xla_tuple %s14, %s15
  %s17 = sld [smem:[#allocation0]]
  $region98: #{tpu_custom_call.1} parent=0
    _
  %s19 = ssub.s32 1, %s17
  %s20 = scalar_select 0, %s19, %s17
  $region1: #{tpu_custom_call.1} parent=0
    #allocation2 [shape = 'u8[32768]{0}', space=vmem, size = 0x8000, scoped, tag = 'input window, operand 0, single buffered']
    #allocation3 [shape = 's32[1]{0}', space=sflag, size = 0x4, scoped, tag = 'scoped memory for tpu_custom_call.1']
    #allocation4 [shape = 's32[1]{0}', space=sflag, size = 0x4, scoped, tag = 'scoped memory for tpu_custom_call.1']
    #allocation5 [shape = 'u8[16384]{0}', space=vmem, size = 0x4000, scoped, tag = 'input window, operand 1, single buffered']
    #allocation6 [shape = 's32[1]{0}', space=sflag, size = 0x4, scoped, tag = 'scoped memory for tpu_custom_call.1']
    #allocation7 [shape = 'u8[393216]{0}', space=vmem, size = 0x60000, scoped, tag = 'input window, operand 2, single buffered']
    #allocation8 [shape = 'u8[131072]{0}', space=vmem, size = 0x20000, scoped, tag = 'input window, operand 4, single buffered']
    #allocation9 [shape = 's32[1]{0}', space=sflag, size = 0x4, scoped, tag = 'scoped memory for tpu_custom_call.1']
    #allocation10 [shape = 'u8[524288]{0}', space=vmem, size = 0x80000, scoped, tag = 'input window, operand 8, single buffered']
    #allocation11 [shape = 'u8[524288]{0}', space=vmem, size = 0x80000, scoped, tag = 'input window, operand 10, single buffered']
    #allocation12 [shape = 's32[1]{0}', space=sflag, size = 0x4, scoped, tag = 'scoped memory for tpu_custom_call.1']
    #allocation13 [shape = 'u8[32768]{0}', space=vmem, size = 0x8000, scoped, tag = 'output window, operand 0, single buffered']
    #allocation14 [shape = 'u8[65536]{0}', space=vmem, size = 0x10000, scoped, tag = 'output window, operand 1, single buffered']
    #allocation15 [shape = 's32[1]{0}', space=sflag, size = 0x4, scoped, tag = 'scoped memory for tpu_custom_call.1']
    %21 = vsyncpa [#allocation3], 0
    %22 = vsyncpa [#allocation6], 0
    %23 = vsyncpa [#allocation9], 0
    %24 = vsyncpa [#allocation12], 0
    %25 = vsyncpa [#allocation4], 0
    %26 = vsyncpa [#allocation15], 0
    // Predicated region
    $region2: #{tpu_custom_call.1} parent=1 // pred_check
      _
    $region3: #{tpu_custom_call.1} parent=1 // pred_check_branch
      %28 = sbr.rel (0) target = $region5
    $region4: #{tpu_custom_call.1} parent=1 // pred_region
      %s30 = ssub.s32 1024, 1024
      %31 = vsyncadd [#allocation3], %s30
      %s32 = sshll.u32 [#allocation2], 4
      %s33 = int_to_ptr.vmem [resolvable:$true] %s32
      %38 = dma.hbm_to_vmem [thread:$0]  %s0, 1024, %s33, [#allocation3], 256, 256, 16
    $region5: #{tpu_custom_call.1} parent=1 // pred_fallthru
      _
    // Predicated region
    $region6: #{tpu_custom_call.1} parent=1 // pred_check
      _
    $region7: #{tpu_custom_call.1} parent=1 // pred_check_branch
      %40 = sbr.rel (0) target = $region9
    $region8: #{tpu_custom_call.1} parent=1 // pred_region
      %s42 = ssub.s32 512, 512
      %43 = vsyncadd [#allocation6], %s42
      %s44 = sshll.u32 [#allocation5], 4
      %s45 = int_to_ptr.vmem [resolvable:$true] %s44
      %50 = dma.hbm_to_vmem [thread:$0]  %s1, 512, %s45, [#allocation6], 128, 128, 8
    $region9: #{tpu_custom_call.1} parent=1 // pred_fallthru
      _
    // Predicated region
    $region10: #{tpu_custom_call.1} parent=1 // pred_check
      _
    $region11: #{tpu_custom_call.1} parent=1 // pred_check_branch
      %52 = sbr.rel (0) target = $region13
    $region12: #{tpu_custom_call.1} parent=1 // pred_region
      %s54 = ssub.s32 12288, 12288
      %55 = vsyncadd [#allocation6], %s54
      %s56 = sshll.u32 [#allocation7], 4
      %s57 = int_to_ptr.vmem [resolvable:$true] %s56
      %62 = dma.hbm_to_vmem [thread:$0]  %s2, 12288, %s57, [#allocation6], 384, 384, 24
    $region13: #{tpu_custom_call.1} parent=1 // pred_fallthru
      _
    // Predicated region
    $region14: #{tpu_custom_call.1} parent=1 // pred_check
      _
    $region15: #{tpu_custom_call.1} parent=1 // pred_check_branch
      %64 = sbr.rel (0) target = $region17
    $region16: #{tpu_custom_call.1} parent=1 // pred_region
      _
    $region17: #{tpu_custom_call.1} parent=1 // pred_fallthru
      _
    // Predicated region
    $region18: #{tpu_custom_call.1} parent=1 // pred_check
      _
    $region19: #{tpu_custom_call.1} parent=1 // pred_check_branch
      %66 = sbr.rel (0) target = $region21
    $region20: #{tpu_custom_call.1} parent=1 // pred_region
      %s68 = ssub.s32 4096, 4096
      %69 = vsyncadd [#allocation9], %s68
      %s70 = sshll.u32 [#allocation8], 4
      %s71 = int_to_ptr.vmem [resolvable:$true] %s70
      %76 = dma.hbm_to_vmem [thread:$0]  %s4, 4096, %s71, [#allocation9], 128, 128, 8
    $region21: #{tpu_custom_call.1} parent=1 // pred_fallthru
      _
    // Predicated region
    $region22: #{tpu_custom_call.1} parent=1 // pred_check
      _
    $region23: #{tpu_custom_call.1} parent=1 // pred_check_branch
      %78 = sbr.rel (0) target = $region25
    $region24: #{tpu_custom_call.1} parent=1 // pred_region
      _
    $region25: #{tpu_custom_call.1} parent=1 // pred_fallthru
      _
    // Predicated region
    $region26: #{tpu_custom_call.1} parent=1 // pred_check
      _
    $region27: #{tpu_custom_call.1} parent=1 // pred_check_branch
      %80 = sbr.rel (0) target = $region29
    $region28: #{tpu_custom_call.1} parent=1 // pred_region
      _
    $region29: #{tpu_custom_call.1} parent=1 // pred_fallthru
      _
    // Predicated region
    $region30: #{tpu_custom_call.1} parent=1 // pred_check
      _
    $region31: #{tpu_custom_call.1} parent=1 // pred_check_branch
      %82 = sbr.rel (0) target = $region33
    $region32: #{tpu_custom_call.1} parent=1 // pred_region
      _
    $region33: #{tpu_custom_call.1} parent=1 // pred_fallthru
      _
    // Predicated region
    $region34: #{tpu_custom_call.1} parent=1 // pred_check
      _
    $region35: #{tpu_custom_call.1} parent=1 // pred_check_branch
      %84 = sbr.rel (0) target = $region37
    $region36: #{tpu_custom_call.1} parent=1 // pred_region
      %s86 = ssub.s32 16384, 16384
      %87 = vsyncadd [#allocation9], %s86
      %s88 = sshll.u32 [#allocation10], 4
      %s89 = int_to_ptr.vmem [resolvable:$true] %s88
      %94 = dma.hbm_to_vmem [thread:$0]  %s8, 16384, %s89, [#allocation9], 512, 512, 32
    $region37: #{tpu_custom_call.1} parent=1 // pred_fallthru
      _
    // Predicated region
    $region38: #{tpu_custom_call.1} parent=1 // pred_check
      _
    $region39: #{tpu_custom_call.1} parent=1 // pred_check_branch
      %96 = sbr.rel (0) target = $region41
    $region40: #{tpu_custom_call.1} parent=1 // pred_region
      _
    $region41: #{tpu_custom_call.1} parent=1 // pred_fallthru
      _
    // Predicated region
    $region42: #{tpu_custom_call.1} parent=1 // pred_check
      _
    $region43: #{tpu_custom_call.1} parent=1 // pred_check_branch
      %98 = sbr.rel (0) target = $region45
    $region44: #{tpu_custom_call.1} parent=1 // pred_region
      %s100 = ssub.s32 16384, 16384
      %101 = vsyncadd [#allocation12], %s100
      %s102 = sshll.u32 [#allocation11], 4
      %s103 = int_to_ptr.vmem [resolvable:$true] %s102
      %108 = dma.hbm_to_vmem [thread:$0]  %s10, 16384, %s103, [#allocation12], 128, 128, 8
    $region45: #{tpu_custom_call.1} parent=1 // pred_fallthru
      _
    // Predicated region
    $region46: #{tpu_custom_call.1} parent=1 // pred_check
      _
    $region47: #{tpu_custom_call.1} parent=1 // pred_check_branch
      %110 = sbr.rel (0) target = $region49
    $region48: #{tpu_custom_call.1} parent=1 // pred_region
      _
    $region49: #{tpu_custom_call.1} parent=1 // pred_fallthru
      _
    // Predicated region
    $region50: #{tpu_custom_call.1} parent=1 // pred_check
      _
    $region51: #{tpu_custom_call.1} parent=1 // pred_check_branch
      %112 = sbr.rel (0) target = $region53
    $region52: #{tpu_custom_call.1} parent=1 // pred_region
      _
    $region53: #{tpu_custom_call.1} parent=1 // pred_fallthru
      _
    // Predicated region
    $region54: #{tpu_custom_call.1} parent=1 // pred_check
      _
    $region55: #{tpu_custom_call.1} parent=1 // pred_check_branch
      %114 = sbr.rel (0) target = $region57
    $region56: #{tpu_custom_call.1} parent=1 // pred_region
      _
    $region57: #{tpu_custom_call.1} parent=1 // pred_fallthru
      _
    // Predicated region
    $region58: #{tpu_custom_call.1} parent=1 // pred_check
      _
    $region59: #{tpu_custom_call.1} parent=1 // pred_check_branch
      %116 = sbr.rel (0) target = $region61
    $region60: #{tpu_custom_call.1} parent=1 // pred_region
      %117 = dma.done [#allocation3], 1024
    $region61: #{tpu_custom_call.1} parent=1 // pred_fallthru
      _
    // Predicated region
    $region62: #{tpu_custom_call.1} parent=1 // pred_check
      _
    $region63: #{tpu_custom_call.1} parent=1 // pred_check_branch
      %119 = sbr.rel (0) target = $region65
    $region64: #{tpu_custom_call.1} parent=1 // pred_region
      %120 = dma.done [#allocation6], 512
    $region65: #{tpu_custom_call.1} parent=1 // pred_fallthru
      _
    // Predicated region
    $region66: #{tpu_custom_call.1} parent=1 // pred_check
      _
    $region67: #{tpu_custom_call.1} parent=1 // pred_check_branch
      %122 = sbr.rel (0) target = $region69
    $region68: #{tpu_custom_call.1} parent=1 // pred_region
      %123 = dma.done [#allocation6], 12288
    $region69: #{tpu_custom_call.1} parent=1 // pred_fallthru
      _
    // Predicated region
    $region70: #{tpu_custom_call.1} parent=1 // pred_check
      _
    $region71: #{tpu_custom_call.1} parent=1 // pred_check_branch
      %125 = sbr.rel (0) target = $region73
    $region72: #{tpu_custom_call.1} parent=1 // pred_region
      %126 = dma.done [#allocation9], 4096
    $region73: #{tpu_custom_call.1} parent=1 // pred_fallthru
      _
    // Predicated region
    $region74: #{tpu_custom_call.1} parent=1 // pred_check
      _
    $region75: #{tpu_custom_call.1} parent=1 // pred_check_branch
      %128 = sbr.rel (0) target = $region77
    $region76: #{tpu_custom_call.1} parent=1 // pred_region
      %129 = dma.done [#allocation9], 16384
    $region77: #{tpu_custom_call.1} parent=1 // pred_fallthru
      _
    // Predicated region
    $region78: #{tpu_custom_call.1} parent=1 // pred_check
      _
    $region79: #{tpu_custom_call.1} parent=1 // pred_check_branch
      %131 = sbr.rel (0) target = $region81
    $region80: #{tpu_custom_call.1} parent=1 // pred_region
      %132 = dma.done [#allocation12], 16384
    $region81: #{tpu_custom_call.1} parent=1 // pred_fallthru
      _
    %v134 = vld [vmem:[#allocation2] sm:$0xff]
    %v135 = vld [vmem:[#allocation2 + $0x8] sm:$0xff]
    %v136 = vld [vmem:[#allocation2 + $0x10] sm:$0xff]
    %v137 = vld [vmem:[#allocation2 + $0x18] sm:$0xff]
    %v138 = vld [vmem:[#allocation2 + $0x20] sm:$0xff]
    %v139 = vld [vmem:[#allocation2 + $0x28] sm:$0xff]
    %v140 = vld [vmem:[#allocation2 + $0x30] sm:$0xff]
    %v141 = vld [vmem:[#allocation2 + $0x38] sm:$0xff]
    %v142 = vld [vmem:[#allocation5] sm:$0xff]
    %v143 = vld [vmem:[#allocation5 + $0x8] sm:$0xff]
    %v144 = vld [vmem:[#allocation5 + $0x10] sm:$0xff]
    %v145 = vld [vmem:[#allocation5 + $0x18] sm:$0xff]
    %v146 = vpack.c.bf16 %v136, %v134
    %v147 = vpack.c.bf16 %v137, %v135
    %v148 = vpack.c.bf16 %v140, %v138
    %v149 = vpack.c.bf16 %v141, %v139
    %v150 = vld [vmem:[#allocation7] sm:$0xff]
    %v151 = vld [vmem:[#allocation7 + $0x8] sm:$0xff]
    %v152 = vld [vmem:[#allocation7 + $0x10] sm:$0xff]
    %v153 = vld [vmem:[#allocation7 + $0x18] sm:$0xff]
    %v154 = vld [vmem:[#allocation7 + $0x20] sm:$0xff]
    %v155 = vld [vmem:[#allocation7 + $0x28] sm:$0xff]
    %v156 = vld [vmem:[#allocation7 + $0x30] sm:$0xff]
    %v157 = vld [vmem:[#allocation7 + $0x38] sm:$0xff]
    %v158 = vld [vmem:[#allocation7 + $0x40] sm:$0xff]
    %v159 = vld [vmem:[#allocation7 + $0x48] sm:$0xff]
    %v160 = vld [vmem:[#allocation7 + $0x50] sm:$0xff]
    %v161 = vld [vmem:[#allocation7 + $0x58] sm:$0xff]
    %v162 = vld [vmem:[#allocation7 + $0x60] sm:$0xff]
    %v163 = vld [vmem:[#allocation7 + $0x68] sm:$0xff]
    %v164 = vld [vmem:[#allocation7 + $0x70] sm:$0xff]
    %v165 = vld [vmem:[#allocation7 + $0x78] sm:$0xff]
    %v166 = vld [vmem:[#allocation7 + $0x80] sm:$0xff]
    %v167 = vld [vmem:[#allocation7 + $0x88] sm:$0xff]
    %v168 = vld [vmem:[#allocation7 + $0x90] sm:$0xff]
    %v169 = vld [vmem:[#allocation7 + $0x98] sm:$0xff]
    %v170 = vld [vmem:[#allocation7 + $0xa0] sm:$0xff]
    %v171 = vld [vmem:[#allocation7 + $0xa8] sm:$0xff]
    %v172 = vld [vmem:[#allocation7 + $0xb0] sm:$0xff]
    %v173 = vld [vmem:[#allocation7 + $0xb8] sm:$0xff]
    %v174 = vld [vmem:[#allocation7 + $0xc0] sm:$0xff]
    %v175 = vld [vmem:[#allocation7 + $0xc8] sm:$0xff]
    %v176 = vld [vmem:[#allocation7 + $0xd0] sm:$0xff]
    %v177 = vld [vmem:[#allocation7 + $0xd8] sm:$0xff]
    %v178 = vld [vmem:[#allocation7 + $0xe0] sm:$0xff]
    %v179 = vld [vmem:[#allocation7 + $0xe8] sm:$0xff]
    %v180 = vld [vmem:[#allocation7 + $0xf0] sm:$0xff]
    %v181 = vld [vmem:[#allocation7 + $0xf8] sm:$0xff]
    %v182 = vld [vmem:[#allocation7 + $0x100] sm:$0xff]
    %v183 = vld [vmem:[#allocation7 + $0x108] sm:$0xff]
    %v184 = vld [vmem:[#allocation7 + $0x110] sm:$0xff]
    %v185 = vld [vmem:[#allocation7 + $0x118] sm:$0xff]
    %v186 = vld [vmem:[#allocation7 + $0x120] sm:$0xff]
    %v187 = vld [vmem:[#allocation7 + $0x128] sm:$0xff]
    %v188 = vld [vmem:[#allocation7 + $0x130] sm:$0xff]
    %v189 = vld [vmem:[#allocation7 + $0x138] sm:$0xff]
    %v190 = vld [vmem:[#allocation7 + $0x140] sm:$0xff]
    %v191 = vld [vmem:[#allocation7 + $0x148] sm:$0xff]
    %v192 = vld [vmem:[#allocation7 + $0x150] sm:$0xff]
    %v193 = vld [vmem:[#allocation7 + $0x158] sm:$0xff]
    %v194 = vld [vmem:[#allocation7 + $0x160] sm:$0xff]
    %v195 = vld [vmem:[#allocation7 + $0x168] sm:$0xff]
    %v196 = vld [vmem:[#allocation7 + $0x170] sm:$0xff]
    %v197 = vld [vmem:[#allocation7 + $0x178] sm:$0xff]
    %v198 = vld [vmem:[#allocation7 + $0x180] sm:$0xff]
    %v199 = vld [vmem:[#allocation7 + $0x188] sm:$0xff]
    %v200 = vld [vmem:[#allocation7 + $0x190] sm:$0xff]
    %v201 = vld [vmem:[#allocation7 + $0x198] sm:$0xff]
    %v202 = vld [vmem:[#allocation7 + $0x1a0] sm:$0xff]
    %v203 = vld [vmem:[#allocation7 + $0x1a8] sm:$0xff]
    %v204 = vld [vmem:[#allocation7 + $0x1b0] sm:$0xff]
    %v205 = vld [vmem:[#allocation7 + $0x1b8] sm:$0xff]
    %v206 = vld [vmem:[#allocation7 + $0x1c0] sm:$0xff]
    %v207 = vld [vmem:[#allocation7 + $0x1c8] sm:$0xff]
    %v208 = vld [vmem:[#allocation7 + $0x1d0] sm:$0xff]
    %v209 = vld [vmem:[#allocation7 + $0x1d8] sm:$0xff]
    %v210 = vld [vmem:[#allocation7 + $0x1e0] sm:$0xff]
    %v211 = vld [vmem:[#allocation7 + $0x1e8] sm:$0xff]
    %v212 = vld [vmem:[#allocation7 + $0x1f0] sm:$0xff]
    %v213 = vld [vmem:[#allocation7 + $0x1f8] sm:$0xff]
    %v214 = vld [vmem:[#allocation7 + $0x200] sm:$0xff]
    %v215 = vld [vmem:[#allocation7 + $0x208] sm:$0xff]
    %v216 = vld [vmem:[#allocation7 + $0x210] sm:$0xff]
    %v217 = vld [vmem:[#allocation7 + $0x218] sm:$0xff]
    %v218 = vld [vmem:[#allocation7 + $0x220] sm:$0xff]
    %v219 = vld [vmem:[#allocation7 + $0x228] sm:$0xff]
    %v220 = vld [vmem:[#allocation7 + $0x230] sm:$0xff]
    %v221 = vld [vmem:[#allocation7 + $0x238] sm:$0xff]
    %v222 = vld [vmem:[#allocation7 + $0x240] sm:$0xff]
    %v223 = vld [vmem:[#allocation7 + $0x248] sm:$0xff]
    %v224 = vld [vmem:[#allocation7 + $0x250] sm:$0xff]
    %v225 = vld [vmem:[#allocation7 + $0x258] sm:$0xff]
    %v226 = vld [vmem:[#allocation7 + $0x260] sm:$0xff]
    %v227 = vld [vmem:[#allocation7 + $0x268] sm:$0xff]
    %v228 = vld [vmem:[#allocation7 + $0x270] sm:$0xff]
    %v229 = vld [vmem:[#allocation7 + $0x278] sm:$0xff]
    %v230 = vld [vmem:[#allocation7 + $0x280] sm:$0xff]
    %v231 = vld [vmem:[#allocation7 + $0x288] sm:$0xff]
    %v232 = vld [vmem:[#allocation7 + $0x290] sm:$0xff]
    %v233 = vld [vmem:[#allocation7 + $0x298] sm:$0xff]
    %v234 = vld [vmem:[#allocation7 + $0x2a0] sm:$0xff]
    %v235 = vld [vmem:[#allocation7 + $0x2a8] sm:$0xff]
    %v236 = vld [vmem:[#allocation7 + $0x2b0] sm:$0xff]
    %v237 = vld [vmem:[#allocation7 + $0x2b8] sm:$0xff]
    %v238 = vld [vmem:[#allocation7 + $0x2c0] sm:$0xff]
    %v239 = vld [vmem:[#allocation7 + $0x2c8] sm:$0xff]
    %v240 = vld [vmem:[#allocation7 + $0x2d0] sm:$0xff]
    %v241 = vld [vmem:[#allocation7 + $0x2d8] sm:$0xff]
    %v242 = vld [vmem:[#allocation7 + $0x2e0] sm:$0xff]
    %v243 = vld [vmem:[#allocation7 + $0x2e8] sm:$0xff]
    %v244 = vld [vmem:[#allocation7 + $0x2f0] sm:$0xff]
    %v245 = vld [vmem:[#allocation7 + $0x2f8] sm:$0xff]
    %v246 = vld [vmem:[%s3] sm:$0x3f]
    %v248 = vlaneseq
    %v249 = vshrl.u32 %v248, 7
    %v250 = vsub.s32 0, %v249
    %v251 = vrot.slane %v246, %v250
    %v252 = vlaneseq
    %v253 = vshrl.u32 %v252, 7
    %v254 = vsub.s32 1, %v253
    %v255 = vrot.slane %v246, %v254
    %v256 = vlaneseq
    %v257 = vshrl.u32 %v256, 7
    %v258 = vsub.s32 2, %v257
    %v259 = vrot.slane %v246, %v258
    %v260 = vlaneseq
    %v261 = vshrl.u32 %v260, 7
    %v262 = vsub.s32 3, %v261
    %v263 = vrot.slane %v246, %v262
    %v264 = vlaneseq
    %v265 = vshrl.u32 %v264, 7
    %v266 = vsub.s32 4, %v265
    %v267 = vrot.slane %v246, %v266
    %v268 = vlaneseq
    %v269 = vshrl.u32 %v268, 7
    %v270 = vsub.s32 5, %v269
    %v271 = vrot.slane %v246, %v270
    %v374 = vunpack.c.l.b16 %v150
    %v375 = vunpack.c.h.b16 %v150
    %v376 = vunpack.c.l.b16 %v151
    %v377 = vunpack.c.h.b16 %v151
    %v378 = vunpack.c.l.b16 %v152
    %v379 = vunpack.c.h.b16 %v152
    %v380 = vunpack.c.l.b16 %v153
    %v381 = vunpack.c.h.b16 %v153
    %v382 = vunpack.c.l.b16 %v154
    %v383 = vunpack.c.h.b16 %v154
    %v384 = vunpack.c.l.b16 %v155
    %v385 = vunpack.c.h.b16 %v155
    %v386 = vunpack.c.l.b16 %v156
    %v387 = vunpack.c.h.b16 %v156
    %v388 = vunpack.c.l.b16 %v157
    %v389 = vunpack.c.h.b16 %v157
    %v390 = vunpack.c.l.b16 %v158
    %v391 = vunpack.c.h.b16 %v158
    %v392 = vunpack.c.l.b16 %v159
    %v393 = vunpack.c.h.b16 %v159
    %v394 = vunpack.c.l.b16 %v160
    %v395 = vunpack.c.h.b16 %v160
    %v396 = vunpack.c.l.b16 %v161
    %v397 = vunpack.c.h.b16 %v161
    %v398 = vunpack.c.l.b16 %v162
    %v399 = vunpack.c.h.b16 %v162
    %v400 = vunpack.c.l.b16 %v163
    %v401 = vunpack.c.h.b16 %v163
    %v402 = vunpack.c.l.b16 %v164
    %v403 = vunpack.c.h.b16 %v164
    %v404 = vunpack.c.l.b16 %v165
    %v405 = vunpack.c.h.b16 %v165
    %v406 = vunpack.c.l.b16 %v166
    %v407 = vunpack.c.h.b16 %v166
    %v408 = vunpack.c.l.b16 %v167
    %v409 = vunpack.c.h.b16 %v167
    %v410 = vunpack.c.l.b16 %v168
    %v411 = vunpack.c.h.b16 %v168
    %v412 = vunpack.c.l.b16 %v169
    %v413 = vunpack.c.h.b16 %v169
    %v414 = vunpack.c.l.b16 %v170
    %v415 = vunpack.c.h.b16 %v170
    %v416 = vunpack.c.l.b16 %v171
    %v417 = vunpack.c.h.b16 %v171
    %v418 = vunpack.c.l.b16 %v172
    %v419 = vunpack.c.h.b16 %v172
    %v420 = vunpack.c.l.b16 %v173
    %v421 = vunpack.c.h.b16 %v173
    %v422 = vunpack.c.l.b16 %v174
    %v423 = vunpack.c.h.b16 %v174
    %v424 = vunpack.c.l.b16 %v175
    %v425 = vunpack.c.h.b16 %v175
    %v426 = vunpack.c.l.b16 %v176
    %v427 = vunpack.c.h.b16 %v176
    %v428 = vunpack.c.l.b16 %v177
    %v429 = vunpack.c.h.b16 %v177
    %v430 = vunpack.c.l.b16 %v178
    %v431 = vunpack.c.h.b16 %v178
    %v432 = vunpack.c.l.b16 %v179
    %v433 = vunpack.c.h.b16 %v179
    %v434 = vunpack.c.l.b16 %v180
    %v435 = vunpack.c.h.b16 %v180
    %v436 = vunpack.c.l.b16 %v181
    %v437 = vunpack.c.h.b16 %v181
    %v438 = vunpack.c.l.b16 %v182
    %v439 = vunpack.c.h.b16 %v182
    %v440 = vunpack.c.l.b16 %v183
    %v441 = vunpack.c.h.b16 %v183
    %v442 = vunpack.c.l.b16 %v184
    %v443 = vunpack.c.h.b16 %v184
    %v444 = vunpack.c.l.b16 %v185
    %v445 = vunpack.c.h.b16 %v185
    %v446 = vunpack.c.l.b16 %v186
    %v447 = vunpack.c.h.b16 %v186
    %v448 = vunpack.c.l.b16 %v187
    %v449 = vunpack.c.h.b16 %v187
    %v450 = vunpack.c.l.b16 %v188
    %v451 = vunpack.c.h.b16 %v188
    %v452 = vunpack.c.l.b16 %v189
    %v453 = vunpack.c.h.b16 %v189
    %v454 = vunpack.c.l.b16 %v190
    %v455 = vunpack.c.h.b16 %v190
    %v456 = vunpack.c.l.b16 %v191
    %v457 = vunpack.c.h.b16 %v191
    %v458 = vunpack.c.l.b16 %v192
    %v459 = vunpack.c.h.b16 %v192
    %v460 = vunpack.c.l.b16 %v193
    %v461 = vunpack.c.h.b16 %v193
    %v462 = vunpack.c.l.b16 %v194
    %v463 = vunpack.c.h.b16 %v194
    %v464 = vunpack.c.l.b16 %v195
    %v465 = vunpack.c.h.b16 %v195
    %v466 = vunpack.c.l.b16 %v196
    %v467 = vunpack.c.h.b16 %v196
    %v468 = vunpack.c.l.b16 %v197
    %v469 = vunpack.c.h.b16 %v197
    %v470 = vunpack.c.l.b16 %v198
    %v471 = vunpack.c.h.b16 %v198
    %v472 = vunpack.c.l.b16 %v199
    %v473 = vunpack.c.h.b16 %v199
    %v474 = vunpack.c.l.b16 %v200
    %v475 = vunpack.c.h.b16 %v200
    %v476 = vunpack.c.l.b16 %v201
    %v477 = vunpack.c.h.b16 %v201
    %v478 = vunpack.c.l.b16 %v202
    %v479 = vunpack.c.h.b16 %v202
    %v480 = vunpack.c.l.b16 %v203
    %v481 = vunpack.c.h.b16 %v203
    %v482 = vunpack.c.l.b16 %v204
    %v483 = vunpack.c.h.b16 %v204
    %v484 = vunpack.c.l.b16 %v205
    %v485 = vunpack.c.h.b16 %v205
    %v486 = vunpack.c.l.b16 %v206
    %v487 = vunpack.c.h.b16 %v206
    %v488 = vunpack.c.l.b16 %v207
    %v489 = vunpack.c.h.b16 %v207
    %v490 = vunpack.c.l.b16 %v208
    %v491 = vunpack.c.h.b16 %v208
    %v492 = vunpack.c.l.b16 %v209
    %v493 = vunpack.c.h.b16 %v209
    %v494 = vunpack.c.l.b16 %v210
    %v495 = vunpack.c.h.b16 %v210
    %v496 = vunpack.c.l.b16 %v211
    %v497 = vunpack.c.h.b16 %v211
    %v498 = vunpack.c.l.b16 %v212
    %v499 = vunpack.c.h.b16 %v212
    %v500 = vunpack.c.l.b16 %v213
    %v501 = vunpack.c.h.b16 %v213
    %v502 = vunpack.c.l.b16 %v214
    %v503 = vunpack.c.h.b16 %v214
    %v504 = vunpack.c.l.b16 %v215
    %v505 = vunpack.c.h.b16 %v215
    %v506 = vunpack.c.l.b16 %v216
    %v507 = vunpack.c.h.b16 %v216
    %v508 = vunpack.c.l.b16 %v217
    %v509 = vunpack.c.h.b16 %v217
    %v510 = vunpack.c.l.b16 %v218
    %v511 = vunpack.c.h.b16 %v218
    %v512 = vunpack.c.l.b16 %v219
    %v513 = vunpack.c.h.b16 %v219
    %v514 = vunpack.c.l.b16 %v220
    %v515 = vunpack.c.h.b16 %v220
    %v516 = vunpack.c.l.b16 %v221
    %v517 = vunpack.c.h.b16 %v221
    %v518 = vunpack.c.l.b16 %v222
    %v519 = vunpack.c.h.b16 %v222
    %v520 = vunpack.c.l.b16 %v223
    %v521 = vunpack.c.h.b16 %v223
    %v522 = vunpack.c.l.b16 %v224
    %v523 = vunpack.c.h.b16 %v224
    %v524 = vunpack.c.l.b16 %v225
    %v525 = vunpack.c.h.b16 %v225
    %v526 = vunpack.c.l.b16 %v226
    %v527 = vunpack.c.h.b16 %v226
    %v528 = vunpack.c.l.b16 %v227
    %v529 = vunpack.c.h.b16 %v227
    %v530 = vunpack.c.l.b16 %v228
    %v531 = vunpack.c.h.b16 %v228
    %v532 = vunpack.c.l.b16 %v229
    %v533 = vunpack.c.h.b16 %v229
    %v534 = vunpack.c.l.b16 %v230
    %v535 = vunpack.c.h.b16 %v230
    %v536 = vunpack.c.l.b16 %v231
    %v537 = vunpack.c.h.b16 %v231
    %v538 = vunpack.c.l.b16 %v232
    %v539 = vunpack.c.h.b16 %v232
    %v540 = vunpack.c.l.b16 %v233
    %v541 = vunpack.c.h.b16 %v233
    %v542 = vunpack.c.l.b16 %v234
    %v543 = vunpack.c.h.b16 %v234
    %v544 = vunpack.c.l.b16 %v235
    %v545 = vunpack.c.h.b16 %v235
    %v546 = vunpack.c.l.b16 %v236
    %v547 = vunpack.c.h.b16 %v236
    %v548 = vunpack.c.l.b16 %v237
    %v549 = vunpack.c.h.b16 %v237
    %v550 = vunpack.c.l.b16 %v238
    %v551 = vunpack.c.h.b16 %v238
    %v552 = vunpack.c.l.b16 %v239
    %v553 = vunpack.c.h.b16 %v239
    %v554 = vunpack.c.l.b16 %v240
    %v555 = vunpack.c.h.b16 %v240
    %v556 = vunpack.c.l.b16 %v241
    %v557 = vunpack.c.h.b16 %v241
    %v558 = vunpack.c.l.b16 %v242
    %v559 = vunpack.c.h.b16 %v242
    %v560 = vunpack.c.l.b16 %v243
    %v561 = vunpack.c.h.b16 %v243
    %v562 = vunpack.c.l.b16 %v244
    %v563 = vunpack.c.h.b16 %v244
    %v564 = vunpack.c.l.b16 %v245
    %v565 = vunpack.c.h.b16 %v245
    %v566 = vpack.c.b16 %v380, %v374
    %v567 = vpack.c.b16 %v381, %v375
    %v568 = vpack.c.b16 %v382, %v376
    %v569 = vpack.c.b16 %v383, %v377
    %v570 = vpack.c.b16 %v384, %v378
    %v571 = vpack.c.b16 %v385, %v379
    %v572 = vpack.c.b16 %v392, %v386
    %v573 = vpack.c.b16 %v393, %v387
    %v574 = vpack.c.b16 %v394, %v388
    %v575 = vpack.c.b16 %v395, %v389
    %v576 = vpack.c.b16 %v396, %v390
    %v577 = vpack.c.b16 %v397, %v391
    %v578 = vpack.c.b16 %v404, %v398
    %v579 = vpack.c.b16 %v405, %v399
    %v580 = vpack.c.b16 %v406, %v400
    %v581 = vpack.c.b16 %v407, %v401
    %v582 = vpack.c.b16 %v408, %v402
    %v583 = vpack.c.b16 %v409, %v403
    %v584 = vpack.c.b16 %v416, %v410
    %v585 = vpack.c.b16 %v417, %v411
    %v586 = vpack.c.b16 %v418, %v412
    %v587 = vpack.c.b16 %v419, %v413
    %v588 = vpack.c.b16 %v420, %v414
    %v589 = vpack.c.b16 %v421, %v415
    %v590 = vpack.c.b16 %v428, %v422
    %v591 = vpack.c.b16 %v429, %v423
    %v592 = vpack.c.b16 %v430, %v424
    %v593 = vpack.c.b16 %v431, %v425
    %v594 = vpack.c.b16 %v432, %v426
    %v595 = vpack.c.b16 %v433, %v427
    %v596 = vpack.c.b16 %v440, %v434
    %v597 = vpack.c.b16 %v441, %v435
    %v598 = vpack.c.b16 %v442, %v436
    %v599 = vpack.c.b16 %v443, %v437
    %v600 = vpack.c.b16 %v444, %v438
    %v601 = vpack.c.b16 %v445, %v439
    %v602 = vpack.c.b16 %v452, %v446
    %v603 = vpack.c.b16 %v453, %v447
    %v604 = vpack.c.b16 %v454, %v448
    %v605 = vpack.c.b16 %v455, %v449
    %v606 = vpack.c.b16 %v456, %v450
    %v607 = vpack.c.b16 %v457, %v451
    %v608 = vpack.c.b16 %v464, %v458
    %v609 = vpack.c.b16 %v465, %v459
    %v610 = vpack.c.b16 %v466, %v460
    %v611 = vpack.c.b16 %v467, %v461
    %v612 = vpack.c.b16 %v468, %v462
    %v613 = vpack.c.b16 %v469, %v463
    %v614 = vpack.c.b16 %v476, %v470
    %v615 = vpack.c.b16 %v477, %v471
    %v616 = vpack.c.b16 %v478, %v472
    %v617 = vpack.c.b16 %v479, %v473
    %v618 = vpack.c.b16 %v480, %v474
    %v619 = vpack.c.b16 %v481, %v475
    %v620 = vpack.c.b16 %v488, %v482
    %v621 = vpack.c.b16 %v489, %v483
    %v622 = vpack.c.b16 %v490, %v484
    %v623 = vpack.c.b16 %v491, %v485
    %v624 = vpack.c.b16 %v492, %v486
    %v625 = vpack.c.b16 %v493, %v487
    %v626 = vpack.c.b16 %v500, %v494
    %v627 = vpack.c.b16 %v501, %v495
    %v628 = vpack.c.b16 %v502, %v496
    %v629 = vpack.c.b16 %v503, %v497
    %v630 = vpack.c.b16 %v504, %v498
    %v631 = vpack.c.b16 %v505, %v499
    %v632 = vpack.c.b16 %v512, %v506
    %v633 = vpack.c.b16 %v513, %v507
    %v634 = vpack.c.b16 %v514, %v508
    %v635 = vpack.c.b16 %v515, %v509
    %v636 = vpack.c.b16 %v516, %v510
    %v637 = vpack.c.b16 %v517, %v511
    %v638 = vpack.c.b16 %v524, %v518
    %v639 = vpack.c.b16 %v525, %v519
    %v640 = vpack.c.b16 %v526, %v520
    %v641 = vpack.c.b16 %v527, %v521
    %v642 = vpack.c.b16 %v528, %v522
    %v643 = vpack.c.b16 %v529, %v523
    %v644 = vpack.c.b16 %v536, %v530
    %v645 = vpack.c.b16 %v537, %v531
    %v646 = vpack.c.b16 %v538, %v532
    %v647 = vpack.c.b16 %v539, %v533
    %v648 = vpack.c.b16 %v540, %v534
    %v649 = vpack.c.b16 %v541, %v535
    %v650 = vpack.c.b16 %v548, %v542
    %v651 = vpack.c.b16 %v549, %v543
    %v652 = vpack.c.b16 %v550, %v544
    %v653 = vpack.c.b16 %v551, %v545
    %v654 = vpack.c.b16 %v552, %v546
    %v655 = vpack.c.b16 %v553, %v547
    %v656 = vpack.c.b16 %v560, %v554
    %v657 = vpack.c.b16 %v561, %v555
    %v658 = vpack.c.b16 %v562, %v556
    %v659 = vpack.c.b16 %v563, %v557
    %v660 = vpack.c.b16 %v564, %v558
    %v661 = vpack.c.b16 %v565, %v559
    %758 = vmatprep.subr.bf16.mxu0 %v567
    %759 = vmatpush1.bf16.msra.mxu0 %v566
    %760 = vmatprep.subr.bf16.mxu0 %v573
    %761 = vmatpush1.bf16.msra.mxu0 %v572
    %762 = vmatprep.subr.bf16.mxu0 %v579
    %763 = vmatpush1.bf16.msra.mxu0 %v578
    %764 = vmatprep.subr.bf16.mxu0 %v585
    %765 = vmatpush1.bf16.msra.mxu0 %v584
    %766 = vmatprep.subr.bf16.mxu0 %v591
    %767 = vmatpush1.bf16.msra.mxu0 %v590
    %768 = vmatprep.subr.bf16.mxu0 %v597
    %769 = vmatpush1.bf16.msra.mxu0 %v596
    %770 = vmatprep.subr.bf16.mxu0 %v603
    %771 = vmatpush1.bf16.msra.mxu0 %v602
    %772 = vmatprep.subr.bf16.mxu0 %v609
    %773 = vmatpush1.bf16.msra.mxu0 %v608
    %774 = vmatprep.subr.bf16.mxu0 %v615
    %775 = vmatpush1.bf16.msra.mxu0 %v614
    %776 = vmatprep.subr.bf16.mxu0 %v621
    %777 = vmatpush1.bf16.msra.mxu0 %v620
    %778 = vmatprep.subr.bf16.mxu0 %v627
    %779 = vmatpush1.bf16.msra.mxu0 %v626
    %780 = vmatprep.subr.bf16.mxu0 %v633
    %781 = vmatpush1.bf16.msra.mxu0 %v632
    %782 = vmatprep.subr.bf16.mxu0 %v639
    %783 = vmatpush1.bf16.msra.mxu0 %v638
    %784 = vmatprep.subr.bf16.mxu0 %v645
    %785 = vmatpush1.bf16.msra.mxu0 %v644
    %786 = vmatprep.subr.bf16.mxu0 %v651
    %787 = vmatpush1.bf16.msra.mxu0 %v650
    %788 = vmatprep.subr.bf16.mxu0 %v657
    %789 = vmatpush1.bf16.msra.mxu0 %v656
    %790 = vmatprep.mubr.bf16.mxu0 %v147
    %791 = vmatmul.mubr.bf16.gmra.mrb[0].mxu0 %v146
    %v792 = vpop.f32.mrb[0].mxu0
    %v793 = vadd.f32 %v251, %v792
    %v794 = vpop.f32.mrb[0].mxu0
    %v795 = vadd.f32 %v255, %v794
    %v796 = vpop.f32.mrb[0].mxu0
    %v797 = vadd.f32 %v251, %v796
    %v798 = vpop.f32.mrb[0].mxu0
    %v799 = vadd.f32 %v255, %v798
    %800 = vmatprep.mubr.bf16.mxu0 %v149
    %801 = vmatmul.mubr.bf16.gmra.mrb[0].mxu0 %v148
    %v802 = vpop.f32.mrb[0].mxu0
    %v803 = vadd.f32 %v251, %v802
    %v804 = vpop.f32.mrb[0].mxu0
    %v805 = vadd.f32 %v255, %v804
    %v806 = vpop.f32.mrb[0].mxu0
    %v807 = vadd.f32 %v251, %v806
    %v808 = vpop.f32.mrb[0].mxu0
    %v809 = vadd.f32 %v255, %v808
    %810 = vdwg.mxu0
    %811 = vmatprep.subr.bf16.mxu0 %v569
    %812 = vmatpush1.bf16.msra.mxu0 %v568
    %813 = vmatprep.subr.bf16.mxu0 %v575
    %814 = vmatpush1.bf16.msra.mxu0 %v574
    %815 = vmatprep.subr.bf16.mxu0 %v581
    %816 = vmatpush1.bf16.msra.mxu0 %v580
    %817 = vmatprep.subr.bf16.mxu0 %v587
    %818 = vmatpush1.bf16.msra.mxu0 %v586
    %819 = vmatprep.subr.bf16.mxu0 %v593
    %820 = vmatpush1.bf16.msra.mxu0 %v592
    %821 = vmatprep.subr.bf16.mxu0 %v599
    %822 = vmatpush1.bf16.msra.mxu0 %v598
    %823 = vmatprep.subr.bf16.mxu0 %v605
    %824 = vmatpush1.bf16.msra.mxu0 %v604
    %825 = vmatprep.subr.bf16.mxu0 %v611
    %826 = vmatpush1.bf16.msra.mxu0 %v610
    %827 = vmatprep.subr.bf16.mxu0 %v617
    %828 = vmatpush1.bf16.msra.mxu0 %v616
    %829 = vmatprep.subr.bf16.mxu0 %v623
    %830 = vmatpush1.bf16.msra.mxu0 %v622
    %831 = vmatprep.subr.bf16.mxu0 %v629
    %832 = vmatpush1.bf16.msra.mxu0 %v628
    %833 = vmatprep.subr.bf16.mxu0 %v635
    %834 = vmatpush1.bf16.msra.mxu0 %v634
    %835 = vmatprep.subr.bf16.mxu0 %v641
    %836 = vmatpush1.bf16.msra.mxu0 %v640
    %837 = vmatprep.subr.bf16.mxu0 %v647
    %838 = vmatpush1.bf16.msra.mxu0 %v646
    %839 = vmatprep.subr.bf16.mxu0 %v653
    %840 = vmatpush1.bf16.msra.mxu0 %v652
    %841 = vmatprep.subr.bf16.mxu0 %v659
    %842 = vmatpush1.bf16.msra.mxu0 %v658
    %843 = vmatprep.mubr.bf16.mxu0 %v147
    %844 = vmatmul.mubr.bf16.gmra.mrb[0].mxu0 %v146
    %v845 = vpop.f32.mrb[0].mxu0
    %v846 = vadd.f32 %v259, %v845
    %v847 = vpop.f32.mrb[0].mxu0
    %v848 = vadd.f32 %v263, %v847
    %v849 = vpop.f32.mrb[0].mxu0
    %v850 = vadd.f32 %v259, %v849
    %v851 = vpop.f32.mrb[0].mxu0
    %v852 = vadd.f32 %v263, %v851
    %853 = vmatprep.mubr.bf16.mxu0 %v149
    %854 = vmatmul.mubr.bf16.gmra.mrb[0].mxu0 %v148
    %v855 = vpop.f32.mrb[0].mxu0
    %v856 = vadd.f32 %v259, %v855
    %v857 = vpop.f32.mrb[0].mxu0
    %v858 = vadd.f32 %v263, %v857
    %v859 = vpop.f32.mrb[0].mxu0
    %v860 = vadd.f32 %v259, %v859
    %v861 = vpop.f32.mrb[0].mxu0
    %v862 = vadd.f32 %v263, %v861
    %863 = vdwg.mxu0
    %864 = vmatprep.subr.bf16.mxu0 %v571
    %865 = vmatpush1.bf16.msra.mxu0 %v570
    %866 = vmatprep.subr.bf16.mxu0 %v577
    %867 = vmatpush1.bf16.msra.mxu0 %v576
    %868 = vmatprep.subr.bf16.mxu0 %v583
    %869 = vmatpush1.bf16.msra.mxu0 %v582
    %870 = vmatprep.subr.bf16.mxu0 %v589
    %871 = vmatpush1.bf16.msra.mxu0 %v588
    %872 = vmatprep.subr.bf16.mxu0 %v595
    %873 = vmatpush1.bf16.msra.mxu0 %v594
    %874 = vmatprep.subr.bf16.mxu0 %v601
    %875 = vmatpush1.bf16.msra.mxu0 %v600
    %876 = vmatprep.subr.bf16.mxu0 %v607
    %877 = vmatpush1.bf16.msra.mxu0 %v606
    %878 = vmatprep.subr.bf16.mxu0 %v613
    %879 = vmatpush1.bf16.msra.mxu0 %v612
    %880 = vmatprep.subr.bf16.mxu0 %v619
    %881 = vmatpush1.bf16.msra.mxu0 %v618
    %882 = vmatprep.subr.bf16.mxu0 %v625
    %883 = vmatpush1.bf16.msra.mxu0 %v624
    %884 = vmatprep.subr.bf16.mxu0 %v631
    %885 = vmatpush1.bf16.msra.mxu0 %v630
    %886 = vmatprep.subr.bf16.mxu0 %v637
    %887 = vmatpush1.bf16.msra.mxu0 %v636
    %888 = vmatprep.subr.bf16.mxu0 %v643
    %889 = vmatpush1.bf16.msra.mxu0 %v642
    %890 = vmatprep.subr.bf16.mxu0 %v649
    %891 = vmatpush1.bf16.msra.mxu0 %v648
    %892 = vmatprep.subr.bf16.mxu0 %v655
    %893 = vmatpush1.bf16.msra.mxu0 %v654
    %894 = vmatprep.subr.bf16.mxu0 %v661
    %895 = vmatpush1.bf16.msra.mxu0 %v660
    %896 = vmatprep.mubr.bf16.mxu0 %v147
    %897 = vmatmul.mubr.bf16.gmra.mrb[0].mxu0 %v146
    %v898 = vpop.f32.mrb[0].mxu0
    %v899 = vadd.f32 %v267, %v898
    %v900 = vpop.f32.mrb[0].mxu0
    %v901 = vadd.f32 %v271, %v900
    %v902 = vpop.f32.mrb[0].mxu0
    %v903 = vadd.f32 %v267, %v902
    %v904 = vpop.f32.mrb[0].mxu0
    %v905 = vadd.f32 %v271, %v904
    %906 = vmatprep.mubr.bf16.mxu0 %v149
    %907 = vmatmul.mubr.bf16.gmra.mrb[0].mxu0 %v148
    %v908 = vpop.f32.mrb[0].mxu0
    %v909 = vadd.f32 %v267, %v908
    %v910 = vpop.f32.mrb[0].mxu0
    %v911 = vadd.f32 %v271, %v910
    %v912 = vpop.f32.mrb[0].mxu0
    %v913 = vadd.f32 %v267, %v912
    %v914 = vpop.f32.mrb[0].mxu0
    %v915 = vadd.f32 %v271, %v914
    %916 = vdwg.mxu0
    %921 = vrot.lane.b32.xlu0 %v793, 64
    %v922 = vpop.permute.xlu0 %921
    %923 = vrot.lane.b32.xlu0 %v797, 64
    %v924 = vpop.permute.xlu0 %923
    %925 = vrot.lane.b32.xlu0 %v803, 64
    %v926 = vpop.permute.xlu0 %925
    %927 = vrot.lane.b32.xlu0 %v807, 64
    %v928 = vpop.permute.xlu0 %927
    %937 = vrot.lane.b32.xlu0 %v795, 64
    %v938 = vpop.permute.xlu0 %937
    %939 = vrot.lane.b32.xlu0 %v799, 64
    %v940 = vpop.permute.xlu0 %939
    %941 = vrot.lane.b32.xlu0 %v805, 64
    %v942 = vpop.permute.xlu0 %941
    %943 = vrot.lane.b32.xlu0 %v809, 64
    %v944 = vpop.permute.xlu0 %943
    %v949 = vpack.c.bf16 %v797, %v793
    %v950 = vpack.c.bf16 %v807, %v803
    %v951 = vpack.c.bf16 %v924, %v922
    %v952 = vpack.c.bf16 %v928, %v926
    %v953 = vpack.c.bf16 %v799, %v795
    %v954 = vpack.c.bf16 %v809, %v805
    %v955 = vpack.c.bf16 %v940, %v938
    %v956 = vpack.c.bf16 %v944, %v942
    %961 = vrot.lane.b32.xlu0 %v846, 64
    %v962 = vpop.permute.xlu0 %961
    %963 = vrot.lane.b32.xlu0 %v850, 64
    %v964 = vpop.permute.xlu0 %963
    %965 = vrot.lane.b32.xlu0 %v856, 64
    %v966 = vpop.permute.xlu0 %965
    %967 = vrot.lane.b32.xlu0 %v860, 64
    %v968 = vpop.permute.xlu0 %967
    %977 = vrot.lane.b32.xlu0 %v848, 64
    %v978 = vpop.permute.xlu0 %977
    %979 = vrot.lane.b32.xlu0 %v852, 64
    %v980 = vpop.permute.xlu0 %979
    %981 = vrot.lane.b32.xlu0 %v858, 64
    %v982 = vpop.permute.xlu0 %981
    %983 = vrot.lane.b32.xlu0 %v862, 64
    %v984 = vpop.permute.xlu0 %983
    %v989 = vpack.c.bf16 %v850, %v846
    %v990 = vpack.c.bf16 %v860, %v856
    %v991 = vpack.c.bf16 %v964, %v962
    %v992 = vpack.c.bf16 %v968, %v966
    %v993 = vpack.c.bf16 %v852, %v848
    %v994 = vpack.c.bf16 %v862, %v858
    %v995 = vpack.c.bf16 %v980, %v978
    %v996 = vpack.c.bf16 %v984, %v982
    %1001 = vrot.lane.b32.xlu0 %v899, 64
    %v1002 = vpop.permute.xlu0 %1001
    %1003 = vrot.lane.b32.xlu0 %v903, 64
    %v1004 = vpop.permute.xlu0 %1003
    %1005 = vrot.lane.b32.xlu0 %v909, 64
    %v1006 = vpop.permute.xlu0 %1005
    %1007 = vrot.lane.b32.xlu0 %v913, 64
    %v1008 = vpop.permute.xlu0 %1007
    %1017 = vrot.lane.b32.xlu0 %v901, 64
    %v1018 = vpop.permute.xlu0 %1017
    %1019 = vrot.lane.b32.xlu0 %v905, 64
    %v1020 = vpop.permute.xlu0 %1019
    %1021 = vrot.lane.b32.xlu0 %v911, 64
    %v1022 = vpop.permute.xlu0 %1021
    %1023 = vrot.lane.b32.xlu0 %v915, 64
    %v1024 = vpop.permute.xlu0 %1023
    %v1029 = vpack.c.bf16 %v903, %v899
    %v1030 = vpack.c.bf16 %v913, %v909
    %v1031 = vpack.c.bf16 %v1004, %v1002
    %v1032 = vpack.c.bf16 %v1008, %v1006
    %v1033 = vpack.c.bf16 %v905, %v901
    %v1034 = vpack.c.bf16 %v915, %v911
    %v1035 = vpack.c.bf16 %v1020, %v1018
    %v1036 = vpack.c.bf16 %v1024, %v1022
    %vm1037 = vcmask 523264
    %v1039 = vsel %vm1037, %v949, 0
    %v1042 = vsel %vm1037, %v989, 0
    %1044 = vmatprep.subr.bf16.mxu0 0
    %1045 = vmatpush1.bf16.xpose.msra.mxu0 %v1042
    %1046 = vmatprep.subr.bf16.mxu0 0
    %1047 = vmatpush1.bf16.xpose.msra.mxu0 0
    %1048 = vmatprep.subr.bf16.mxu0 0
    %1049 = vmatpush1.bf16.xpose.msra.mxu0 0
    %1050 = vmatprep.subr.bf16.mxu0 0
    %1051 = vmatpush1.bf16.xpose.msra.mxu0 0
    %1052 = vmatprep.subr.bf16.mxu0 0
    %1053 = vmatpush1.bf16.xpose.msra.mxu0 0
    %1054 = vmatprep.subr.bf16.mxu0 0
    %1055 = vmatpush1.bf16.xpose.msra.mxu0 0
    %1056 = vmatprep.subr.bf16.mxu0 0
    %1057 = vmatpush1.bf16.xpose.msra.mxu0 0
    %1058 = vmatprep.subr.bf16.mxu0 0
    %1059 = vmatpush1.bf16.xpose.msra.mxu0 0
    %1060 = vmatprep.subr.bf16.mxu0 0
    %1061 = vmatpush1.bf16.xpose.msra.mxu0 0
    %1062 = vmatprep.subr.bf16.mxu0 0
    %1063 = vmatpush1.bf16.xpose.msra.mxu0 0
    %1064 = vmatprep.subr.bf16.mxu0 0
    %1065 = vmatpush1.bf16.xpose.msra.mxu0 0
    %1066 = vmatprep.subr.bf16.mxu0 0
    %1067 = vmatpush1.bf16.xpose.msra.mxu0 0
    %1068 = vmatprep.subr.bf16.mxu0 0
    %1069 = vmatpush1.bf16.xpose.msra.mxu0 0
    %1070 = vmatprep.subr.bf16.mxu0 0
    %1071 = vmatpush1.bf16.xpose.msra.mxu0 0
    %1072 = vmatprep.subr.bf16.mxu0 0
    %1073 = vmatpush1.bf16.xpose.msra.mxu0 0
    %1074 = vmatprep.subr.bf16.mxu0 0
    %1075 = vmatpush1.bf16.xpose.msra.mxu0 0
    %1076 = vmatprep.mubr.bf16.mxu0 0
    %1077 = vmatmul.mubr.bf16.gmra.mrb[0].mxu0 %v1039
    %v1078 = vpop.f32.mrb[0].mxu0
    %v1079 = vadd.f32 0.0, %v1078
    %v1080 = vpop.f32.mrb[0].mxu0
    %v1081 = vpop.f32.mrb[0].mxu0
    %v1082 = vadd.f32 0.0, %v1081
    %v1083 = vpop.f32.mrb[0].mxu0
    %1084 = vdwg.mxu0
    %v1086 = vsel %vm1037, %v950, 0
    %v1089 = vsel %vm1037, %v990, 0
    %1091 = vmatprep.subr.bf16.mxu0 0
    %1092 = vmatpush1.bf16.xpose.msra.mxu0 %v1089
    %1093 = vmatprep.subr.bf16.mxu0 0
    %1094 = vmatpush1.bf16.xpose.msra.mxu0 0
    %1095 = vmatprep.subr.bf16.mxu0 0
    %1096 = vmatpush1.bf16.xpose.msra.mxu0 0
    %1097 = vmatprep.subr.bf16.mxu0 0
    %1098 = vmatpush1.bf16.xpose.msra.mxu0 0
    %1099 = vmatprep.subr.bf16.mxu0 0
    %1100 = vmatpush1.bf16.xpose.msra.mxu0 0
    %1101 = vmatprep.subr.bf16.mxu0 0
    %1102 = vmatpush1.bf16.xpose.msra.mxu0 0
    %1103 = vmatprep.subr.bf16.mxu0 0
    %1104 = vmatpush1.bf16.xpose.msra.mxu0 0
    %1105 = vmatprep.subr.bf16.mxu0 0
    %1106 = vmatpush1.bf16.xpose.msra.mxu0 0
    %1107 = vmatprep.subr.bf16.mxu0 0
    %1108 = vmatpush1.bf16.xpose.msra.mxu0 0
    %1109 = vmatprep.subr.bf16.mxu0 0
    %1110 = vmatpush1.bf16.xpose.msra.mxu0 0
    %1111 = vmatprep.subr.bf16.mxu0 0
    %1112 = vmatpush1.bf16.xpose.msra.mxu0 0
    %1113 = vmatprep.subr.bf16.mxu0 0
    %1114 = vmatpush1.bf16.xpose.msra.mxu0 0
    %1115 = vmatprep.subr.bf16.mxu0 0
    %1116 = vmatpush1.bf16.xpose.msra.mxu0 0
    %1117 = vmatprep.subr.bf16.mxu0 0
    %1118 = vmatpush1.bf16.xpose.msra.mxu0 0
    %1119 = vmatprep.subr.bf16.mxu0 0
    %1120 = vmatpush1.bf16.xpose.msra.mxu0 0
    %1121 = vmatprep.subr.bf16.mxu0 0
    %1122 = vmatpush1.bf16.xpose.msra.mxu0 0
    %1123 = vmatprep.mubr.bf16.mxu0 0
    %1124 = vmatmul.mubr.bf16.gmra.mrb[0].mxu0 %v1086
    %v1125 = vpop.f32.mrb[0].mxu0
    %v1126 = vadd.f32 0.0, %v1125
    %v1127 = vpop.f32.mrb[0].mxu0
    %v1128 = vpop.f32.mrb[0].mxu0
    %v1129 = vadd.f32 0.0, %v1128
    %v1130 = vpop.f32.mrb[0].mxu0
    %1131 = vdwg.mxu0
    %v1133 = vsel %vm1037, %v951, 0
    %v1136 = vsel %vm1037, %v991, 0
    %1138 = vmatprep.subr.bf16.mxu0 0
    %1139 = vmatpush1.bf16.xpose.msra.mxu0 %v1136
    %1140 = vmatprep.subr.bf16.mxu0 0
    %1141 = vmatpush1.bf16.xpose.msra.mxu0 0
    %1142 = vmatprep.subr.bf16.mxu0 0
    %1143 = vmatpush1.bf16.xpose.msra.mxu0 0
    %1144 = vmatprep.subr.bf16.mxu0 0
    %1145 = vmatpush1.bf16.xpose.msra.mxu0 0
    %1146 = vmatprep.subr.bf16.mxu0 0
    %1147 = vmatpush1.bf16.xpose.msra.mxu0 0
    %1148 = vmatprep.subr.bf16.mxu0 0
    %1149 = vmatpush1.bf16.xpose.msra.mxu0 0
    %1150 = vmatprep.subr.bf16.mxu0 0
    %1151 = vmatpush1.bf16.xpose.msra.mxu0 0
    %1152 = vmatprep.subr.bf16.mxu0 0
    %1153 = vmatpush1.bf16.xpose.msra.mxu0 0
    %1154 = vmatprep.subr.bf16.mxu0 0
    %1155 = vmatpush1.bf16.xpose.msra.mxu0 0
    %1156 = vmatprep.subr.bf16.mxu0 0
    %1157 = vmatpush1.bf16.xpose.msra.mxu0 0
    %1158 = vmatprep.subr.bf16.mxu0 0
    %1159 = vmatpush1.bf16.xpose.msra.mxu0 0
    %1160 = vmatprep.subr.bf16.mxu0 0
    %1161 = vmatpush1.bf16.xpose.msra.mxu0 0
    %1162 = vmatprep.subr.bf16.mxu0 0
    %1163 = vmatpush1.bf16.xpose.msra.mxu0 0
    %1164 = vmatprep.subr.bf16.mxu0 0
    %1165 = vmatpush1.bf16.xpose.msra.mxu0 0
    %1166 = vmatprep.subr.bf16.mxu0 0
    %1167 = vmatpush1.bf16.xpose.msra.mxu0 0
    %1168 = vmatprep.subr.bf16.mxu0 0
    %1169 = vmatpush1.bf16.xpose.msra.mxu0 0
    %1170 = vmatprep.mubr.bf16.mxu0 0
    %1171 = vmatmul.mubr.bf16.gmra.mrb[0].mxu0 %v1133
    %v1172 = vpop.f32.mrb[0].mxu0
    %v1173 = vadd.f32 0.0, %v1172
    %v1174 = vpop.f32.mrb[0].mxu0
    %v1175 = vpop.f32.mrb[0].mxu0
    %v1176 = vadd.f32 0.0, %v1175
    %v1177 = vpop.f32.mrb[0].mxu0
    %1178 = vdwg.mxu0
    %v1180 = vsel %vm1037, %v952, 0
    %v1183 = vsel %vm1037, %v992, 0
    %1185 = vmatprep.subr.bf16.mxu0 0
    %1186 = vmatpush1.bf16.xpose.msra.mxu0 %v1183
    %1187 = vmatprep.subr.bf16.mxu0 0
    %1188 = vmatpush1.bf16.xpose.msra.mxu0 0
    %1189 = vmatprep.subr.bf16.mxu0 0
    %1190 = vmatpush1.bf16.xpose.msra.mxu0 0
    %1191 = vmatprep.subr.bf16.mxu0 0
    %1192 = vmatpush1.bf16.xpose.msra.mxu0 0
    %1193 = vmatprep.subr.bf16.mxu0 0
    %1194 = vmatpush1.bf16.xpose.msra.mxu0 0
    %1195 = vmatprep.subr.bf16.mxu0 0
    %1196 = vmatpush1.bf16.xpose.msra.mxu0 0
    %1197 = vmatprep.subr.bf16.mxu0 0
    %1198 = vmatpush1.bf16.xpose.msra.mxu0 0
    %1199 = vmatprep.subr.bf16.mxu0 0
    %1200 = vmatpush1.bf16.xpose.msra.mxu0 0
    %1201 = vmatprep.subr.bf16.mxu0 0
    %1202 = vmatpush1.bf16.xpose.msra.mxu0 0
    %1203 = vmatprep.subr.bf16.mxu0 0
    %1204 = vmatpush1.bf16.xpose.msra.mxu0 0
    %1205 = vmatprep.subr.bf16.mxu0 0
    %1206 = vmatpush1.bf16.xpose.msra.mxu0 0
    %1207 = vmatprep.subr.bf16.mxu0 0
    %1208 = vmatpush1.bf16.xpose.msra.mxu0 0
    %1209 = vmatprep.subr.bf16.mxu0 0
    %1210 = vmatpush1.bf16.xpose.msra.mxu0 0
    %1211 = vmatprep.subr.bf16.mxu0 0
    %1212 = vmatpush1.bf16.xpose.msra.mxu0 0
    %1213 = vmatprep.subr.bf16.mxu0 0
    %1214 = vmatpush1.bf16.xpose.msra.mxu0 0
    %1215 = vmatprep.subr.bf16.mxu0 0
    %1216 = vmatpush1.bf16.xpose.msra.mxu0 0
    %1217 = vmatprep.mubr.bf16.mxu0 0
    %1218 = vmatmul.mubr.bf16.gmra.mrb[0].mxu0 %v1180
    %v1219 = vpop.f32.mrb[0].mxu0
    %v1220 = vadd.f32 0.0, %v1219
    %v1221 = vpop.f32.mrb[0].mxu0
    %v1222 = vpop.f32.mrb[0].mxu0
    %v1223 = vadd.f32 0.0, %v1222
    %v1224 = vpop.f32.mrb[0].mxu0
    %1225 = vdwg.mxu0
    %v1227 = vsel %vm1037, %v953, 0
    %v1230 = vsel %vm1037, %v993, 0
    %1232 = vmatprep.subr.bf16.mxu0 0
    %1233 = vmatpush1.bf16.xpose.msra.mxu0 %v1230
    %1234 = vmatprep.subr.bf16.mxu0 0
    %1235 = vmatpush1.bf16.xpose.msra.mxu0 0
    %1236 = vmatprep.subr.bf16.mxu0 0
    %1237 = vmatpush1.bf16.xpose.msra.mxu0 0
    %1238 = vmatprep.subr.bf16.mxu0 0
    %1239 = vmatpush1.bf16.xpose.msra.mxu0 0
    %1240 = vmatprep.subr.bf16.mxu0 0
    %1241 = vmatpush1.bf16.xpose.msra.mxu0 0
    %1242 = vmatprep.subr.bf16.mxu0 0
    %1243 = vmatpush1.bf16.xpose.msra.mxu0 0
    %1244 = vmatprep.subr.bf16.mxu0 0
    %1245 = vmatpush1.bf16.xpose.msra.mxu0 0
    %1246 = vmatprep.subr.bf16.mxu0 0
    %1247 = vmatpush1.bf16.xpose.msra.mxu0 0
    %1248 = vmatprep.subr.bf16.mxu0 0
    %1249 = vmatpush1.bf16.xpose.msra.mxu0 0
    %1250 = vmatprep.subr.bf16.mxu0 0
    %1251 = vmatpush1.bf16.xpose.msra.mxu0 0
    %1252 = vmatprep.subr.bf16.mxu0 0
    %1253 = vmatpush1.bf16.xpose.msra.mxu0 0
    %1254 = vmatprep.subr.bf16.mxu0 0
    %1255 = vmatpush1.bf16.xpose.msra.mxu0 0
    %1256 = vmatprep.subr.bf16.mxu0 0
    %1257 = vmatpush1.bf16.xpose.msra.mxu0 0
    %1258 = vmatprep.subr.bf16.mxu0 0
    %1259 = vmatpush1.bf16.xpose.msra.mxu0 0
    %1260 = vmatprep.subr.bf16.mxu0 0
    %1261 = vmatpush1.bf16.xpose.msra.mxu0 0
    %1262 = vmatprep.subr.bf16.mxu0 0
    %1263 = vmatpush1.bf16.xpose.msra.mxu0 0
    %1264 = vmatprep.mubr.bf16.mxu0 0
    %1265 = vmatmul.mubr.bf16.gmra.mrb[0].mxu0 %v1227
    %v1266 = vpop.f32.mrb[0].mxu0
    %v1267 = vadd.f32 0.0, %v1266
    %v1268 = vpop.f32.mrb[0].mxu0
    %v1269 = vpop.f32.mrb[0].mxu0
    %v1270 = vadd.f32 0.0, %v1269
    %v1271 = vpop.f32.mrb[0].mxu0
    %1272 = vdwg.mxu0
    %v1274 = vsel %vm1037, %v954, 0
    %v1277 = vsel %vm1037, %v994, 0
    %1279 = vmatprep.subr.bf16.mxu0 0
    %1280 = vmatpush1.bf16.xpose.msra.mxu0 %v1277
    %1281 = vmatprep.subr.bf16.mxu0 0
    %1282 = vmatpush1.bf16.xpose.msra.mxu0 0
    %1283 = vmatprep.subr.bf16.mxu0 0
    %1284 = vmatpush1.bf16.xpose.msra.mxu0 0
    %1285 = vmatprep.subr.bf16.mxu0 0
    %1286 = vmatpush1.bf16.xpose.msra.mxu0 0
    %1287 = vmatprep.subr.bf16.mxu0 0
    %1288 = vmatpush1.bf16.xpose.msra.mxu0 0
    %1289 = vmatprep.subr.bf16.mxu0 0
    %1290 = vmatpush1.bf16.xpose.msra.mxu0 0
    %1291 = vmatprep.subr.bf16.mxu0 0
    %1292 = vmatpush1.bf16.xpose.msra.mxu0 0
    %1293 = vmatprep.subr.bf16.mxu0 0
    %1294 = vmatpush1.bf16.xpose.msra.mxu0 0
    %1295 = vmatprep.subr.bf16.mxu0 0
    %1296 = vmatpush1.bf16.xpose.msra.mxu0 0
    %1297 = vmatprep.subr.bf16.mxu0 0
    %1298 = vmatpush1.bf16.xpose.msra.mxu0 0
    %1299 = vmatprep.subr.bf16.mxu0 0
    %1300 = vmatpush1.bf16.xpose.msra.mxu0 0
    %1301 = vmatprep.subr.bf16.mxu0 0
    %1302 = vmatpush1.bf16.xpose.msra.mxu0 0
    %1303 = vmatprep.subr.bf16.mxu0 0
    %1304 = vmatpush1.bf16.xpose.msra.mxu0 0
    %1305 = vmatprep.subr.bf16.mxu0 0
    %1306 = vmatpush1.bf16.xpose.msra.mxu0 0
    %1307 = vmatprep.subr.bf16.mxu0 0
    %1308 = vmatpush1.bf16.xpose.msra.mxu0 0
    %1309 = vmatprep.subr.bf16.mxu0 0
    %1310 = vmatpush1.bf16.xpose.msra.mxu0 0
    %1311 = vmatprep.mubr.bf16.mxu0 0
    %1312 = vmatmul.mubr.bf16.gmra.mrb[0].mxu0 %v1274
    %v1313 = vpop.f32.mrb[0].mxu0
    %v1314 = vadd.f32 0.0, %v1313
    %v1315 = vpop.f32.mrb[0].mxu0
    %v1316 = vpop.f32.mrb[0].mxu0
    %v1317 = vadd.f32 0.0, %v1316
    %v1318 = vpop.f32.mrb[0].mxu0
    %1319 = vdwg.mxu0
    %v1321 = vsel %vm1037, %v955, 0
    %v1324 = vsel %vm1037, %v995, 0
    %1326 = vmatprep.subr.bf16.mxu0 0
    %1327 = vmatpush1.bf16.xpose.msra.mxu0 %v1324
    %1328 = vmatprep.subr.bf16.mxu0 0
    %1329 = vmatpush1.bf16.xpose.msra.mxu0 0
    %1330 = vmatprep.subr.bf16.mxu0 0
    %1331 = vmatpush1.bf16.xpose.msra.mxu0 0
    %1332 = vmatprep.subr.bf16.mxu0 0
    %1333 = vmatpush1.bf16.xpose.msra.mxu0 0
    %1334 = vmatprep.subr.bf16.mxu0 0
    %1335 = vmatpush1.bf16.xpose.msra.mxu0 0
    %1336 = vmatprep.subr.bf16.mxu0 0
    %1337 = vmatpush1.bf16.xpose.msra.mxu0 0
    %1338 = vmatprep.subr.bf16.mxu0 0
    %1339 = vmatpush1.bf16.xpose.msra.mxu0 0
    %1340 = vmatprep.subr.bf16.mxu0 0
    %1341 = vmatpush1.bf16.xpose.msra.mxu0 0
    %1342 = vmatprep.subr.bf16.mxu0 0
    %1343 = vmatpush1.bf16.xpose.msra.mxu0 0
    %1344 = vmatprep.subr.bf16.mxu0 0
    %1345 = vmatpush1.bf16.xpose.msra.mxu0 0
    %1346 = vmatprep.subr.bf16.mxu0 0
    %1347 = vmatpush1.bf16.xpose.msra.mxu0 0
    %1348 = vmatprep.subr.bf16.mxu0 0
    %1349 = vmatpush1.bf16.xpose.msra.mxu0 0
    %1350 = vmatprep.subr.bf16.mxu0 0
    %1351 = vmatpush1.bf16.xpose.msra.mxu0 0
    %1352 = vmatprep.subr.bf16.mxu0 0
    %1353 = vmatpush1.bf16.xpose.msra.mxu0 0
    %1354 = vmatprep.subr.bf16.mxu0 0
    %1355 = vmatpush1.bf16.xpose.msra.mxu0 0
    %1356 = vmatprep.subr.bf16.mxu0 0
    %1357 = vmatpush1.bf16.xpose.msra.mxu0 0
    %1358 = vmatprep.mubr.bf16.mxu0 0
    %1359 = vmatmul.mubr.bf16.gmra.mrb[0].mxu0 %v1321
    %v1360 = vpop.f32.mrb[0].mxu0
    %v1361 = vadd.f32 0.0, %v1360
    %v1362 = vpop.f32.mrb[0].mxu0
    %v1363 = vpop.f32.mrb[0].mxu0
    %v1364 = vadd.f32 0.0, %v1363
    %v1365 = vpop.f32.mrb[0].mxu0
    %1366 = vdwg.mxu0
    %v1368 = vsel %vm1037, %v956, 0
    %v1371 = vsel %vm1037, %v996, 0
    %1373 = vmatprep.subr.bf16.mxu0 0
    %1374 = vmatpush1.bf16.xpose.msra.mxu0 %v1371
    %1375 = vmatprep.subr.bf16.mxu0 0
    %1376 = vmatpush1.bf16.xpose.msra.mxu0 0
    %1377 = vmatprep.subr.bf16.mxu0 0
    %1378 = vmatpush1.bf16.xpose.msra.mxu0 0
    %1379 = vmatprep.subr.bf16.mxu0 0
    %1380 = vmatpush1.bf16.xpose.msra.mxu0 0
    %1381 = vmatprep.subr.bf16.mxu0 0
    %1382 = vmatpush1.bf16.xpose.msra.mxu0 0
    %1383 = vmatprep.subr.bf16.mxu0 0
    %1384 = vmatpush1.bf16.xpose.msra.mxu0 0
    %1385 = vmatprep.subr.bf16.mxu0 0
    %1386 = vmatpush1.bf16.xpose.msra.mxu0 0
    %1387 = vmatprep.subr.bf16.mxu0 0
    %1388 = vmatpush1.bf16.xpose.msra.mxu0 0
    %1389 = vmatprep.subr.bf16.mxu0 0
    %1390 = vmatpush1.bf16.xpose.msra.mxu0 0
    %1391 = vmatprep.subr.bf16.mxu0 0
    %1392 = vmatpush1.bf16.xpose.msra.mxu0 0
    %1393 = vmatprep.subr.bf16.mxu0 0
    %1394 = vmatpush1.bf16.xpose.msra.mxu0 0
    %1395 = vmatprep.subr.bf16.mxu0 0
    %1396 = vmatpush1.bf16.xpose.msra.mxu0 0
    %1397 = vmatprep.subr.bf16.mxu0 0
    %1398 = vmatpush1.bf16.xpose.msra.mxu0 0
    %1399 = vmatprep.subr.bf16.mxu0 0
    %1400 = vmatpush1.bf16.xpose.msra.mxu0 0
    %1401 = vmatprep.subr.bf16.mxu0 0
    %1402 = vmatpush1.bf16.xpose.msra.mxu0 0
    %1403 = vmatprep.subr.bf16.mxu0 0
    %1404 = vmatpush1.bf16.xpose.msra.mxu0 0
    %1405 = vmatprep.mubr.bf16.mxu0 0
    %1406 = vmatmul.mubr.bf16.gmra.mrb[0].mxu0 %v1368
    %v1407 = vpop.f32.mrb[0].mxu0
    %v1408 = vadd.f32 0.0, %v1407
    %v1409 = vpop.f32.mrb[0].mxu0
    %v1410 = vpop.f32.mrb[0].mxu0
    %v1411 = vadd.f32 0.0, %v1410
    %v1412 = vpop.f32.mrb[0].mxu0
    %1413 = vdwg.mxu0
    %v1414 = vmul.f32 %v1079, 0.125
    %v1415 = vmul.f32 %v1082, 0.125
    %v1416 = vmul.f32 %v1126, 0.125
    %v1417 = vmul.f32 %v1129, 0.125
    %v1418 = vmul.f32 %v1173, 0.125
    %v1419 = vmul.f32 %v1176, 0.125
    %v1420 = vmul.f32 %v1220, 0.125
    %v1421 = vmul.f32 %v1223, 0.125
    %v1422 = vmul.f32 %v1267, 0.125
    %v1423 = vmul.f32 %v1270, 0.125
    %v1424 = vmul.f32 %v1314, 0.125
    %v1425 = vmul.f32 %v1317, 0.125
    %v1426 = vmul.f32 %v1361, 0.125
    %v1427 = vmul.f32 %v1364, 0.125
    %v1428 = vmul.f32 %v1408, 0.125
    %v1429 = vmul.f32 %v1411, 0.125
    %vm1430 = vcmp.ne.s32.totalorder %v142, 0
    %vm1431 = vcmp.ne.s32.totalorder %v143, 0
    %vm1432 = vcmp.ne.s32.totalorder %v144, 0
    %vm1433 = vcmp.ne.s32.totalorder %v145, 0
    %v1434 = vsel %vm1430, 1, 0
    %v1435 = vsel %vm1431, 1, 0
    %v1436 = vsel %vm1432, 1, 0
    %v1437 = vsel %vm1433, 1, 0
    %vm1438 = vcmp.eq.s32.totalorder %v1434, 1
    %vm1439 = vcmp.eq.s32.totalorder %v1435, 1
    %vm1440 = vcmp.eq.s32.totalorder %v1436, 1
    %vm1441 = vcmp.eq.s32.totalorder %v1437, 1
    %v1442 = vsel %vm1438, -1e+09, %v1414
    %v1443 = vsel %vm1439, -1e+09, %v1415
    %v1444 = vsel %vm1440, -1e+09, %v1416
    %v1445 = vsel %vm1441, -1e+09, %v1417
    %v1446 = vsel %vm1438, -1e+09, %v1418
    %v1447 = vsel %vm1439, -1e+09, %v1419
    %v1448 = vsel %vm1440, -1e+09, %v1420
    %v1449 = vsel %vm1441, -1e+09, %v1421
    %v1450 = vsel %vm1438, -1e+09, %v1422
    %v1451 = vsel %vm1439, -1e+09, %v1423
    %v1452 = vsel %vm1440, -1e+09, %v1424
    %v1453 = vsel %vm1441, -1e+09, %v1425
    %v1454 = vsel %vm1438, -1e+09, %v1426
    %v1455 = vsel %vm1439, -1e+09, %v1427
    %v1456 = vsel %vm1440, -1e+09, %v1428
    %v1457 = vsel %vm1441, -1e+09, %v1429
    %vm1458 = vcmask 130048
    %v1459 = vsel %vm1458, %v1442, -inf
    %1460 = vmax.xlane.f32.xlu0 %v1459
    %v1461 = vpop.xlane.xlu0 %1460
    %v1462 = vsel %vm1458, %v1443, -inf
    %1463 = vmax.xlane.f32.xlu0 %v1462
    %v1464 = vpop.xlane.xlu0 %1463
    %v1465 = vsel %vm1458, %v1444, -inf
    %1466 = vmax.xlane.f32.xlu0 %v1465
    %v1467 = vpop.xlane.xlu0 %1466
    %v1468 = vsel %vm1458, %v1445, -inf
    %1469 = vmax.xlane.f32.xlu0 %v1468
    %v1470 = vpop.xlane.xlu0 %1469
    %v1471 = vsel %vm1458, %v1446, -inf
    %1472 = vmax.xlane.f32.xlu0 %v1471
    %v1473 = vpop.xlane.xlu0 %1472
    %v1474 = vsel %vm1458, %v1447, -inf
    %1475 = vmax.xlane.f32.xlu0 %v1474
    %v1476 = vpop.xlane.xlu0 %1475
    %v1477 = vsel %vm1458, %v1448, -inf
    %1478 = vmax.xlane.f32.xlu0 %v1477
    %v1479 = vpop.xlane.xlu0 %1478
    %v1480 = vsel %vm1458, %v1449, -inf
    %1481 = vmax.xlane.f32.xlu0 %v1480
    %v1482 = vpop.xlane.xlu0 %1481
    %v1483 = vsel %vm1458, %v1450, -inf
    %1484 = vmax.xlane.f32.xlu0 %v1483
    %v1485 = vpop.xlane.xlu0 %1484
    %v1486 = vsel %vm1458, %v1451, -inf
    %1487 = vmax.xlane.f32.xlu0 %v1486
    %v1488 = vpop.xlane.xlu0 %1487
    %v1489 = vsel %vm1458, %v1452, -inf
    %1490 = vmax.xlane.f32.xlu0 %v1489
    %v1491 = vpop.xlane.xlu0 %1490
    %v1492 = vsel %vm1458, %v1453, -inf
    %1493 = vmax.xlane.f32.xlu0 %v1492
    %v1494 = vpop.xlane.xlu0 %1493
    %v1495 = vsel %vm1458, %v1454, -inf
    %1496 = vmax.xlane.f32.xlu0 %v1495
    %v1497 = vpop.xlane.xlu0 %1496
    %v1498 = vsel %vm1458, %v1455, -inf
    %1499 = vmax.xlane.f32.xlu0 %v1498
    %v1500 = vpop.xlane.xlu0 %1499
    %v1501 = vsel %vm1458, %v1456, -inf
    %1502 = vmax.xlane.f32.xlu0 %v1501
    %v1503 = vpop.xlane.xlu0 %1502
    %v1504 = vsel %vm1458, %v1457, -inf
    %1505 = vmax.xlane.f32.xlu0 %v1504
    %v1506 = vpop.xlane.xlu0 %1505
    %v1507 = vsub.f32 %v1442, %v1461
    %v1508 = vsub.f32 %v1443, %v1464
    %v1509 = vsub.f32 %v1444, %v1467
    %v1510 = vsub.f32 %v1445, %v1470
    %v1511 = vsub.f32 %v1446, %v1473
    %v1512 = vsub.f32 %v1447, %v1476
    %v1513 = vsub.f32 %v1448, %v1479
    %v1514 = vsub.f32 %v1449, %v1482
    %v1515 = vsub.f32 %v1450, %v1485
    %v1516 = vsub.f32 %v1451, %v1488
    %v1517 = vsub.f32 %v1452, %v1491
    %v1518 = vsub.f32 %v1453, %v1494
    %v1519 = vsub.f32 %v1454, %v1497
    %v1520 = vsub.f32 %v1455, %v1500
    %v1521 = vsub.f32 %v1456, %v1503
    %v1522 = vsub.f32 %v1457, %v1506
    %v1523 = vmul.f32 %v1507, 1.442695
    %v1524 = vpow.pop %v1523
    %v1525 = vmul.f32 %v1508, 1.442695
    %v1526 = vpow.pop %v1525
    %v1527 = vmul.f32 %v1509, 1.442695
    %v1528 = vpow.pop %v1527
    %v1529 = vmul.f32 %v1510, 1.442695
    %v1530 = vpow.pop %v1529
    %v1531 = vmul.f32 %v1511, 1.442695
    %v1532 = vpow.pop %v1531
    %v1533 = vmul.f32 %v1512, 1.442695
    %v1534 = vpow.pop %v1533
    %v1535 = vmul.f32 %v1513, 1.442695
    %v1536 = vpow.pop %v1535
    %v1537 = vmul.f32 %v1514, 1.442695
    %v1538 = vpow.pop %v1537
    %v1539 = vmul.f32 %v1515, 1.442695
    %v1540 = vpow.pop %v1539
    %v1541 = vmul.f32 %v1516, 1.442695
    %v1542 = vpow.pop %v1541
    %v1543 = vmul.f32 %v1517, 1.442695
    %v1544 = vpow.pop %v1543
    %v1545 = vmul.f32 %v1518, 1.442695
    %v1546 = vpow.pop %v1545
    %v1547 = vmul.f32 %v1519, 1.442695
    %v1548 = vpow.pop %v1547
    %v1549 = vmul.f32 %v1520, 1.442695
    %v1550 = vpow.pop %v1549
    %v1551 = vmul.f32 %v1521, 1.442695
    %v1552 = vpow.pop %v1551
    %v1553 = vmul.f32 %v1522, 1.442695
    %v1554 = vpow.pop %v1553
    %v1555 = vsel %vm1458, %v1524, 0.0
    %1556 = vadd.xlane.f32.xlu0 %v1555
    %v1557 = vpop.xlane.xlu0 %1556
    %v1558 = vsel %vm1458, %v1526, 0.0
    %1559 = vadd.xlane.f32.xlu0 %v1558
    %v1560 = vpop.xlane.xlu0 %1559
    %v1561 = vsel %vm1458, %v1528, 0.0
    %1562 = vadd.xlane.f32.xlu0 %v1561
    %v1563 = vpop.xlane.xlu0 %1562
    %v1564 = vsel %vm1458, %v1530, 0.0
    %1565 = vadd.xlane.f32.xlu0 %v1564
    %v1566 = vpop.xlane.xlu0 %1565
    %v1567 = vsel %vm1458, %v1532, 0.0
    %1568 = vadd.xlane.f32.xlu0 %v1567
    %v1569 = vpop.xlane.xlu0 %1568
    %v1570 = vsel %vm1458, %v1534, 0.0
    %1571 = vadd.xlane.f32.xlu0 %v1570
    %v1572 = vpop.xlane.xlu0 %1571
    %v1573 = vsel %vm1458, %v1536, 0.0
    %1574 = vadd.xlane.f32.xlu0 %v1573
    %v1575 = vpop.xlane.xlu0 %1574
    %v1576 = vsel %vm1458, %v1538, 0.0
    %1577 = vadd.xlane.f32.xlu0 %v1576
    %v1578 = vpop.xlane.xlu0 %1577
    %v1579 = vsel %vm1458, %v1540, 0.0
    %1580 = vadd.xlane.f32.xlu0 %v1579
    %v1581 = vpop.xlane.xlu0 %1580
    %v1582 = vsel %vm1458, %v1542, 0.0
    %1583 = vadd.xlane.f32.xlu0 %v1582
    %v1584 = vpop.xlane.xlu0 %1583
    %v1585 = vsel %vm1458, %v1544, 0.0
    %1586 = vadd.xlane.f32.xlu0 %v1585
    %v1587 = vpop.xlane.xlu0 %1586
    %v1588 = vsel %vm1458, %v1546, 0.0
    %1589 = vadd.xlane.f32.xlu0 %v1588
    %v1590 = vpop.xlane.xlu0 %1589
    %v1591 = vsel %vm1458, %v1548, 0.0
    %1592 = vadd.xlane.f32.xlu0 %v1591
    %v1593 = vpop.xlane.xlu0 %1592
    %v1594 = vsel %vm1458, %v1550, 0.0
    %1595 = vadd.xlane.f32.xlu0 %v1594
    %v1596 = vpop.xlane.xlu0 %1595
    %v1597 = vsel %vm1458, %v1552, 0.0
    %1598 = vadd.xlane.f32.xlu0 %v1597
    %v1599 = vpop.xlane.xlu0 %1598
    %v1600 = vsel %vm1458, %v1554, 0.0
    %1601 = vadd.xlane.f32.xlu0 %v1600
    %v1602 = vpop.xlane.xlu0 %1601
    %v1603 = vrcp.pop %v1557
    %v1604 = vrcp.pop %v1560
    %v1605 = vrcp.pop %v1563
    %v1606 = vrcp.pop %v1566
    %v1607 = vrcp.pop %v1569
    %v1608 = vrcp.pop %v1572
    %v1609 = vrcp.pop %v1575
    %v1610 = vrcp.pop %v1578
    %v1611 = vrcp.pop %v1581
    %v1612 = vrcp.pop %v1584
    %v1613 = vrcp.pop %v1587
    %v1614 = vrcp.pop %v1590
    %v1615 = vrcp.pop %v1593
    %v1616 = vrcp.pop %v1596
    %v1617 = vrcp.pop %v1599
    %v1618 = vrcp.pop %v1602
    %v1619 = vmul.f32 %v1524, %v1603
    %v1620 = vmul.f32 %v1526, %v1604
    %v1621 = vmul.f32 %v1528, %v1605
    %v1622 = vmul.f32 %v1530, %v1606
    %v1623 = vmul.f32 %v1532, %v1607
    %v1624 = vmul.f32 %v1534, %v1608
    %v1625 = vmul.f32 %v1536, %v1609
    %v1626 = vmul.f32 %v1538, %v1610
    %v1627 = vmul.f32 %v1540, %v1611
    %v1628 = vmul.f32 %v1542, %v1612
    %v1629 = vmul.f32 %v1544, %v1613
    %v1630 = vmul.f32 %v1546, %v1614
    %v1631 = vmul.f32 %v1548, %v1615
    %v1632 = vmul.f32 %v1550, %v1616
    %v1633 = vmul.f32 %v1552, %v1617
    %v1634 = vmul.f32 %v1554, %v1618
    %1635 = vst.msk [vmem:[#allocation14] sm:$0xff] %vm1458, %v1619
    %1636 = vst.msk [vmem:[#allocation14 + $0x8] sm:$0xff] %vm1458, %v1620
    %1637 = vst.msk [vmem:[#allocation14 + $0x10] sm:$0xff] %vm1458, %v1621
    %1638 = vst.msk [vmem:[#allocation14 + $0x18] sm:$0xff] %vm1458, %v1622
    %1639 = vst.msk [vmem:[#allocation14 + $0x20] sm:$0xff] %vm1458, %v1623
    %1640 = vst.msk [vmem:[#allocation14 + $0x28] sm:$0xff] %vm1458, %v1624
    %1641 = vst.msk [vmem:[#allocation14 + $0x30] sm:$0xff] %vm1458, %v1625
    %1642 = vst.msk [vmem:[#allocation14 + $0x38] sm:$0xff] %vm1458, %v1626
    %1643 = vst.msk [vmem:[#allocation14 + $0x40] sm:$0xff] %vm1458, %v1627
    %1644 = vst.msk [vmem:[#allocation14 + $0x48] sm:$0xff] %vm1458, %v1628
    %1645 = vst.msk [vmem:[#allocation14 + $0x50] sm:$0xff] %vm1458, %v1629
    %1646 = vst.msk [vmem:[#allocation14 + $0x58] sm:$0xff] %vm1458, %v1630
    %1647 = vst.msk [vmem:[#allocation14 + $0x60] sm:$0xff] %vm1458, %v1631
    %1648 = vst.msk [vmem:[#allocation14 + $0x68] sm:$0xff] %vm1458, %v1632
    %1649 = vst.msk [vmem:[#allocation14 + $0x70] sm:$0xff] %vm1458, %v1633
    %1650 = vst.msk [vmem:[#allocation14 + $0x78] sm:$0xff] %vm1458, %v1634
    %v1651 = vpack.c.bf16 %v1620, %v1619
    %v1652 = vpack.c.bf16 %v1622, %v1621
    %v1653 = vpack.c.bf16 %v1624, %v1623
    %v1654 = vpack.c.bf16 %v1626, %v1625
    %v1655 = vpack.c.bf16 %v1628, %v1627
    %v1656 = vpack.c.bf16 %v1630, %v1629
    %v1657 = vpack.c.bf16 %v1632, %v1631
    %v1658 = vpack.c.bf16 %v1634, %v1633
    %v1660 = vsel %vm1458, %v1651, 0
    %1662 = vmatprep.subr.bf16.mxu0 0
    %1663 = vmatpush1.bf16.msra.mxu0 %v1029
    %1664 = vmatprep.subr.bf16.mxu0 0
    %1665 = vmatpush1.bf16.msra.mxu0 0
    %1666 = vmatprep.subr.bf16.mxu0 0
    %1667 = vmatpush1.bf16.msra.mxu0 0
    %1668 = vmatprep.subr.bf16.mxu0 0
    %1669 = vmatpush1.bf16.msra.mxu0 0
    %1670 = vmatprep.subr.bf16.mxu0 0
    %1671 = vmatpush1.bf16.msra.mxu0 0
    %1672 = vmatprep.subr.bf16.mxu0 0
    %1673 = vmatpush1.bf16.msra.mxu0 0
    %1674 = vmatprep.subr.bf16.mxu0 0
    %1675 = vmatpush1.bf16.msra.mxu0 0
    %1676 = vmatprep.subr.bf16.mxu0 0
    %1677 = vmatpush1.bf16.msra.mxu0 0
    %1678 = vmatprep.subr.bf16.mxu0 0
    %1679 = vmatpush1.bf16.msra.mxu0 0
    %1680 = vmatprep.subr.bf16.mxu0 0
    %1681 = vmatpush1.bf16.msra.mxu0 0
    %1682 = vmatprep.subr.bf16.mxu0 0
    %1683 = vmatpush1.bf16.msra.mxu0 0
    %1684 = vmatprep.subr.bf16.mxu0 0
    %1685 = vmatpush1.bf16.msra.mxu0 0
    %1686 = vmatprep.subr.bf16.mxu0 0
    %1687 = vmatpush1.bf16.msra.mxu0 0
    %1688 = vmatprep.subr.bf16.mxu0 0
    %1689 = vmatpush1.bf16.msra.mxu0 0
    %1690 = vmatprep.subr.bf16.mxu0 0
    %1691 = vmatpush1.bf16.msra.mxu0 0
    %1692 = vmatprep.subr.bf16.mxu0 0
    %1693 = vmatpush1.bf16.msra.mxu0 0
    %1694 = vmatprep.mubr.bf16.mxu0 0
    %1695 = vmatmul.mubr.bf16.gmra.mrb[0].mxu0 %v1660
    %v1696 = vpop.f32.mrb[0].mxu0
    %v1697 = vadd.f32 0.0, %v1696
    %v1698 = vpop.f32.mrb[0].mxu0
    %v1699 = vpop.f32.mrb[0].mxu0
    %v1700 = vadd.f32 0.0, %v1699
    %v1701 = vpop.f32.mrb[0].mxu0
    %1702 = vdwg.mxu0
    %v1704 = vsel %vm1458, %v1652, 0
    %1706 = vmatprep.subr.bf16.mxu0 0
    %1707 = vmatpush1.bf16.msra.mxu0 %v1030
    %1708 = vmatprep.subr.bf16.mxu0 0
    %1709 = vmatpush1.bf16.msra.mxu0 0
    %1710 = vmatprep.subr.bf16.mxu0 0
    %1711 = vmatpush1.bf16.msra.mxu0 0
    %1712 = vmatprep.subr.bf16.mxu0 0
    %1713 = vmatpush1.bf16.msra.mxu0 0
    %1714 = vmatprep.subr.bf16.mxu0 0
    %1715 = vmatpush1.bf16.msra.mxu0 0
    %1716 = vmatprep.subr.bf16.mxu0 0
    %1717 = vmatpush1.bf16.msra.mxu0 0
    %1718 = vmatprep.subr.bf16.mxu0 0
    %1719 = vmatpush1.bf16.msra.mxu0 0
    %1720 = vmatprep.subr.bf16.mxu0 0
    %1721 = vmatpush1.bf16.msra.mxu0 0
    %1722 = vmatprep.subr.bf16.mxu0 0
    %1723 = vmatpush1.bf16.msra.mxu0 0
    %1724 = vmatprep.subr.bf16.mxu0 0
    %1725 = vmatpush1.bf16.msra.mxu0 0
    %1726 = vmatprep.subr.bf16.mxu0 0
    %1727 = vmatpush1.bf16.msra.mxu0 0
    %1728 = vmatprep.subr.bf16.mxu0 0
    %1729 = vmatpush1.bf16.msra.mxu0 0
    %1730 = vmatprep.subr.bf16.mxu0 0
    %1731 = vmatpush1.bf16.msra.mxu0 0
    %1732 = vmatprep.subr.bf16.mxu0 0
    %1733 = vmatpush1.bf16.msra.mxu0 0
    %1734 = vmatprep.subr.bf16.mxu0 0
    %1735 = vmatpush1.bf16.msra.mxu0 0
    %1736 = vmatprep.subr.bf16.mxu0 0
    %1737 = vmatpush1.bf16.msra.mxu0 0
    %1738 = vmatprep.mubr.bf16.mxu0 0
    %1739 = vmatmul.mubr.bf16.gmra.mrb[0].mxu0 %v1704
    %v1740 = vpop.f32.mrb[0].mxu0
    %v1741 = vadd.f32 0.0, %v1740
    %v1742 = vpop.f32.mrb[0].mxu0
    %v1743 = vpop.f32.mrb[0].mxu0
    %v1744 = vadd.f32 0.0, %v1743
    %v1745 = vpop.f32.mrb[0].mxu0
    %1746 = vdwg.mxu0
    %v1748 = vsel %vm1458, %v1653, 0
    %1750 = vmatprep.subr.bf16.mxu0 0
    %1751 = vmatpush1.bf16.msra.mxu0 %v1031
    %1752 = vmatprep.subr.bf16.mxu0 0
    %1753 = vmatpush1.bf16.msra.mxu0 0
    %1754 = vmatprep.subr.bf16.mxu0 0
    %1755 = vmatpush1.bf16.msra.mxu0 0
    %1756 = vmatprep.subr.bf16.mxu0 0
    %1757 = vmatpush1.bf16.msra.mxu0 0
    %1758 = vmatprep.subr.bf16.mxu0 0
    %1759 = vmatpush1.bf16.msra.mxu0 0
    %1760 = vmatprep.subr.bf16.mxu0 0
    %1761 = vmatpush1.bf16.msra.mxu0 0
    %1762 = vmatprep.subr.bf16.mxu0 0
    %1763 = vmatpush1.bf16.msra.mxu0 0
    %1764 = vmatprep.subr.bf16.mxu0 0
    %1765 = vmatpush1.bf16.msra.mxu0 0
    %1766 = vmatprep.subr.bf16.mxu0 0
    %1767 = vmatpush1.bf16.msra.mxu0 0
    %1768 = vmatprep.subr.bf16.mxu0 0
    %1769 = vmatpush1.bf16.msra.mxu0 0
    %1770 = vmatprep.subr.bf16.mxu0 0
    %1771 = vmatpush1.bf16.msra.mxu0 0
    %1772 = vmatprep.subr.bf16.mxu0 0
    %1773 = vmatpush1.bf16.msra.mxu0 0
    %1774 = vmatprep.subr.bf16.mxu0 0
    %1775 = vmatpush1.bf16.msra.mxu0 0
    %1776 = vmatprep.subr.bf16.mxu0 0
    %1777 = vmatpush1.bf16.msra.mxu0 0
    %1778 = vmatprep.subr.bf16.mxu0 0
    %1779 = vmatpush1.bf16.msra.mxu0 0
    %1780 = vmatprep.subr.bf16.mxu0 0
    %1781 = vmatpush1.bf16.msra.mxu0 0
    %1782 = vmatprep.mubr.bf16.mxu0 0
    %1783 = vmatmul.mubr.bf16.gmra.mrb[0].mxu0 %v1748
    %v1784 = vpop.f32.mrb[0].mxu0
    %v1785 = vadd.f32 0.0, %v1784
    %v1786 = vpop.f32.mrb[0].mxu0
    %v1787 = vpop.f32.mrb[0].mxu0
    %v1788 = vadd.f32 0.0, %v1787
    %v1789 = vpop.f32.mrb[0].mxu0
    %1790 = vdwg.mxu0
    %v1792 = vsel %vm1458, %v1654, 0
    %1794 = vmatprep.subr.bf16.mxu0 0
    %1795 = vmatpush1.bf16.msra.mxu0 %v1032
    %1796 = vmatprep.subr.bf16.mxu0 0
    %1797 = vmatpush1.bf16.msra.mxu0 0
    %1798 = vmatprep.subr.bf16.mxu0 0
    %1799 = vmatpush1.bf16.msra.mxu0 0
    %1800 = vmatprep.subr.bf16.mxu0 0
    %1801 = vmatpush1.bf16.msra.mxu0 0
    %1802 = vmatprep.subr.bf16.mxu0 0
    %1803 = vmatpush1.bf16.msra.mxu0 0
    %1804 = vmatprep.subr.bf16.mxu0 0
    %1805 = vmatpush1.bf16.msra.mxu0 0
    %1806 = vmatprep.subr.bf16.mxu0 0
    %1807 = vmatpush1.bf16.msra.mxu0 0
    %1808 = vmatprep.subr.bf16.mxu0 0
    %1809 = vmatpush1.bf16.msra.mxu0 0
    %1810 = vmatprep.subr.bf16.mxu0 0
    %1811 = vmatpush1.bf16.msra.mxu0 0
    %1812 = vmatprep.subr.bf16.mxu0 0
    %1813 = vmatpush1.bf16.msra.mxu0 0
    %1814 = vmatprep.subr.bf16.mxu0 0
    %1815 = vmatpush1.bf16.msra.mxu0 0
    %1816 = vmatprep.subr.bf16.mxu0 0
    %1817 = vmatpush1.bf16.msra.mxu0 0
    %1818 = vmatprep.subr.bf16.mxu0 0
    %1819 = vmatpush1.bf16.msra.mxu0 0
    %1820 = vmatprep.subr.bf16.mxu0 0
    %1821 = vmatpush1.bf16.msra.mxu0 0
    %1822 = vmatprep.subr.bf16.mxu0 0
    %1823 = vmatpush1.bf16.msra.mxu0 0
    %1824 = vmatprep.subr.bf16.mxu0 0
    %1825 = vmatpush1.bf16.msra.mxu0 0
    %1826 = vmatprep.mubr.bf16.mxu0 0
    %1827 = vmatmul.mubr.bf16.gmra.mrb[0].mxu0 %v1792
    %v1828 = vpop.f32.mrb[0].mxu0
    %v1829 = vadd.f32 0.0, %v1828
    %v1830 = vpop.f32.mrb[0].mxu0
    %v1831 = vpop.f32.mrb[0].mxu0
    %v1832 = vadd.f32 0.0, %v1831
    %v1833 = vpop.f32.mrb[0].mxu0
    %1834 = vdwg.mxu0
    %v1836 = vsel %vm1458, %v1655, 0
    %1838 = vmatprep.subr.bf16.mxu0 0
    %1839 = vmatpush1.bf16.msra.mxu0 %v1033
    %1840 = vmatprep.subr.bf16.mxu0 0
    %1841 = vmatpush1.bf16.msra.mxu0 0
    %1842 = vmatprep.subr.bf16.mxu0 0
    %1843 = vmatpush1.bf16.msra.mxu0 0
    %1844 = vmatprep.subr.bf16.mxu0 0
    %1845 = vmatpush1.bf16.msra.mxu0 0
    %1846 = vmatprep.subr.bf16.mxu0 0
    %1847 = vmatpush1.bf16.msra.mxu0 0
    %1848 = vmatprep.subr.bf16.mxu0 0
    %1849 = vmatpush1.bf16.msra.mxu0 0
    %1850 = vmatprep.subr.bf16.mxu0 0
    %1851 = vmatpush1.bf16.msra.mxu0 0
    %1852 = vmatprep.subr.bf16.mxu0 0
    %1853 = vmatpush1.bf16.msra.mxu0 0
    %1854 = vmatprep.subr.bf16.mxu0 0
    %1855 = vmatpush1.bf16.msra.mxu0 0
    %1856 = vmatprep.subr.bf16.mxu0 0
    %1857 = vmatpush1.bf16.msra.mxu0 0
    %1858 = vmatprep.subr.bf16.mxu0 0
    %1859 = vmatpush1.bf16.msra.mxu0 0
    %1860 = vmatprep.subr.bf16.mxu0 0
    %1861 = vmatpush1.bf16.msra.mxu0 0
    %1862 = vmatprep.subr.bf16.mxu0 0
    %1863 = vmatpush1.bf16.msra.mxu0 0
    %1864 = vmatprep.subr.bf16.mxu0 0
    %1865 = vmatpush1.bf16.msra.mxu0 0
    %1866 = vmatprep.subr.bf16.mxu0 0
    %1867 = vmatpush1.bf16.msra.mxu0 0
    %1868 = vmatprep.subr.bf16.mxu0 0
    %1869 = vmatpush1.bf16.msra.mxu0 0
    %1870 = vmatprep.mubr.bf16.mxu0 0
    %1871 = vmatmul.mubr.bf16.gmra.mrb[0].mxu0 %v1836
    %v1872 = vpop.f32.mrb[0].mxu0
    %v1873 = vadd.f32 0.0, %v1872
    %v1874 = vpop.f32.mrb[0].mxu0
    %v1875 = vpop.f32.mrb[0].mxu0
    %v1876 = vadd.f32 0.0, %v1875
    %v1877 = vpop.f32.mrb[0].mxu0
    %1878 = vdwg.mxu0
    %v1880 = vsel %vm1458, %v1656, 0
    %1882 = vmatprep.subr.bf16.mxu0 0
    %1883 = vmatpush1.bf16.msra.mxu0 %v1034
    %1884 = vmatprep.subr.bf16.mxu0 0
    %1885 = vmatpush1.bf16.msra.mxu0 0
    %1886 = vmatprep.subr.bf16.mxu0 0
    %1887 = vmatpush1.bf16.msra.mxu0 0
    %1888 = vmatprep.subr.bf16.mxu0 0
    %1889 = vmatpush1.bf16.msra.mxu0 0
    %1890 = vmatprep.subr.bf16.mxu0 0
    %1891 = vmatpush1.bf16.msra.mxu0 0
    %1892 = vmatprep.subr.bf16.mxu0 0
    %1893 = vmatpush1.bf16.msra.mxu0 0
    %1894 = vmatprep.subr.bf16.mxu0 0
    %1895 = vmatpush1.bf16.msra.mxu0 0
    %1896 = vmatprep.subr.bf16.mxu0 0
    %1897 = vmatpush1.bf16.msra.mxu0 0
    %1898 = vmatprep.subr.bf16.mxu0 0
    %1899 = vmatpush1.bf16.msra.mxu0 0
    %1900 = vmatprep.subr.bf16.mxu0 0
    %1901 = vmatpush1.bf16.msra.mxu0 0
    %1902 = vmatprep.subr.bf16.mxu0 0
    %1903 = vmatpush1.bf16.msra.mxu0 0
    %1904 = vmatprep.subr.bf16.mxu0 0
    %1905 = vmatpush1.bf16.msra.mxu0 0
    %1906 = vmatprep.subr.bf16.mxu0 0
    %1907 = vmatpush1.bf16.msra.mxu0 0
    %1908 = vmatprep.subr.bf16.mxu0 0
    %1909 = vmatpush1.bf16.msra.mxu0 0
    %1910 = vmatprep.subr.bf16.mxu0 0
    %1911 = vmatpush1.bf16.msra.mxu0 0
    %1912 = vmatprep.subr.bf16.mxu0 0
    %1913 = vmatpush1.bf16.msra.mxu0 0
    %1914 = vmatprep.mubr.bf16.mxu0 0
    %1915 = vmatmul.mubr.bf16.gmra.mrb[0].mxu0 %v1880
    %v1916 = vpop.f32.mrb[0].mxu0
    %v1917 = vadd.f32 0.0, %v1916
    %v1918 = vpop.f32.mrb[0].mxu0
    %v1919 = vpop.f32.mrb[0].mxu0
    %v1920 = vadd.f32 0.0, %v1919
    %v1921 = vpop.f32.mrb[0].mxu0
    %1922 = vdwg.mxu0
    %v1924 = vsel %vm1458, %v1657, 0
    %1926 = vmatprep.subr.bf16.mxu0 0
    %1927 = vmatpush1.bf16.msra.mxu0 %v1035
    %1928 = vmatprep.subr.bf16.mxu0 0
    %1929 = vmatpush1.bf16.msra.mxu0 0
    %1930 = vmatprep.subr.bf16.mxu0 0
    %1931 = vmatpush1.bf16.msra.mxu0 0
    %1932 = vmatprep.subr.bf16.mxu0 0
    %1933 = vmatpush1.bf16.msra.mxu0 0
    %1934 = vmatprep.subr.bf16.mxu0 0
    %1935 = vmatpush1.bf16.msra.mxu0 0
    %1936 = vmatprep.subr.bf16.mxu0 0
    %1937 = vmatpush1.bf16.msra.mxu0 0
    %1938 = vmatprep.subr.bf16.mxu0 0
    %1939 = vmatpush1.bf16.msra.mxu0 0
    %1940 = vmatprep.subr.bf16.mxu0 0
    %1941 = vmatpush1.bf16.msra.mxu0 0
    %1942 = vmatprep.subr.bf16.mxu0 0
    %1943 = vmatpush1.bf16.msra.mxu0 0
    %1944 = vmatprep.subr.bf16.mxu0 0
    %1945 = vmatpush1.bf16.msra.mxu0 0
    %1946 = vmatprep.subr.bf16.mxu0 0
    %1947 = vmatpush1.bf16.msra.mxu0 0
    %1948 = vmatprep.subr.bf16.mxu0 0
    %1949 = vmatpush1.bf16.msra.mxu0 0
    %1950 = vmatprep.subr.bf16.mxu0 0
    %1951 = vmatpush1.bf16.msra.mxu0 0
    %1952 = vmatprep.subr.bf16.mxu0 0
    %1953 = vmatpush1.bf16.msra.mxu0 0
    %1954 = vmatprep.subr.bf16.mxu0 0
    %1955 = vmatpush1.bf16.msra.mxu0 0
    %1956 = vmatprep.subr.bf16.mxu0 0
    %1957 = vmatpush1.bf16.msra.mxu0 0
    %1958 = vmatprep.mubr.bf16.mxu0 0
    %1959 = vmatmul.mubr.bf16.gmra.mrb[0].mxu0 %v1924
    %v1960 = vpop.f32.mrb[0].mxu0
    %v1961 = vadd.f32 0.0, %v1960
    %v1962 = vpop.f32.mrb[0].mxu0
    %v1963 = vpop.f32.mrb[0].mxu0
    %v1964 = vadd.f32 0.0, %v1963
    %v1965 = vpop.f32.mrb[0].mxu0
    %1966 = vdwg.mxu0
    %v1968 = vsel %vm1458, %v1658, 0
    %1970 = vmatprep.subr.bf16.mxu0 0
    %1971 = vmatpush1.bf16.msra.mxu0 %v1036
    %1972 = vmatprep.subr.bf16.mxu0 0
    %1973 = vmatpush1.bf16.msra.mxu0 0
    %1974 = vmatprep.subr.bf16.mxu0 0
    %1975 = vmatpush1.bf16.msra.mxu0 0
    %1976 = vmatprep.subr.bf16.mxu0 0
    %1977 = vmatpush1.bf16.msra.mxu0 0
    %1978 = vmatprep.subr.bf16.mxu0 0
    %1979 = vmatpush1.bf16.msra.mxu0 0
    %1980 = vmatprep.subr.bf16.mxu0 0
    %1981 = vmatpush1.bf16.msra.mxu0 0
    %1982 = vmatprep.subr.bf16.mxu0 0
    %1983 = vmatpush1.bf16.msra.mxu0 0
    %1984 = vmatprep.subr.bf16.mxu0 0
    %1985 = vmatpush1.bf16.msra.mxu0 0
    %1986 = vmatprep.subr.bf16.mxu0 0
    %1987 = vmatpush1.bf16.msra.mxu0 0
    %1988 = vmatprep.subr.bf16.mxu0 0
    %1989 = vmatpush1.bf16.msra.mxu0 0
    %1990 = vmatprep.subr.bf16.mxu0 0
    %1991 = vmatpush1.bf16.msra.mxu0 0
    %1992 = vmatprep.subr.bf16.mxu0 0
    %1993 = vmatpush1.bf16.msra.mxu0 0
    %1994 = vmatprep.subr.bf16.mxu0 0
    %1995 = vmatpush1.bf16.msra.mxu0 0
    %1996 = vmatprep.subr.bf16.mxu0 0
    %1997 = vmatpush1.bf16.msra.mxu0 0
    %1998 = vmatprep.subr.bf16.mxu0 0
    %1999 = vmatpush1.bf16.msra.mxu0 0
    %2000 = vmatprep.subr.bf16.mxu0 0
    %2001 = vmatpush1.bf16.msra.mxu0 0
    %2002 = vmatprep.mubr.bf16.mxu0 0
    %2003 = vmatmul.mubr.bf16.gmra.mrb[0].mxu0 %v1968
    %v2004 = vpop.f32.mrb[0].mxu0
    %v2005 = vadd.f32 0.0, %v2004
    %v2006 = vpop.f32.mrb[0].mxu0
    %v2007 = vpop.f32.mrb[0].mxu0
    %v2008 = vadd.f32 0.0, %v2007
    %v2009 = vpop.f32.mrb[0].mxu0
    %2010 = vdwg.mxu0
    %2015 = vrot.lane.b32.xlu0 %v1785, 64
    %v2016 = vpop.permute.xlu0 %2015
    %2017 = vrot.lane.b32.xlu0 %v1788, 64
    %v2018 = vpop.permute.xlu0 %2017
    %2019 = vrot.lane.b32.xlu0 %v1829, 64
    %v2020 = vpop.permute.xlu0 %2019
    %2021 = vrot.lane.b32.xlu0 %v1832, 64
    %v2022 = vpop.permute.xlu0 %2021
    %2031 = vrot.lane.b32.xlu0 %v1961, 64
    %v2032 = vpop.permute.xlu0 %2031
    %2033 = vrot.lane.b32.xlu0 %v1964, 64
    %v2034 = vpop.permute.xlu0 %2033
    %2035 = vrot.lane.b32.xlu0 %v2005, 64
    %v2036 = vpop.permute.xlu0 %2035
    %2037 = vrot.lane.b32.xlu0 %v2008, 64
    %v2038 = vpop.permute.xlu0 %2037
    %v2043 = vsel %vm1037, %v1697, %v2016
    %v2044 = vsel %vm1037, %v1700, %v2018
    %v2045 = vsel %vm1037, %v1741, %v2020
    %v2046 = vsel %vm1037, %v1744, %v2022
    %v2047 = vsel %vm1037, %v1873, %v2032
    %v2048 = vsel %vm1037, %v1876, %v2034
    %v2049 = vsel %vm1037, %v1917, %v2036
    %v2050 = vsel %vm1037, %v1920, %v2038
    %v2051 = vpack.c.bf16 %v2044, %v2043
    %v2052 = vpack.c.bf16 %v2048, %v2047
    %v2053 = vpack.c.bf16 %v2046, %v2045
    %v2054 = vpack.c.bf16 %v2050, %v2049
    %v2055 = vld [vmem:[#allocation8] sm:$0xff]
    %v2056 = vld [vmem:[#allocation8 + $0x8] sm:$0xff]
    %v2057 = vld [vmem:[#allocation8 + $0x10] sm:$0xff]
    %v2058 = vld [vmem:[#allocation8 + $0x18] sm:$0xff]
    %v2059 = vld [vmem:[#allocation8 + $0x20] sm:$0xff]
    %v2060 = vld [vmem:[#allocation8 + $0x28] sm:$0xff]
    %v2061 = vld [vmem:[#allocation8 + $0x30] sm:$0xff]
    %v2062 = vld [vmem:[#allocation8 + $0x38] sm:$0xff]
    %v2063 = vld [vmem:[#allocation8 + $0x40] sm:$0xff]
    %v2064 = vld [vmem:[#allocation8 + $0x48] sm:$0xff]
    %v2065 = vld [vmem:[#allocation8 + $0x50] sm:$0xff]
    %v2066 = vld [vmem:[#allocation8 + $0x58] sm:$0xff]
    %v2067 = vld [vmem:[#allocation8 + $0x60] sm:$0xff]
    %v2068 = vld [vmem:[#allocation8 + $0x68] sm:$0xff]
    %v2069 = vld [vmem:[#allocation8 + $0x70] sm:$0xff]
    %v2070 = vld [vmem:[#allocation8 + $0x78] sm:$0xff]
    %v2071 = vld [vmem:[#allocation8 + $0x80] sm:$0xff]
    %v2072 = vld [vmem:[#allocation8 + $0x88] sm:$0xff]
    %v2073 = vld [vmem:[#allocation8 + $0x90] sm:$0xff]
    %v2074 = vld [vmem:[#allocation8 + $0x98] sm:$0xff]
    %v2075 = vld [vmem:[#allocation8 + $0xa0] sm:$0xff]
    %v2076 = vld [vmem:[#allocation8 + $0xa8] sm:$0xff]
    %v2077 = vld [vmem:[#allocation8 + $0xb0] sm:$0xff]
    %v2078 = vld [vmem:[#allocation8 + $0xb8] sm:$0xff]
    %v2079 = vld [vmem:[#allocation8 + $0xc0] sm:$0xff]
    %v2080 = vld [vmem:[#allocation8 + $0xc8] sm:$0xff]
    %v2081 = vld [vmem:[#allocation8 + $0xd0] sm:$0xff]
    %v2082 = vld [vmem:[#allocation8 + $0xd8] sm:$0xff]
    %v2083 = vld [vmem:[#allocation8 + $0xe0] sm:$0xff]
    %v2084 = vld [vmem:[#allocation8 + $0xe8] sm:$0xff]
    %v2085 = vld [vmem:[#allocation8 + $0xf0] sm:$0xff]
    %v2086 = vld [vmem:[#allocation8 + $0xf8] sm:$0xff]
    %v2087 = vld [vmem:[%s5] sm:$0x3]
    %v2089 = vlaneseq
    %v2090 = vshrl.u32 %v2089, 7
    %v2091 = vsub.s32 0, %v2090
    %v2092 = vrot.slane %v2087, %v2091
    %v2093 = vlaneseq
    %v2094 = vshrl.u32 %v2093, 7
    %v2095 = vsub.s32 1, %v2094
    %v2096 = vrot.slane %v2087, %v2095
    %v2131 = vunpack.c.l.b16 %v2055
    %v2132 = vunpack.c.h.b16 %v2055
    %v2133 = vunpack.c.l.b16 %v2056
    %v2134 = vunpack.c.h.b16 %v2056
    %v2135 = vunpack.c.l.b16 %v2057
    %v2136 = vunpack.c.h.b16 %v2057
    %v2137 = vunpack.c.l.b16 %v2058
    %v2138 = vunpack.c.h.b16 %v2058
    %v2139 = vunpack.c.l.b16 %v2059
    %v2140 = vunpack.c.h.b16 %v2059
    %v2141 = vunpack.c.l.b16 %v2060
    %v2142 = vunpack.c.h.b16 %v2060
    %v2143 = vunpack.c.l.b16 %v2061
    %v2144 = vunpack.c.h.b16 %v2061
    %v2145 = vunpack.c.l.b16 %v2062
    %v2146 = vunpack.c.h.b16 %v2062
    %v2147 = vunpack.c.l.b16 %v2063
    %v2148 = vunpack.c.h.b16 %v2063
    %v2149 = vunpack.c.l.b16 %v2064
    %v2150 = vunpack.c.h.b16 %v2064
    %v2151 = vunpack.c.l.b16 %v2065
    %v2152 = vunpack.c.h.b16 %v2065
    %v2153 = vunpack.c.l.b16 %v2066
    %v2154 = vunpack.c.h.b16 %v2066
    %v2155 = vunpack.c.l.b16 %v2067
    %v2156 = vunpack.c.h.b16 %v2067
    %v2157 = vunpack.c.l.b16 %v2068
    %v2158 = vunpack.c.h.b16 %v2068
    %v2159 = vunpack.c.l.b16 %v2069
    %v2160 = vunpack.c.h.b16 %v2069
    %v2161 = vunpack.c.l.b16 %v2070
    %v2162 = vunpack.c.h.b16 %v2070
    %v2163 = vunpack.c.l.b16 %v2071
    %v2164 = vunpack.c.h.b16 %v2071
    %v2165 = vunpack.c.l.b16 %v2072
    %v2166 = vunpack.c.h.b16 %v2072
    %v2167 = vunpack.c.l.b16 %v2073
    %v2168 = vunpack.c.h.b16 %v2073
    %v2169 = vunpack.c.l.b16 %v2074
    %v2170 = vunpack.c.h.b16 %v2074
    %v2171 = vunpack.c.l.b16 %v2075
    %v2172 = vunpack.c.h.b16 %v2075
    %v2173 = vunpack.c.l.b16 %v2076
    %v2174 = vunpack.c.h.b16 %v2076
    %v2175 = vunpack.c.l.b16 %v2077
    %v2176 = vunpack.c.h.b16 %v2077
    %v2177 = vunpack.c.l.b16 %v2078
    %v2178 = vunpack.c.h.b16 %v2078
    %v2179 = vunpack.c.l.b16 %v2079
    %v2180 = vunpack.c.h.b16 %v2079
    %v2181 = vunpack.c.l.b16 %v2080
    %v2182 = vunpack.c.h.b16 %v2080
    %v2183 = vunpack.c.l.b16 %v2081
    %v2184 = vunpack.c.h.b16 %v2081
    %v2185 = vunpack.c.l.b16 %v2082
    %v2186 = vunpack.c.h.b16 %v2082
    %v2187 = vunpack.c.l.b16 %v2083
    %v2188 = vunpack.c.h.b16 %v2083
    %v2189 = vunpack.c.l.b16 %v2084
    %v2190 = vunpack.c.h.b16 %v2084
    %v2191 = vunpack.c.l.b16 %v2085
    %v2192 = vunpack.c.h.b16 %v2085
    %v2193 = vunpack.c.l.b16 %v2086
    %v2194 = vunpack.c.h.b16 %v2086
    %v2195 = vpack.c.b16 %v2133, %v2131
    %v2196 = vpack.c.b16 %v2134, %v2132
    %v2197 = vpack.c.b16 %v2137, %v2135
    %v2198 = vpack.c.b16 %v2138, %v2136
    %v2199 = vpack.c.b16 %v2141, %v2139
    %v2200 = vpack.c.b16 %v2142, %v2140
    %v2201 = vpack.c.b16 %v2145, %v2143
    %v2202 = vpack.c.b16 %v2146, %v2144
    %v2203 = vpack.c.b16 %v2149, %v2147
    %v2204 = vpack.c.b16 %v2150, %v2148
    %v2205 = vpack.c.b16 %v2153, %v2151
    %v2206 = vpack.c.b16 %v2154, %v2152
    %v2207 = vpack.c.b16 %v2157, %v2155
    %v2208 = vpack.c.b16 %v2158, %v2156
    %v2209 = vpack.c.b16 %v2161, %v2159
    %v2210 = vpack.c.b16 %v2162, %v2160
    %v2211 = vpack.c.b16 %v2165, %v2163
    %v2212 = vpack.c.b16 %v2166, %v2164
    %v2213 = vpack.c.b16 %v2169, %v2167
    %v2214 = vpack.c.b16 %v2170, %v2168
    %v2215 = vpack.c.b16 %v2173, %v2171
    %v2216 = vpack.c.b16 %v2174, %v2172
    %v2217 = vpack.c.b16 %v2177, %v2175
    %v2218 = vpack.c.b16 %v2178, %v2176
    %v2219 = vpack.c.b16 %v2181, %v2179
    %v2220 = vpack.c.b16 %v2182, %v2180
    %v2221 = vpack.c.b16 %v2185, %v2183
    %v2222 = vpack.c.b16 %v2186, %v2184
    %v2223 = vpack.c.b16 %v2189, %v2187
    %v2224 = vpack.c.b16 %v2190, %v2188
    %v2225 = vpack.c.b16 %v2193, %v2191
    %v2226 = vpack.c.b16 %v2194, %v2192
    %2259 = vmatprep.subr.bf16.mxu0 %v2196
    %2260 = vmatpush1.bf16.msra.mxu0 %v2195
    %2261 = vmatprep.subr.bf16.mxu0 %v2198
    %2262 = vmatpush1.bf16.msra.mxu0 %v2197
    %2263 = vmatprep.subr.bf16.mxu0 %v2200
    %2264 = vmatpush1.bf16.msra.mxu0 %v2199
    %2265 = vmatprep.subr.bf16.mxu0 %v2202
    %2266 = vmatpush1.bf16.msra.mxu0 %v2201
    %2267 = vmatprep.subr.bf16.mxu0 %v2204
    %2268 = vmatpush1.bf16.msra.mxu0 %v2203
    %2269 = vmatprep.subr.bf16.mxu0 %v2206
    %2270 = vmatpush1.bf16.msra.mxu0 %v2205
    %2271 = vmatprep.subr.bf16.mxu0 %v2208
    %2272 = vmatpush1.bf16.msra.mxu0 %v2207
    %2273 = vmatprep.subr.bf16.mxu0 %v2210
    %2274 = vmatpush1.bf16.msra.mxu0 %v2209
    %2275 = vmatprep.subr.bf16.mxu0 %v2212
    %2276 = vmatpush1.bf16.msra.mxu0 %v2211
    %2277 = vmatprep.subr.bf16.mxu0 %v2214
    %2278 = vmatpush1.bf16.msra.mxu0 %v2213
    %2279 = vmatprep.subr.bf16.mxu0 %v2216
    %2280 = vmatpush1.bf16.msra.mxu0 %v2215
    %2281 = vmatprep.subr.bf16.mxu0 %v2218
    %2282 = vmatpush1.bf16.msra.mxu0 %v2217
    %2283 = vmatprep.subr.bf16.mxu0 %v2220
    %2284 = vmatpush1.bf16.msra.mxu0 %v2219
    %2285 = vmatprep.subr.bf16.mxu0 %v2222
    %2286 = vmatpush1.bf16.msra.mxu0 %v2221
    %2287 = vmatprep.subr.bf16.mxu0 %v2224
    %2288 = vmatpush1.bf16.msra.mxu0 %v2223
    %2289 = vmatprep.subr.bf16.mxu0 %v2226
    %2290 = vmatpush1.bf16.msra.mxu0 %v2225
    %2291 = vmatprep.mubr.bf16.mxu0 %v2052
    %2292 = vmatmul.mubr.bf16.gmra.mrb[0].mxu0 %v2051
    %v2293 = vpop.f32.mrb[0].mxu0
    %v2294 = vadd.f32 %v2092, %v2293
    %v2295 = vpop.f32.mrb[0].mxu0
    %v2296 = vadd.f32 %v2096, %v2295
    %v2297 = vpop.f32.mrb[0].mxu0
    %v2298 = vadd.f32 %v2092, %v2297
    %v2299 = vpop.f32.mrb[0].mxu0
    %v2300 = vadd.f32 %v2096, %v2299
    %2301 = vmatprep.mubr.bf16.mxu0 %v2054
    %2302 = vmatmul.mubr.bf16.gmra.mrb[0].mxu0 %v2053
    %v2303 = vpop.f32.mrb[0].mxu0
    %v2304 = vadd.f32 %v2092, %v2303
    %v2305 = vpop.f32.mrb[0].mxu0
    %v2306 = vadd.f32 %v2096, %v2305
    %v2307 = vpop.f32.mrb[0].mxu0
    %v2308 = vadd.f32 %v2092, %v2307
    %v2309 = vpop.f32.mrb[0].mxu0
    %v2310 = vadd.f32 %v2096, %v2309
    %2311 = vdwg.mxu0
    %v2312 = vadd.f32 %v134, %v2294
    %v2313 = vadd.f32 %v135, %v2296
    %v2314 = vadd.f32 %v136, %v2298
    %v2315 = vadd.f32 %v137, %v2300
    %v2316 = vadd.f32 %v138, %v2304
    %v2317 = vadd.f32 %v139, %v2306
    %v2318 = vadd.f32 %v140, %v2308
    %v2319 = vadd.f32 %v141, %v2310
    %v2320 = vld [vmem:[%s6] sm:$0x3]
    %v2321 = vld [vmem:[%s7] sm:$0x3]
    %v2322 = vadd.f32 %v2312, %v2313
    %2323 = vadd.xlane.f32.xlu0 %v2322
    %v2324 = vpop.xlane.xlu0 %2323
    %v2325 = vadd.f32 %v2314, %v2315
    %2326 = vadd.xlane.f32.xlu0 %v2325
    %v2327 = vpop.xlane.xlu0 %2326
    %v2328 = vadd.f32 %v2316, %v2317
    %2329 = vadd.xlane.f32.xlu0 %v2328
    %v2330 = vpop.xlane.xlu0 %2329
    %v2331 = vadd.f32 %v2318, %v2319
    %2332 = vadd.xlane.f32.xlu0 %v2331
    %v2333 = vpop.xlane.xlu0 %2332
    %v2334 = vrcp.pop 256.0
    %v2335 = vmul.f32 %v2324, %v2334
    %v2336 = vmul.f32 %v2327, %v2334
    %v2337 = vmul.f32 %v2330, %v2334
    %v2338 = vmul.f32 %v2333, %v2334
    %v2339 = vsub.f32 %v2312, %v2335
    %v2340 = vsub.f32 %v2313, %v2335
    %v2341 = vsub.f32 %v2314, %v2336
    %v2342 = vsub.f32 %v2315, %v2336
    %v2343 = vsub.f32 %v2316, %v2337
    %v2344 = vsub.f32 %v2317, %v2337
    %v2345 = vsub.f32 %v2318, %v2338
    %v2346 = vsub.f32 %v2319, %v2338
    %v2347 = vmul.f32 %v2339, %v2339
    %v2348 = vmul.f32 %v2340, %v2340
    %v2349 = vmul.f32 %v2341, %v2341
    %v2350 = vmul.f32 %v2342, %v2342
    %v2351 = vmul.f32 %v2343, %v2343
    %v2352 = vmul.f32 %v2344, %v2344
    %v2353 = vmul.f32 %v2345, %v2345
    %v2354 = vmul.f32 %v2346, %v2346
    %v2355 = vadd.f32 %v2347, %v2348
    %2356 = vadd.xlane.f32.xlu0 %v2355
    %v2357 = vpop.xlane.xlu0 %2356
    %v2358 = vadd.f32 %v2349, %v2350
    %2359 = vadd.xlane.f32.xlu0 %v2358
    %v2360 = vpop.xlane.xlu0 %2359
    %v2361 = vadd.f32 %v2351, %v2352
    %2362 = vadd.xlane.f32.xlu0 %v2361
    %v2363 = vpop.xlane.xlu0 %2362
    %v2364 = vadd.f32 %v2353, %v2354
    %2365 = vadd.xlane.f32.xlu0 %v2364
    %v2366 = vpop.xlane.xlu0 %2365
    %v2367 = vmul.f32 %v2357, %v2334
    %v2368 = vmul.f32 %v2360, %v2334
    %v2369 = vmul.f32 %v2363, %v2334
    %v2370 = vmul.f32 %v2366, %v2334
    %v2371 = vadd.f32 %v2367, 1e-12
    %v2372 = vadd.f32 %v2368, 1e-12
    %v2373 = vadd.f32 %v2369, 1e-12
    %v2374 = vadd.f32 %v2370, 1e-12
    %v2375 = vrsqrt.pop %v2371
    %v2376 = vrsqrt.pop %v2372
    %v2377 = vrsqrt.pop %v2373
    %v2378 = vrsqrt.pop %v2374
    %v2379 = vmul.f32 %v2339, %v2375
    %v2380 = vmul.f32 %v2340, %v2375
    %v2381 = vmul.f32 %v2341, %v2376
    %v2382 = vmul.f32 %v2342, %v2376
    %v2383 = vmul.f32 %v2343, %v2377
    %v2384 = vmul.f32 %v2344, %v2377
    %v2385 = vmul.f32 %v2345, %v2378
    %v2386 = vmul.f32 %v2346, %v2378
    %v2388 = vlaneseq
    %v2389 = vshrl.u32 %v2388, 7
    %v2390 = vsub.s32 0, %v2389
    %v2391 = vrot.slane %v2320, %v2390
    %v2392 = vlaneseq
    %v2393 = vshrl.u32 %v2392, 7
    %v2394 = vsub.s32 1, %v2393
    %v2395 = vrot.slane %v2320, %v2394
    %v2398 = vmul.f32 %v2379, %v2391
    %v2399 = vmul.f32 %v2380, %v2395
    %v2400 = vmul.f32 %v2381, %v2391
    %v2401 = vmul.f32 %v2382, %v2395
    %v2402 = vmul.f32 %v2383, %v2391
    %v2403 = vmul.f32 %v2384, %v2395
    %v2404 = vmul.f32 %v2385, %v2391
    %v2405 = vmul.f32 %v2386, %v2395
    %v2407 = vlaneseq
    %v2408 = vshrl.u32 %v2407, 7
    %v2409 = vsub.s32 0, %v2408
    %v2410 = vrot.slane %v2321, %v2409
    %v2411 = vlaneseq
    %v2412 = vshrl.u32 %v2411, 7
    %v2413 = vsub.s32 1, %v2412
    %v2414 = vrot.slane %v2321, %v2413
    %v2417 = vadd.f32 %v2398, %v2410
    %v2418 = vadd.f32 %v2399, %v2414
    %v2419 = vadd.f32 %v2400, %v2410
    %v2420 = vadd.f32 %v2401, %v2414
    %v2421 = vadd.f32 %v2402, %v2410
    %v2422 = vadd.f32 %v2403, %v2414
    %v2423 = vadd.f32 %v2404, %v2410
    %v2424 = vadd.f32 %v2405, %v2414
    %v2425 = vpack.c.bf16 %v2419, %v2417
    %v2426 = vpack.c.bf16 %v2420, %v2418
    %v2427 = vpack.c.bf16 %v2423, %v2421
    %v2428 = vpack.c.bf16 %v2424, %v2422
    %v2429 = vld [vmem:[#allocation10] sm:$0xff]
    %v2430 = vld [vmem:[#allocation10 + $0x8] sm:$0xff]
    %v2431 = vld [vmem:[#allocation10 + $0x10] sm:$0xff]
    %v2432 = vld [vmem:[#allocation10 + $0x18] sm:$0xff]
    %v2433 = vld [vmem:[#allocation10 + $0x20] sm:$0xff]
    %v2434 = vld [vmem:[#allocation10 + $0x28] sm:$0xff]
    %v2435 = vld [vmem:[#allocation10 + $0x30] sm:$0xff]
    %v2436 = vld [vmem:[#allocation10 + $0x38] sm:$0xff]
    %v2437 = vld [vmem:[#allocation10 + $0x40] sm:$0xff]
    %v2438 = vld [vmem:[#allocation10 + $0x48] sm:$0xff]
    %v2439 = vld [vmem:[#allocation10 + $0x50] sm:$0xff]
    %v2440 = vld [vmem:[#allocation10 + $0x58] sm:$0xff]
    %v2441 = vld [vmem:[#allocation10 + $0x60] sm:$0xff]
    %v2442 = vld [vmem:[#allocation10 + $0x68] sm:$0xff]
    %v2443 = vld [vmem:[#allocation10 + $0x70] sm:$0xff]
    %v2444 = vld [vmem:[#allocation10 + $0x78] sm:$0xff]
    %v2445 = vld [vmem:[#allocation10 + $0x80] sm:$0xff]
    %v2446 = vld [vmem:[#allocation10 + $0x88] sm:$0xff]
    %v2447 = vld [vmem:[#allocation10 + $0x90] sm:$0xff]
    %v2448 = vld [vmem:[#allocation10 + $0x98] sm:$0xff]
    %v2449 = vld [vmem:[#allocation10 + $0xa0] sm:$0xff]
    %v2450 = vld [vmem:[#allocation10 + $0xa8] sm:$0xff]
    %v2451 = vld [vmem:[#allocation10 + $0xb0] sm:$0xff]
    %v2452 = vld [vmem:[#allocation10 + $0xb8] sm:$0xff]
    %v2453 = vld [vmem:[#allocation10 + $0xc0] sm:$0xff]
    %v2454 = vld [vmem:[#allocation10 + $0xc8] sm:$0xff]
    %v2455 = vld [vmem:[#allocation10 + $0xd0] sm:$0xff]
    %v2456 = vld [vmem:[#allocation10 + $0xd8] sm:$0xff]
    %v2457 = vld [vmem:[#allocation10 + $0xe0] sm:$0xff]
    %v2458 = vld [vmem:[#allocation10 + $0xe8] sm:$0xff]
    %v2459 = vld [vmem:[#allocation10 + $0xf0] sm:$0xff]
    %v2460 = vld [vmem:[#allocation10 + $0xf8] sm:$0xff]
    %v2461 = vld [vmem:[#allocation10 + $0x100] sm:$0xff]
    %v2462 = vld [vmem:[#allocation10 + $0x108] sm:$0xff]
    %v2463 = vld [vmem:[#allocation10 + $0x110] sm:$0xff]
    %v2464 = vld [vmem:[#allocation10 + $0x118] sm:$0xff]
    %v2465 = vld [vmem:[#allocation10 + $0x120] sm:$0xff]
    %v2466 = vld [vmem:[#allocation10 + $0x128] sm:$0xff]
    %v2467 = vld [vmem:[#allocation10 + $0x130] sm:$0xff]
    %v2468 = vld [vmem:[#allocation10 + $0x138] sm:$0xff]
    %v2469 = vld [vmem:[#allocation10 + $0x140] sm:$0xff]
    %v2470 = vld [vmem:[#allocation10 + $0x148] sm:$0xff]
    %v2471 = vld [vmem:[#allocation10 + $0x150] sm:$0xff]
    %v2472 = vld [vmem:[#allocation10 + $0x158] sm:$0xff]
    %v2473 = vld [vmem:[#allocation10 + $0x160] sm:$0xff]
    %v2474 = vld [vmem:[#allocation10 + $0x168] sm:$0xff]
    %v2475 = vld [vmem:[#allocation10 + $0x170] sm:$0xff]
    %v2476 = vld [vmem:[#allocation10 + $0x178] sm:$0xff]
    %v2477 = vld [vmem:[#allocation10 + $0x180] sm:$0xff]
    %v2478 = vld [vmem:[#allocation10 + $0x188] sm:$0xff]
    %v2479 = vld [vmem:[#allocation10 + $0x190] sm:$0xff]
    %v2480 = vld [vmem:[#allocation10 + $0x198] sm:$0xff]
    %v2481 = vld [vmem:[#allocation10 + $0x1a0] sm:$0xff]
    %v2482 = vld [vmem:[#allocation10 + $0x1a8] sm:$0xff]
    %v2483 = vld [vmem:[#allocation10 + $0x1b0] sm:$0xff]
    %v2484 = vld [vmem:[#allocation10 + $0x1b8] sm:$0xff]
    %v2485 = vld [vmem:[#allocation10 + $0x1c0] sm:$0xff]
    %v2486 = vld [vmem:[#allocation10 + $0x1c8] sm:$0xff]
    %v2487 = vld [vmem:[#allocation10 + $0x1d0] sm:$0xff]
    %v2488 = vld [vmem:[#allocation10 + $0x1d8] sm:$0xff]
    %v2489 = vld [vmem:[#allocation10 + $0x1e0] sm:$0xff]
    %v2490 = vld [vmem:[#allocation10 + $0x1e8] sm:$0xff]
    %v2491 = vld [vmem:[#allocation10 + $0x1f0] sm:$0xff]
    %v2492 = vld [vmem:[#allocation10 + $0x1f8] sm:$0xff]
    %v2493 = vld [vmem:[#allocation10 + $0x200] sm:$0xff]
    %v2494 = vld [vmem:[#allocation10 + $0x208] sm:$0xff]
    %v2495 = vld [vmem:[#allocation10 + $0x210] sm:$0xff]
    %v2496 = vld [vmem:[#allocation10 + $0x218] sm:$0xff]
    %v2497 = vld [vmem:[#allocation10 + $0x220] sm:$0xff]
    %v2498 = vld [vmem:[#allocation10 + $0x228] sm:$0xff]
    %v2499 = vld [vmem:[#allocation10 + $0x230] sm:$0xff]
    %v2500 = vld [vmem:[#allocation10 + $0x238] sm:$0xff]
    %v2501 = vld [vmem:[#allocation10 + $0x240] sm:$0xff]
    %v2502 = vld [vmem:[#allocation10 + $0x248] sm:$0xff]
    %v2503 = vld [vmem:[#allocation10 + $0x250] sm:$0xff]
    %v2504 = vld [vmem:[#allocation10 + $0x258] sm:$0xff]
    %v2505 = vld [vmem:[#allocation10 + $0x260] sm:$0xff]
    %v2506 = vld [vmem:[#allocation10 + $0x268] sm:$0xff]
    %v2507 = vld [vmem:[#allocation10 + $0x270] sm:$0xff]
    %v2508 = vld [vmem:[#allocation10 + $0x278] sm:$0xff]
    %v2509 = vld [vmem:[#allocation10 + $0x280] sm:$0xff]
    %v2510 = vld [vmem:[#allocation10 + $0x288] sm:$0xff]
    %v2511 = vld [vmem:[#allocation10 + $0x290] sm:$0xff]
    %v2512 = vld [vmem:[#allocation10 + $0x298] sm:$0xff]
    %v2513 = vld [vmem:[#allocation10 + $0x2a0] sm:$0xff]
    %v2514 = vld [vmem:[#allocation10 + $0x2a8] sm:$0xff]
    %v2515 = vld [vmem:[#allocation10 + $0x2b0] sm:$0xff]
    %v2516 = vld [vmem:[#allocation10 + $0x2b8] sm:$0xff]
    %v2517 = vld [vmem:[#allocation10 + $0x2c0] sm:$0xff]
    %v2518 = vld [vmem:[#allocation10 + $0x2c8] sm:$0xff]
    %v2519 = vld [vmem:[#allocation10 + $0x2d0] sm:$0xff]
    %v2520 = vld [vmem:[#allocation10 + $0x2d8] sm:$0xff]
    %v2521 = vld [vmem:[#allocation10 + $0x2e0] sm:$0xff]
    %v2522 = vld [vmem:[#allocation10 + $0x2e8] sm:$0xff]
    %v2523 = vld [vmem:[#allocation10 + $0x2f0] sm:$0xff]
    %v2524 = vld [vmem:[#allocation10 + $0x2f8] sm:$0xff]
    %v2525 = vld [vmem:[#allocation10 + $0x300] sm:$0xff]
    %v2526 = vld [vmem:[#allocation10 + $0x308] sm:$0xff]
    %v2527 = vld [vmem:[#allocation10 + $0x310] sm:$0xff]
    %v2528 = vld [vmem:[#allocation10 + $0x318] sm:$0xff]
    %v2529 = vld [vmem:[#allocation10 + $0x320] sm:$0xff]
    %v2530 = vld [vmem:[#allocation10 + $0x328] sm:$0xff]
    %v2531 = vld [vmem:[#allocation10 + $0x330] sm:$0xff]
    %v2532 = vld [vmem:[#allocation10 + $0x338] sm:$0xff]
    %v2533 = vld [vmem:[#allocation10 + $0x340] sm:$0xff]
    %v2534 = vld [vmem:[#allocation10 + $0x348] sm:$0xff]
    %v2535 = vld [vmem:[#allocation10 + $0x350] sm:$0xff]
    %v2536 = vld [vmem:[#allocation10 + $0x358] sm:$0xff]
    %v2537 = vld [vmem:[#allocation10 + $0x360] sm:$0xff]
    %v2538 = vld [vmem:[#allocation10 + $0x368] sm:$0xff]
    %v2539 = vld [vmem:[#allocation10 + $0x370] sm:$0xff]
    %v2540 = vld [vmem:[#allocation10 + $0x378] sm:$0xff]
    %v2541 = vld [vmem:[#allocation10 + $0x380] sm:$0xff]
    %v2542 = vld [vmem:[#allocation10 + $0x388] sm:$0xff]
    %v2543 = vld [vmem:[#allocation10 + $0x390] sm:$0xff]
    %v2544 = vld [vmem:[#allocation10 + $0x398] sm:$0xff]
    %v2545 = vld [vmem:[#allocation10 + $0x3a0] sm:$0xff]
    %v2546 = vld [vmem:[#allocation10 + $0x3a8] sm:$0xff]
    %v2547 = vld [vmem:[#allocation10 + $0x3b0] sm:$0xff]
    %v2548 = vld [vmem:[#allocation10 + $0x3b8] sm:$0xff]
    %v2549 = vld [vmem:[#allocation10 + $0x3c0] sm:$0xff]
    %v2550 = vld [vmem:[#allocation10 + $0x3c8] sm:$0xff]
    %v2551 = vld [vmem:[#allocation10 + $0x3d0] sm:$0xff]
    %v2552 = vld [vmem:[#allocation10 + $0x3d8] sm:$0xff]
    %v2553 = vld [vmem:[#allocation10 + $0x3e0] sm:$0xff]
    %v2554 = vld [vmem:[#allocation10 + $0x3e8] sm:$0xff]
    %v2555 = vld [vmem:[#allocation10 + $0x3f0] sm:$0xff]
    %v2556 = vld [vmem:[#allocation10 + $0x3f8] sm:$0xff]
    %v2557 = vld [vmem:[%s9] sm:$0xff]
    %v2559 = vlaneseq
    %v2560 = vshrl.u32 %v2559, 7
    %v2561 = vsub.s32 0, %v2560
    %v2562 = vrot.slane %v2557, %v2561
    %v2563 = vlaneseq
    %v2564 = vshrl.u32 %v2563, 7
    %v2565 = vsub.s32 1, %v2564
    %v2566 = vrot.slane %v2557, %v2565
    %v2567 = vlaneseq
    %v2568 = vshrl.u32 %v2567, 7
    %v2569 = vsub.s32 2, %v2568
    %v2570 = vrot.slane %v2557, %v2569
    %v2571 = vlaneseq
    %v2572 = vshrl.u32 %v2571, 7
    %v2573 = vsub.s32 3, %v2572
    %v2574 = vrot.slane %v2557, %v2573
    %v2575 = vlaneseq
    %v2576 = vshrl.u32 %v2575, 7
    %v2577 = vsub.s32 4, %v2576
    %v2578 = vrot.slane %v2557, %v2577
    %v2579 = vlaneseq
    %v2580 = vshrl.u32 %v2579, 7
    %v2581 = vsub.s32 5, %v2580
    %v2582 = vrot.slane %v2557, %v2581
    %v2583 = vlaneseq
    %v2584 = vshrl.u32 %v2583, 7
    %v2585 = vsub.s32 6, %v2584
    %v2586 = vrot.slane %v2557, %v2585
    %v2587 = vlaneseq
    %v2588 = vshrl.u32 %v2587, 7
    %v2589 = vsub.s32 7, %v2588
    %v2590 = vrot.slane %v2557, %v2589
    %v2727 = vunpack.c.l.b16 %v2429
    %v2728 = vunpack.c.h.b16 %v2429
    %v2729 = vunpack.c.l.b16 %v2430
    %v2730 = vunpack.c.h.b16 %v2430
    %v2731 = vunpack.c.l.b16 %v2431
    %v2732 = vunpack.c.h.b16 %v2431
    %v2733 = vunpack.c.l.b16 %v2432
    %v2734 = vunpack.c.h.b16 %v2432
    %v2735 = vunpack.c.l.b16 %v2433
    %v2736 = vunpack.c.h.b16 %v2433
    %v2737 = vunpack.c.l.b16 %v2434
    %v2738 = vunpack.c.h.b16 %v2434
    %v2739 = vunpack.c.l.b16 %v2435
    %v2740 = vunpack.c.h.b16 %v2435
    %v2741 = vunpack.c.l.b16 %v2436
    %v2742 = vunpack.c.h.b16 %v2436
    %v2743 = vunpack.c.l.b16 %v2437
    %v2744 = vunpack.c.h.b16 %v2437
    %v2745 = vunpack.c.l.b16 %v2438
    %v2746 = vunpack.c.h.b16 %v2438
    %v2747 = vunpack.c.l.b16 %v2439
    %v2748 = vunpack.c.h.b16 %v2439
    %v2749 = vunpack.c.l.b16 %v2440
    %v2750 = vunpack.c.h.b16 %v2440
    %v2751 = vunpack.c.l.b16 %v2441
    %v2752 = vunpack.c.h.b16 %v2441
    %v2753 = vunpack.c.l.b16 %v2442
    %v2754 = vunpack.c.h.b16 %v2442
    %v2755 = vunpack.c.l.b16 %v2443
    %v2756 = vunpack.c.h.b16 %v2443
    %v2757 = vunpack.c.l.b16 %v2444
    %v2758 = vunpack.c.h.b16 %v2444
    %v2759 = vunpack.c.l.b16 %v2445
    %v2760 = vunpack.c.h.b16 %v2445
    %v2761 = vunpack.c.l.b16 %v2446
    %v2762 = vunpack.c.h.b16 %v2446
    %v2763 = vunpack.c.l.b16 %v2447
    %v2764 = vunpack.c.h.b16 %v2447
    %v2765 = vunpack.c.l.b16 %v2448
    %v2766 = vunpack.c.h.b16 %v2448
    %v2767 = vunpack.c.l.b16 %v2449
    %v2768 = vunpack.c.h.b16 %v2449
    %v2769 = vunpack.c.l.b16 %v2450
    %v2770 = vunpack.c.h.b16 %v2450
    %v2771 = vunpack.c.l.b16 %v2451
    %v2772 = vunpack.c.h.b16 %v2451
    %v2773 = vunpack.c.l.b16 %v2452
    %v2774 = vunpack.c.h.b16 %v2452
    %v2775 = vunpack.c.l.b16 %v2453
    %v2776 = vunpack.c.h.b16 %v2453
    %v2777 = vunpack.c.l.b16 %v2454
    %v2778 = vunpack.c.h.b16 %v2454
    %v2779 = vunpack.c.l.b16 %v2455
    %v2780 = vunpack.c.h.b16 %v2455
    %v2781 = vunpack.c.l.b16 %v2456
    %v2782 = vunpack.c.h.b16 %v2456
    %v2783 = vunpack.c.l.b16 %v2457
    %v2784 = vunpack.c.h.b16 %v2457
    %v2785 = vunpack.c.l.b16 %v2458
    %v2786 = vunpack.c.h.b16 %v2458
    %v2787 = vunpack.c.l.b16 %v2459
    %v2788 = vunpack.c.h.b16 %v2459
    %v2789 = vunpack.c.l.b16 %v2460
    %v2790 = vunpack.c.h.b16 %v2460
    %v2791 = vunpack.c.l.b16 %v2461
    %v2792 = vunpack.c.h.b16 %v2461
    %v2793 = vunpack.c.l.b16 %v2462
    %v2794 = vunpack.c.h.b16 %v2462
    %v2795 = vunpack.c.l.b16 %v2463
    %v2796 = vunpack.c.h.b16 %v2463
    %v2797 = vunpack.c.l.b16 %v2464
    %v2798 = vunpack.c.h.b16 %v2464
    %v2799 = vunpack.c.l.b16 %v2465
    %v2800 = vunpack.c.h.b16 %v2465
    %v2801 = vunpack.c.l.b16 %v2466
    %v2802 = vunpack.c.h.b16 %v2466
    %v2803 = vunpack.c.l.b16 %v2467
    %v2804 = vunpack.c.h.b16 %v2467
    %v2805 = vunpack.c.l.b16 %v2468
    %v2806 = vunpack.c.h.b16 %v2468
    %v2807 = vunpack.c.l.b16 %v2469
    %v2808 = vunpack.c.h.b16 %v2469
    %v2809 = vunpack.c.l.b16 %v2470
    %v2810 = vunpack.c.h.b16 %v2470
    %v2811 = vunpack.c.l.b16 %v2471
    %v2812 = vunpack.c.h.b16 %v2471
    %v2813 = vunpack.c.l.b16 %v2472
    %v2814 = vunpack.c.h.b16 %v2472
    %v2815 = vunpack.c.l.b16 %v2473
    %v2816 = vunpack.c.h.b16 %v2473
    %v2817 = vunpack.c.l.b16 %v2474
    %v2818 = vunpack.c.h.b16 %v2474
    %v2819 = vunpack.c.l.b16 %v2475
    %v2820 = vunpack.c.h.b16 %v2475
    %v2821 = vunpack.c.l.b16 %v2476
    %v2822 = vunpack.c.h.b16 %v2476
    %v2823 = vunpack.c.l.b16 %v2477
    %v2824 = vunpack.c.h.b16 %v2477
    %v2825 = vunpack.c.l.b16 %v2478
    %v2826 = vunpack.c.h.b16 %v2478
    %v2827 = vunpack.c.l.b16 %v2479
    %v2828 = vunpack.c.h.b16 %v2479
    %v2829 = vunpack.c.l.b16 %v2480
    %v2830 = vunpack.c.h.b16 %v2480
    %v2831 = vunpack.c.l.b16 %v2481
    %v2832 = vunpack.c.h.b16 %v2481
    %v2833 = vunpack.c.l.b16 %v2482
    %v2834 = vunpack.c.h.b16 %v2482
    %v2835 = vunpack.c.l.b16 %v2483
    %v2836 = vunpack.c.h.b16 %v2483
    %v2837 = vunpack.c.l.b16 %v2484
    %v2838 = vunpack.c.h.b16 %v2484
    %v2839 = vunpack.c.l.b16 %v2485
    %v2840 = vunpack.c.h.b16 %v2485
    %v2841 = vunpack.c.l.b16 %v2486
    %v2842 = vunpack.c.h.b16 %v2486
    %v2843 = vunpack.c.l.b16 %v2487
    %v2844 = vunpack.c.h.b16 %v2487
    %v2845 = vunpack.c.l.b16 %v2488
    %v2846 = vunpack.c.h.b16 %v2488
    %v2847 = vunpack.c.l.b16 %v2489
    %v2848 = vunpack.c.h.b16 %v2489
    %v2849 = vunpack.c.l.b16 %v2490
    %v2850 = vunpack.c.h.b16 %v2490
    %v2851 = vunpack.c.l.b16 %v2491
    %v2852 = vunpack.c.h.b16 %v2491
    %v2853 = vunpack.c.l.b16 %v2492
    %v2854 = vunpack.c.h.b16 %v2492
    %v2855 = vunpack.c.l.b16 %v2493
    %v2856 = vunpack.c.h.b16 %v2493
    %v2857 = vunpack.c.l.b16 %v2494
    %v2858 = vunpack.c.h.b16 %v2494
    %v2859 = vunpack.c.l.b16 %v2495
    %v2860 = vunpack.c.h.b16 %v2495
    %v2861 = vunpack.c.l.b16 %v2496
    %v2862 = vunpack.c.h.b16 %v2496
    %v2863 = vunpack.c.l.b16 %v2497
    %v2864 = vunpack.c.h.b16 %v2497
    %v2865 = vunpack.c.l.b16 %v2498
    %v2866 = vunpack.c.h.b16 %v2498
    %v2867 = vunpack.c.l.b16 %v2499
    %v2868 = vunpack.c.h.b16 %v2499
    %v2869 = vunpack.c.l.b16 %v2500
    %v2870 = vunpack.c.h.b16 %v2500
    %v2871 = vunpack.c.l.b16 %v2501
    %v2872 = vunpack.c.h.b16 %v2501
    %v2873 = vunpack.c.l.b16 %v2502
    %v2874 = vunpack.c.h.b16 %v2502
    %v2875 = vunpack.c.l.b16 %v2503
    %v2876 = vunpack.c.h.b16 %v2503
    %v2877 = vunpack.c.l.b16 %v2504
    %v2878 = vunpack.c.h.b16 %v2504
    %v2879 = vunpack.c.l.b16 %v2505
    %v2880 = vunpack.c.h.b16 %v2505
    %v2881 = vunpack.c.l.b16 %v2506
    %v2882 = vunpack.c.h.b16 %v2506
    %v2883 = vunpack.c.l.b16 %v2507
    %v2884 = vunpack.c.h.b16 %v2507
    %v2885 = vunpack.c.l.b16 %v2508
    %v2886 = vunpack.c.h.b16 %v2508
    %v2887 = vunpack.c.l.b16 %v2509
    %v2888 = vunpack.c.h.b16 %v2509
    %v2889 = vunpack.c.l.b16 %v2510
    %v2890 = vunpack.c.h.b16 %v2510
    %v2891 = vunpack.c.l.b16 %v2511
    %v2892 = vunpack.c.h.b16 %v2511
    %v2893 = vunpack.c.l.b16 %v2512
    %v2894 = vunpack.c.h.b16 %v2512
    %v2895 = vunpack.c.l.b16 %v2513
    %v2896 = vunpack.c.h.b16 %v2513
    %v2897 = vunpack.c.l.b16 %v2514
    %v2898 = vunpack.c.h.b16 %v2514
    %v2899 = vunpack.c.l.b16 %v2515
    %v2900 = vunpack.c.h.b16 %v2515
    %v2901 = vunpack.c.l.b16 %v2516
    %v2902 = vunpack.c.h.b16 %v2516
    %v2903 = vunpack.c.l.b16 %v2517
    %v2904 = vunpack.c.h.b16 %v2517
    %v2905 = vunpack.c.l.b16 %v2518
    %v2906 = vunpack.c.h.b16 %v2518
    %v2907 = vunpack.c.l.b16 %v2519
    %v2908 = vunpack.c.h.b16 %v2519
    %v2909 = vunpack.c.l.b16 %v2520
    %v2910 = vunpack.c.h.b16 %v2520
    %v2911 = vunpack.c.l.b16 %v2521
    %v2912 = vunpack.c.h.b16 %v2521
    %v2913 = vunpack.c.l.b16 %v2522
    %v2914 = vunpack.c.h.b16 %v2522
    %v2915 = vunpack.c.l.b16 %v2523
    %v2916 = vunpack.c.h.b16 %v2523
    %v2917 = vunpack.c.l.b16 %v2524
    %v2918 = vunpack.c.h.b16 %v2524
    %v2919 = vunpack.c.l.b16 %v2525
    %v2920 = vunpack.c.h.b16 %v2525
    %v2921 = vunpack.c.l.b16 %v2526
    %v2922 = vunpack.c.h.b16 %v2526
    %v2923 = vunpack.c.l.b16 %v2527
    %v2924 = vunpack.c.h.b16 %v2527
    %v2925 = vunpack.c.l.b16 %v2528
    %v2926 = vunpack.c.h.b16 %v2528
    %v2927 = vunpack.c.l.b16 %v2529
    %v2928 = vunpack.c.h.b16 %v2529
    %v2929 = vunpack.c.l.b16 %v2530
    %v2930 = vunpack.c.h.b16 %v2530
    %v2931 = vunpack.c.l.b16 %v2531
    %v2932 = vunpack.c.h.b16 %v2531
    %v2933 = vunpack.c.l.b16 %v2532
    %v2934 = vunpack.c.h.b16 %v2532
    %v2935 = vunpack.c.l.b16 %v2533
    %v2936 = vunpack.c.h.b16 %v2533
    %v2937 = vunpack.c.l.b16 %v2534
    %v2938 = vunpack.c.h.b16 %v2534
    %v2939 = vunpack.c.l.b16 %v2535
    %v2940 = vunpack.c.h.b16 %v2535
    %v2941 = vunpack.c.l.b16 %v2536
    %v2942 = vunpack.c.h.b16 %v2536
    %v2943 = vunpack.c.l.b16 %v2537
    %v2944 = vunpack.c.h.b16 %v2537
    %v2945 = vunpack.c.l.b16 %v2538
    %v2946 = vunpack.c.h.b16 %v2538
    %v2947 = vunpack.c.l.b16 %v2539
    %v2948 = vunpack.c.h.b16 %v2539
    %v2949 = vunpack.c.l.b16 %v2540
    %v2950 = vunpack.c.h.b16 %v2540
    %v2951 = vunpack.c.l.b16 %v2541
    %v2952 = vunpack.c.h.b16 %v2541
    %v2953 = vunpack.c.l.b16 %v2542
    %v2954 = vunpack.c.h.b16 %v2542
    %v2955 = vunpack.c.l.b16 %v2543
    %v2956 = vunpack.c.h.b16 %v2543
    %v2957 = vunpack.c.l.b16 %v2544
    %v2958 = vunpack.c.h.b16 %v2544
    %v2959 = vunpack.c.l.b16 %v2545
    %v2960 = vunpack.c.h.b16 %v2545
    %v2961 = vunpack.c.l.b16 %v2546
    %v2962 = vunpack.c.h.b16 %v2546
    %v2963 = vunpack.c.l.b16 %v2547
    %v2964 = vunpack.c.h.b16 %v2547
    %v2965 = vunpack.c.l.b16 %v2548
    %v2966 = vunpack.c.h.b16 %v2548
    %v2967 = vunpack.c.l.b16 %v2549
    %v2968 = vunpack.c.h.b16 %v2549
    %v2969 = vunpack.c.l.b16 %v2550
    %v2970 = vunpack.c.h.b16 %v2550
    %v2971 = vunpack.c.l.b16 %v2551
    %v2972 = vunpack.c.h.b16 %v2551
    %v2973 = vunpack.c.l.b16 %v2552
    %v2974 = vunpack.c.h.b16 %v2552
    %v2975 = vunpack.c.l.b16 %v2553
    %v2976 = vunpack.c.h.b16 %v2553
    %v2977 = vunpack.c.l.b16 %v2554
    %v2978 = vunpack.c.h.b16 %v2554
    %v2979 = vunpack.c.l.b16 %v2555
    %v2980 = vunpack.c.h.b16 %v2555
    %v2981 = vunpack.c.l.b16 %v2556
    %v2982 = vunpack.c.h.b16 %v2556
    %v2983 = vpack.c.b16 %v2735, %v2727
    %v2984 = vpack.c.b16 %v2736, %v2728
    %v2985 = vpack.c.b16 %v2737, %v2729
    %v2986 = vpack.c.b16 %v2738, %v2730
    %v2987 = vpack.c.b16 %v2739, %v2731
    %v2988 = vpack.c.b16 %v2740, %v2732
    %v2989 = vpack.c.b16 %v2741, %v2733
    %v2990 = vpack.c.b16 %v2742, %v2734
    %v2991 = vpack.c.b16 %v2751, %v2743
    %v2992 = vpack.c.b16 %v2752, %v2744
    %v2993 = vpack.c.b16 %v2753, %v2745
    %v2994 = vpack.c.b16 %v2754, %v2746
    %v2995 = vpack.c.b16 %v2755, %v2747
    %v2996 = vpack.c.b16 %v2756, %v2748
    %v2997 = vpack.c.b16 %v2757, %v2749
    %v2998 = vpack.c.b16 %v2758, %v2750
    %v2999 = vpack.c.b16 %v2767, %v2759
    %v3000 = vpack.c.b16 %v2768, %v2760
    %v3001 = vpack.c.b16 %v2769, %v2761
    %v3002 = vpack.c.b16 %v2770, %v2762
    %v3003 = vpack.c.b16 %v2771, %v2763
    %v3004 = vpack.c.b16 %v2772, %v2764
    %v3005 = vpack.c.b16 %v2773, %v2765
    %v3006 = vpack.c.b16 %v2774, %v2766
    %v3007 = vpack.c.b16 %v2783, %v2775
    %v3008 = vpack.c.b16 %v2784, %v2776
    %v3009 = vpack.c.b16 %v2785, %v2777
    %v3010 = vpack.c.b16 %v2786, %v2778
    %v3011 = vpack.c.b16 %v2787, %v2779
    %v3012 = vpack.c.b16 %v2788, %v2780
    %v3013 = vpack.c.b16 %v2789, %v2781
    %v3014 = vpack.c.b16 %v2790, %v2782
    %v3015 = vpack.c.b16 %v2799, %v2791
    %v3016 = vpack.c.b16 %v2800, %v2792
    %v3017 = vpack.c.b16 %v2801, %v2793
    %v3018 = vpack.c.b16 %v2802, %v2794
    %v3019 = vpack.c.b16 %v2803, %v2795
    %v3020 = vpack.c.b16 %v2804, %v2796
    %v3021 = vpack.c.b16 %v2805, %v2797
    %v3022 = vpack.c.b16 %v2806, %v2798
    %v3023 = vpack.c.b16 %v2815, %v2807
    %v3024 = vpack.c.b16 %v2816, %v2808
    %v3025 = vpack.c.b16 %v2817, %v2809
    %v3026 = vpack.c.b16 %v2818, %v2810
    %v3027 = vpack.c.b16 %v2819, %v2811
    %v3028 = vpack.c.b16 %v2820, %v2812
    %v3029 = vpack.c.b16 %v2821, %v2813
    %v3030 = vpack.c.b16 %v2822, %v2814
    %v3031 = vpack.c.b16 %v2831, %v2823
    %v3032 = vpack.c.b16 %v2832, %v2824
    %v3033 = vpack.c.b16 %v2833, %v2825
    %v3034 = vpack.c.b16 %v2834, %v2826
    %v3035 = vpack.c.b16 %v2835, %v2827
    %v3036 = vpack.c.b16 %v2836, %v2828
    %v3037 = vpack.c.b16 %v2837, %v2829
    %v3038 = vpack.c.b16 %v2838, %v2830
    %v3039 = vpack.c.b16 %v2847, %v2839
    %v3040 = vpack.c.b16 %v2848, %v2840
    %v3041 = vpack.c.b16 %v2849, %v2841
    %v3042 = vpack.c.b16 %v2850, %v2842
    %v3043 = vpack.c.b16 %v2851, %v2843
    %v3044 = vpack.c.b16 %v2852, %v2844
    %v3045 = vpack.c.b16 %v2853, %v2845
    %v3046 = vpack.c.b16 %v2854, %v2846
    %v3047 = vpack.c.b16 %v2863, %v2855
    %v3048 = vpack.c.b16 %v2864, %v2856
    %v3049 = vpack.c.b16 %v2865, %v2857
    %v3050 = vpack.c.b16 %v2866, %v2858
    %v3051 = vpack.c.b16 %v2867, %v2859
    %v3052 = vpack.c.b16 %v2868, %v2860
    %v3053 = vpack.c.b16 %v2869, %v2861
    %v3054 = vpack.c.b16 %v2870, %v2862
    %v3055 = vpack.c.b16 %v2879, %v2871
    %v3056 = vpack.c.b16 %v2880, %v2872
    %v3057 = vpack.c.b16 %v2881, %v2873
    %v3058 = vpack.c.b16 %v2882, %v2874
    %v3059 = vpack.c.b16 %v2883, %v2875
    %v3060 = vpack.c.b16 %v2884, %v2876
    %v3061 = vpack.c.b16 %v2885, %v2877
    %v3062 = vpack.c.b16 %v2886, %v2878
    %v3063 = vpack.c.b16 %v2895, %v2887
    %v3064 = vpack.c.b16 %v2896, %v2888
    %v3065 = vpack.c.b16 %v2897, %v2889
    %v3066 = vpack.c.b16 %v2898, %v2890
    %v3067 = vpack.c.b16 %v2899, %v2891
    %v3068 = vpack.c.b16 %v2900, %v2892
    %v3069 = vpack.c.b16 %v2901, %v2893
    %v3070 = vpack.c.b16 %v2902, %v2894
    %v3071 = vpack.c.b16 %v2911, %v2903
    %v3072 = vpack.c.b16 %v2912, %v2904
    %v3073 = vpack.c.b16 %v2913, %v2905
    %v3074 = vpack.c.b16 %v2914, %v2906
    %v3075 = vpack.c.b16 %v2915, %v2907
    %v3076 = vpack.c.b16 %v2916, %v2908
    %v3077 = vpack.c.b16 %v2917, %v2909
    %v3078 = vpack.c.b16 %v2918, %v2910
    %v3079 = vpack.c.b16 %v2927, %v2919
    %v3080 = vpack.c.b16 %v2928, %v2920
    %v3081 = vpack.c.b16 %v2929, %v2921
    %v3082 = vpack.c.b16 %v2930, %v2922
    %v3083 = vpack.c.b16 %v2931, %v2923
    %v3084 = vpack.c.b16 %v2932, %v2924
    %v3085 = vpack.c.b16 %v2933, %v2925
    %v3086 = vpack.c.b16 %v2934, %v2926
    %v3087 = vpack.c.b16 %v2943, %v2935
    %v3088 = vpack.c.b16 %v2944, %v2936
    %v3089 = vpack.c.b16 %v2945, %v2937
    %v3090 = vpack.c.b16 %v2946, %v2938
    %v3091 = vpack.c.b16 %v2947, %v2939
    %v3092 = vpack.c.b16 %v2948, %v2940
    %v3093 = vpack.c.b16 %v2949, %v2941
    %v3094 = vpack.c.b16 %v2950, %v2942
    %v3095 = vpack.c.b16 %v2959, %v2951
    %v3096 = vpack.c.b16 %v2960, %v2952
    %v3097 = vpack.c.b16 %v2961, %v2953
    %v3098 = vpack.c.b16 %v2962, %v2954
    %v3099 = vpack.c.b16 %v2963, %v2955
    %v3100 = vpack.c.b16 %v2964, %v2956
    %v3101 = vpack.c.b16 %v2965, %v2957
    %v3102 = vpack.c.b16 %v2966, %v2958
    %v3103 = vpack.c.b16 %v2975, %v2967
    %v3104 = vpack.c.b16 %v2976, %v2968
    %v3105 = vpack.c.b16 %v2977, %v2969
    %v3106 = vpack.c.b16 %v2978, %v2970
    %v3107 = vpack.c.b16 %v2979, %v2971
    %v3108 = vpack.c.b16 %v2980, %v2972
    %v3109 = vpack.c.b16 %v2981, %v2973
    %v3110 = vpack.c.b16 %v2982, %v2974
    %3239 = vmatprep.subr.bf16.mxu0 %v2984
    %3240 = vmatpush1.bf16.msra.mxu0 %v2983
    %3241 = vmatprep.subr.bf16.mxu0 %v2992
    %3242 = vmatpush1.bf16.msra.mxu0 %v2991
    %3243 = vmatprep.subr.bf16.mxu0 %v3000
    %3244 = vmatpush1.bf16.msra.mxu0 %v2999
    %3245 = vmatprep.subr.bf16.mxu0 %v3008
    %3246 = vmatpush1.bf16.msra.mxu0 %v3007
    %3247 = vmatprep.subr.bf16.mxu0 %v3016
    %3248 = vmatpush1.bf16.msra.mxu0 %v3015
    %3249 = vmatprep.subr.bf16.mxu0 %v3024
    %3250 = vmatpush1.bf16.msra.mxu0 %v3023
    %3251 = vmatprep.subr.bf16.mxu0 %v3032
    %3252 = vmatpush1.bf16.msra.mxu0 %v3031
    %3253 = vmatprep.subr.bf16.mxu0 %v3040
    %3254 = vmatpush1.bf16.msra.mxu0 %v3039
    %3255 = vmatprep.subr.bf16.mxu0 %v3048
    %3256 = vmatpush1.bf16.msra.mxu0 %v3047
    %3257 = vmatprep.subr.bf16.mxu0 %v3056
    %3258 = vmatpush1.bf16.msra.mxu0 %v3055
    %3259 = vmatprep.subr.bf16.mxu0 %v3064
    %3260 = vmatpush1.bf16.msra.mxu0 %v3063
    %3261 = vmatprep.subr.bf16.mxu0 %v3072
    %3262 = vmatpush1.bf16.msra.mxu0 %v3071
    %3263 = vmatprep.subr.bf16.mxu0 %v3080
    %3264 = vmatpush1.bf16.msra.mxu0 %v3079
    %3265 = vmatprep.subr.bf16.mxu0 %v3088
    %3266 = vmatpush1.bf16.msra.mxu0 %v3087
    %3267 = vmatprep.subr.bf16.mxu0 %v3096
    %3268 = vmatpush1.bf16.msra.mxu0 %v3095
    %3269 = vmatprep.subr.bf16.mxu0 %v3104
    %3270 = vmatpush1.bf16.msra.mxu0 %v3103
    %3271 = vmatprep.mubr.bf16.mxu0 %v2426
    %3272 = vmatmul.mubr.bf16.gmra.mrb[0].mxu0 %v2425
    %v3273 = vpop.f32.mrb[0].mxu0
    %v3274 = vadd.f32 %v2562, %v3273
    %v3275 = vpop.f32.mrb[0].mxu0
    %v3276 = vadd.f32 %v2566, %v3275
    %v3277 = vpop.f32.mrb[0].mxu0
    %v3278 = vadd.f32 %v2562, %v3277
    %v3279 = vpop.f32.mrb[0].mxu0
    %v3280 = vadd.f32 %v2566, %v3279
    %3281 = vmatprep.mubr.bf16.mxu0 %v2428
    %3282 = vmatmul.mubr.bf16.gmra.mrb[0].mxu0 %v2427
    %v3283 = vpop.f32.mrb[0].mxu0
    %v3284 = vadd.f32 %v2562, %v3283
    %v3285 = vpop.f32.mrb[0].mxu0
    %v3286 = vadd.f32 %v2566, %v3285
    %v3287 = vpop.f32.mrb[0].mxu0
    %v3288 = vadd.f32 %v2562, %v3287
    %v3289 = vpop.f32.mrb[0].mxu0
    %v3290 = vadd.f32 %v2566, %v3289
    %3291 = vdwg.mxu0
    %3292 = vmatprep.subr.bf16.mxu0 %v2986
    %3293 = vmatpush1.bf16.msra.mxu0 %v2985
    %3294 = vmatprep.subr.bf16.mxu0 %v2994
    %3295 = vmatpush1.bf16.msra.mxu0 %v2993
    %3296 = vmatprep.subr.bf16.mxu0 %v3002
    %3297 = vmatpush1.bf16.msra.mxu0 %v3001
    %3298 = vmatprep.subr.bf16.mxu0 %v3010
    %3299 = vmatpush1.bf16.msra.mxu0 %v3009
    %3300 = vmatprep.subr.bf16.mxu0 %v3018
    %3301 = vmatpush1.bf16.msra.mxu0 %v3017
    %3302 = vmatprep.subr.bf16.mxu0 %v3026
    %3303 = vmatpush1.bf16.msra.mxu0 %v3025
    %3304 = vmatprep.subr.bf16.mxu0 %v3034
    %3305 = vmatpush1.bf16.msra.mxu0 %v3033
    %3306 = vmatprep.subr.bf16.mxu0 %v3042
    %3307 = vmatpush1.bf16.msra.mxu0 %v3041
    %3308 = vmatprep.subr.bf16.mxu0 %v3050
    %3309 = vmatpush1.bf16.msra.mxu0 %v3049
    %3310 = vmatprep.subr.bf16.mxu0 %v3058
    %3311 = vmatpush1.bf16.msra.mxu0 %v3057
    %3312 = vmatprep.subr.bf16.mxu0 %v3066
    %3313 = vmatpush1.bf16.msra.mxu0 %v3065
    %3314 = vmatprep.subr.bf16.mxu0 %v3074
    %3315 = vmatpush1.bf16.msra.mxu0 %v3073
    %3316 = vmatprep.subr.bf16.mxu0 %v3082
    %3317 = vmatpush1.bf16.msra.mxu0 %v3081
    %3318 = vmatprep.subr.bf16.mxu0 %v3090
    %3319 = vmatpush1.bf16.msra.mxu0 %v3089
    %3320 = vmatprep.subr.bf16.mxu0 %v3098
    %3321 = vmatpush1.bf16.msra.mxu0 %v3097
    %3322 = vmatprep.subr.bf16.mxu0 %v3106
    %3323 = vmatpush1.bf16.msra.mxu0 %v3105
    %3324 = vmatprep.mubr.bf16.mxu0 %v2426
    %3325 = vmatmul.mubr.bf16.gmra.mrb[0].mxu0 %v2425
    %v3326 = vpop.f32.mrb[0].mxu0
    %v3327 = vadd.f32 %v2570, %v3326
    %v3328 = vpop.f32.mrb[0].mxu0
    %v3329 = vadd.f32 %v2574, %v3328
    %v3330 = vpop.f32.mrb[0].mxu0
    %v3331 = vadd.f32 %v2570, %v3330
    %v3332 = vpop.f32.mrb[0].mxu0
    %v3333 = vadd.f32 %v2574, %v3332
    %3334 = vmatprep.mubr.bf16.mxu0 %v2428
    %3335 = vmatmul.mubr.bf16.gmra.mrb[0].mxu0 %v2427
    %v3336 = vpop.f32.mrb[0].mxu0
    %v3337 = vadd.f32 %v2570, %v3336
    %v3338 = vpop.f32.mrb[0].mxu0
    %v3339 = vadd.f32 %v2574, %v3338
    %v3340 = vpop.f32.mrb[0].mxu0
    %v3341 = vadd.f32 %v2570, %v3340
    %v3342 = vpop.f32.mrb[0].mxu0
    %v3343 = vadd.f32 %v2574, %v3342
    %3344 = vdwg.mxu0
    %3345 = vmatprep.subr.bf16.mxu0 %v2988
    %3346 = vmatpush1.bf16.msra.mxu0 %v2987
    %3347 = vmatprep.subr.bf16.mxu0 %v2996
    %3348 = vmatpush1.bf16.msra.mxu0 %v2995
    %3349 = vmatprep.subr.bf16.mxu0 %v3004
    %3350 = vmatpush1.bf16.msra.mxu0 %v3003
    %3351 = vmatprep.subr.bf16.mxu0 %v3012
    %3352 = vmatpush1.bf16.msra.mxu0 %v3011
    %3353 = vmatprep.subr.bf16.mxu0 %v3020
    %3354 = vmatpush1.bf16.msra.mxu0 %v3019
    %3355 = vmatprep.subr.bf16.mxu0 %v3028
    %3356 = vmatpush1.bf16.msra.mxu0 %v3027
    %3357 = vmatprep.subr.bf16.mxu0 %v3036
    %3358 = vmatpush1.bf16.msra.mxu0 %v3035
    %3359 = vmatprep.subr.bf16.mxu0 %v3044
    %3360 = vmatpush1.bf16.msra.mxu0 %v3043
    %3361 = vmatprep.subr.bf16.mxu0 %v3052
    %3362 = vmatpush1.bf16.msra.mxu0 %v3051
    %3363 = vmatprep.subr.bf16.mxu0 %v3060
    %3364 = vmatpush1.bf16.msra.mxu0 %v3059
    %3365 = vmatprep.subr.bf16.mxu0 %v3068
    %3366 = vmatpush1.bf16.msra.mxu0 %v3067
    %3367 = vmatprep.subr.bf16.mxu0 %v3076
    %3368 = vmatpush1.bf16.msra.mxu0 %v3075
    %3369 = vmatprep.subr.bf16.mxu0 %v3084
    %3370 = vmatpush1.bf16.msra.mxu0 %v3083
    %3371 = vmatprep.subr.bf16.mxu0 %v3092
    %3372 = vmatpush1.bf16.msra.mxu0 %v3091
    %3373 = vmatprep.subr.bf16.mxu0 %v3100
    %3374 = vmatpush1.bf16.msra.mxu0 %v3099
    %3375 = vmatprep.subr.bf16.mxu0 %v3108
    %3376 = vmatpush1.bf16.msra.mxu0 %v3107
    %3377 = vmatprep.mubr.bf16.mxu0 %v2426
    %3378 = vmatmul.mubr.bf16.gmra.mrb[0].mxu0 %v2425
    %v3379 = vpop.f32.mrb[0].mxu0
    %v3380 = vadd.f32 %v2578, %v3379
    %v3381 = vpop.f32.mrb[0].mxu0
    %v3382 = vadd.f32 %v2582, %v3381
    %v3383 = vpop.f32.mrb[0].mxu0
    %v3384 = vadd.f32 %v2578, %v3383
    %v3385 = vpop.f32.mrb[0].mxu0
    %v3386 = vadd.f32 %v2582, %v3385
    %3387 = vmatprep.mubr.bf16.mxu0 %v2428
    %3388 = vmatmul.mubr.bf16.gmra.mrb[0].mxu0 %v2427
    %v3389 = vpop.f32.mrb[0].mxu0
    %v3390 = vadd.f32 %v2578, %v3389
    %v3391 = vpop.f32.mrb[0].mxu0
    %v3392 = vadd.f32 %v2582, %v3391
    %v3393 = vpop.f32.mrb[0].mxu0
    %v3394 = vadd.f32 %v2578, %v3393
    %v3395 = vpop.f32.mrb[0].mxu0
    %v3396 = vadd.f32 %v2582, %v3395
    %3397 = vdwg.mxu0
    %3398 = vmatprep.subr.bf16.mxu0 %v2990
    %3399 = vmatpush1.bf16.msra.mxu0 %v2989
    %3400 = vmatprep.subr.bf16.mxu0 %v2998
    %3401 = vmatpush1.bf16.msra.mxu0 %v2997
    %3402 = vmatprep.subr.bf16.mxu0 %v3006
    %3403 = vmatpush1.bf16.msra.mxu0 %v3005
    %3404 = vmatprep.subr.bf16.mxu0 %v3014
    %3405 = vmatpush1.bf16.msra.mxu0 %v3013
    %3406 = vmatprep.subr.bf16.mxu0 %v3022
    %3407 = vmatpush1.bf16.msra.mxu0 %v3021
    %3408 = vmatprep.subr.bf16.mxu0 %v3030
    %3409 = vmatpush1.bf16.msra.mxu0 %v3029
    %3410 = vmatprep.subr.bf16.mxu0 %v3038
    %3411 = vmatpush1.bf16.msra.mxu0 %v3037
    %3412 = vmatprep.subr.bf16.mxu0 %v3046
    %3413 = vmatpush1.bf16.msra.mxu0 %v3045
    %3414 = vmatprep.subr.bf16.mxu0 %v3054
    %3415 = vmatpush1.bf16.msra.mxu0 %v3053
    %3416 = vmatprep.subr.bf16.mxu0 %v3062
    %3417 = vmatpush1.bf16.msra.mxu0 %v3061
    %3418 = vmatprep.subr.bf16.mxu0 %v3070
    %3419 = vmatpush1.bf16.msra.mxu0 %v3069
    %3420 = vmatprep.subr.bf16.mxu0 %v3078
    %3421 = vmatpush1.bf16.msra.mxu0 %v3077
    %3422 = vmatprep.subr.bf16.mxu0 %v3086
    %3423 = vmatpush1.bf16.msra.mxu0 %v3085
    %3424 = vmatprep.subr.bf16.mxu0 %v3094
    %3425 = vmatpush1.bf16.msra.mxu0 %v3093
    %3426 = vmatprep.subr.bf16.mxu0 %v3102
    %3427 = vmatpush1.bf16.msra.mxu0 %v3101
    %3428 = vmatprep.subr.bf16.mxu0 %v3110
    %3429 = vmatpush1.bf16.msra.mxu0 %v3109
    %3430 = vmatprep.mubr.bf16.mxu0 %v2426
    %3431 = vmatmul.mubr.bf16.gmra.mrb[0].mxu0 %v2425
    %v3432 = vpop.f32.mrb[0].mxu0
    %v3433 = vadd.f32 %v2586, %v3432
    %v3434 = vpop.f32.mrb[0].mxu0
    %v3435 = vadd.f32 %v2590, %v3434
    %v3436 = vpop.f32.mrb[0].mxu0
    %v3437 = vadd.f32 %v2586, %v3436
    %v3438 = vpop.f32.mrb[0].mxu0
    %v3439 = vadd.f32 %v2590, %v3438
    %3440 = vmatprep.mubr.bf16.mxu0 %v2428
    %3441 = vmatmul.mubr.bf16.gmra.mrb[0].mxu0 %v2427
    %v3442 = vpop.f32.mrb[0].mxu0
    %v3443 = vadd.f32 %v2586, %v3442
    %v3444 = vpop.f32.mrb[0].mxu0
    %v3445 = vadd.f32 %v2590, %v3444
    %v3446 = vpop.f32.mrb[0].mxu0
    %v3447 = vadd.f32 %v2586, %v3446
    %v3448 = vpop.f32.mrb[0].mxu0
    %v3449 = vadd.f32 %v2590, %v3448
    %3450 = vdwg.mxu0
    %v3451 = vmul.f32 %v3274, 0.5
    %v3452 = vmul.f32 %v3276, 0.5
    %v3453 = vmul.f32 %v3327, 0.5
    %v3454 = vmul.f32 %v3329, 0.5
    %v3455 = vmul.f32 %v3380, 0.5
    %v3456 = vmul.f32 %v3382, 0.5
    %v3457 = vmul.f32 %v3433, 0.5
    %v3458 = vmul.f32 %v3435, 0.5
    %v3459 = vmul.f32 %v3278, 0.5
    %v3460 = vmul.f32 %v3280, 0.5
    %v3461 = vmul.f32 %v3331, 0.5
    %v3462 = vmul.f32 %v3333, 0.5
    %v3463 = vmul.f32 %v3384, 0.5
    %v3464 = vmul.f32 %v3386, 0.5
    %v3465 = vmul.f32 %v3437, 0.5
    %v3466 = vmul.f32 %v3439, 0.5
    %v3467 = vmul.f32 %v3284, 0.5
    %v3468 = vmul.f32 %v3286, 0.5
    %v3469 = vmul.f32 %v3337, 0.5
    %v3470 = vmul.f32 %v3339, 0.5
    %v3471 = vmul.f32 %v3390, 0.5
    %v3472 = vmul.f32 %v3392, 0.5
    %v3473 = vmul.f32 %v3443, 0.5
    %v3474 = vmul.f32 %v3445, 0.5
    %v3475 = vmul.f32 %v3288, 0.5
    %v3476 = vmul.f32 %v3290, 0.5
    %v3477 = vmul.f32 %v3341, 0.5
    %v3478 = vmul.f32 %v3343, 0.5
    %v3479 = vmul.f32 %v3394, 0.5
    %v3480 = vmul.f32 %v3396, 0.5
    %v3481 = vmul.f32 %v3447, 0.5
    %v3482 = vmul.f32 %v3449, 0.5
    %v3483 = vmul.f32 %v3274, 0.70710677
    %v3484 = vmul.f32 %v3276, 0.70710677
    %v3485 = vmul.f32 %v3327, 0.70710677
    %v3486 = vmul.f32 %v3329, 0.70710677
    %v3487 = vmul.f32 %v3380, 0.70710677
    %v3488 = vmul.f32 %v3382, 0.70710677
    %v3489 = vmul.f32 %v3433, 0.70710677
    %v3490 = vmul.f32 %v3435, 0.70710677
    %v3491 = vmul.f32 %v3278, 0.70710677
    %v3492 = vmul.f32 %v3280, 0.70710677
    %v3493 = vmul.f32 %v3331, 0.70710677
    %v3494 = vmul.f32 %v3333, 0.70710677
    %v3495 = vmul.f32 %v3384, 0.70710677
    %v3496 = vmul.f32 %v3386, 0.70710677
    %v3497 = vmul.f32 %v3437, 0.70710677
    %v3498 = vmul.f32 %v3439, 0.70710677
    %v3499 = vmul.f32 %v3284, 0.70710677
    %v3500 = vmul.f32 %v3286, 0.70710677
    %v3501 = vmul.f32 %v3337, 0.70710677
    %v3502 = vmul.f32 %v3339, 0.70710677
    %v3503 = vmul.f32 %v3390, 0.70710677
    %v3504 = vmul.f32 %v3392, 0.70710677
    %v3505 = vmul.f32 %v3443, 0.70710677
    %v3506 = vmul.f32 %v3445, 0.70710677
    %v3507 = vmul.f32 %v3288, 0.70710677
    %v3508 = vmul.f32 %v3290, 0.70710677
    %v3509 = vmul.f32 %v3341, 0.70710677
    %v3510 = vmul.f32 %v3343, 0.70710677
    %v3511 = vmul.f32 %v3394, 0.70710677
    %v3512 = vmul.f32 %v3396, 0.70710677
    %v3513 = vmul.f32 %v3447, 0.70710677
    %v3514 = vmul.f32 %v3449, 0.70710677
    %v3515 = verf.f32.pop %v3483
    %v3516 = verf.f32.pop %v3484
    %v3517 = verf.f32.pop %v3485
    %v3518 = verf.f32.pop %v3486
    %v3519 = verf.f32.pop %v3487
    %v3520 = verf.f32.pop %v3488
    %v3521 = verf.f32.pop %v3489
    %v3522 = verf.f32.pop %v3490
    %v3523 = verf.f32.pop %v3491
    %v3524 = verf.f32.pop %v3492
    %v3525 = verf.f32.pop %v3493
    %v3526 = verf.f32.pop %v3494
    %v3527 = verf.f32.pop %v3495
    %v3528 = verf.f32.pop %v3496
    %v3529 = verf.f32.pop %v3497
    %v3530 = verf.f32.pop %v3498
    %v3531 = verf.f32.pop %v3499
    %v3532 = verf.f32.pop %v3500
    %v3533 = verf.f32.pop %v3501
    %v3534 = verf.f32.pop %v3502
    %v3535 = verf.f32.pop %v3503
    %v3536 = verf.f32.pop %v3504
    %v3537 = verf.f32.pop %v3505
    %v3538 = verf.f32.pop %v3506
    %v3539 = verf.f32.pop %v3507
    %v3540 = verf.f32.pop %v3508
    %v3541 = verf.f32.pop %v3509
    %v3542 = verf.f32.pop %v3510
    %v3543 = verf.f32.pop %v3511
    %v3544 = verf.f32.pop %v3512
    %v3545 = verf.f32.pop %v3513
    %v3546 = verf.f32.pop %v3514
    %v3547 = vadd.f32 %v3515, 1.0
    %v3548 = vadd.f32 %v3516, 1.0
    %v3549 = vadd.f32 %v3517, 1.0
    %v3550 = vadd.f32 %v3518, 1.0
    %v3551 = vadd.f32 %v3519, 1.0
    %v3552 = vadd.f32 %v3520, 1.0
    %v3553 = vadd.f32 %v3521, 1.0
    %v3554 = vadd.f32 %v3522, 1.0
    %v3555 = vadd.f32 %v3523, 1.0
    %v3556 = vadd.f32 %v3524, 1.0
    %v3557 = vadd.f32 %v3525, 1.0
    %v3558 = vadd.f32 %v3526, 1.0
    %v3559 = vadd.f32 %v3527, 1.0
    %v3560 = vadd.f32 %v3528, 1.0
    %v3561 = vadd.f32 %v3529, 1.0
    %v3562 = vadd.f32 %v3530, 1.0
    %v3563 = vadd.f32 %v3531, 1.0
    %v3564 = vadd.f32 %v3532, 1.0
    %v3565 = vadd.f32 %v3533, 1.0
    %v3566 = vadd.f32 %v3534, 1.0
    %v3567 = vadd.f32 %v3535, 1.0
    %v3568 = vadd.f32 %v3536, 1.0
    %v3569 = vadd.f32 %v3537, 1.0
    %v3570 = vadd.f32 %v3538, 1.0
    %v3571 = vadd.f32 %v3539, 1.0
    %v3572 = vadd.f32 %v3540, 1.0
    %v3573 = vadd.f32 %v3541, 1.0
    %v3574 = vadd.f32 %v3542, 1.0
    %v3575 = vadd.f32 %v3543, 1.0
    %v3576 = vadd.f32 %v3544, 1.0
    %v3577 = vadd.f32 %v3545, 1.0
    %v3578 = vadd.f32 %v3546, 1.0
    %v3579 = vmul.f32 %v3451, %v3547
    %v3580 = vmul.f32 %v3452, %v3548
    %v3581 = vmul.f32 %v3453, %v3549
    %v3582 = vmul.f32 %v3454, %v3550
    %v3583 = vmul.f32 %v3455, %v3551
    %v3584 = vmul.f32 %v3456, %v3552
    %v3585 = vmul.f32 %v3457, %v3553
    %v3586 = vmul.f32 %v3458, %v3554
    %v3587 = vmul.f32 %v3459, %v3555
    %v3588 = vmul.f32 %v3460, %v3556
    %v3589 = vmul.f32 %v3461, %v3557
    %v3590 = vmul.f32 %v3462, %v3558
    %v3591 = vmul.f32 %v3463, %v3559
    %v3592 = vmul.f32 %v3464, %v3560
    %v3593 = vmul.f32 %v3465, %v3561
    %v3594 = vmul.f32 %v3466, %v3562
    %v3595 = vmul.f32 %v3467, %v3563
    %v3596 = vmul.f32 %v3468, %v3564
    %v3597 = vmul.f32 %v3469, %v3565
    %v3598 = vmul.f32 %v3470, %v3566
    %v3599 = vmul.f32 %v3471, %v3567
    %v3600 = vmul.f32 %v3472, %v3568
    %v3601 = vmul.f32 %v3473, %v3569
    %v3602 = vmul.f32 %v3474, %v3570
    %v3603 = vmul.f32 %v3475, %v3571
    %v3604 = vmul.f32 %v3476, %v3572
    %v3605 = vmul.f32 %v3477, %v3573
    %v3606 = vmul.f32 %v3478, %v3574
    %v3607 = vmul.f32 %v3479, %v3575
    %v3608 = vmul.f32 %v3480, %v3576
    %v3609 = vmul.f32 %v3481, %v3577
    %v3610 = vmul.f32 %v3482, %v3578
    %v3611 = vpack.c.bf16 %v3587, %v3579
    %v3612 = vpack.c.bf16 %v3588, %v3580
    %v3613 = vpack.c.bf16 %v3589, %v3581
    %v3614 = vpack.c.bf16 %v3590, %v3582
    %v3615 = vpack.c.bf16 %v3591, %v3583
    %v3616 = vpack.c.bf16 %v3592, %v3584
    %v3617 = vpack.c.bf16 %v3593, %v3585
    %v3618 = vpack.c.bf16 %v3594, %v3586
    %v3619 = vpack.c.bf16 %v3603, %v3595
    %v3620 = vpack.c.bf16 %v3604, %v3596
    %v3621 = vpack.c.bf16 %v3605, %v3597
    %v3622 = vpack.c.bf16 %v3606, %v3598
    %v3623 = vpack.c.bf16 %v3607, %v3599
    %v3624 = vpack.c.bf16 %v3608, %v3600
    %v3625 = vpack.c.bf16 %v3609, %v3601
    %v3626 = vpack.c.bf16 %v3610, %v3602
    %v3627 = vld [vmem:[#allocation11] sm:$0xff]
    %v3628 = vld [vmem:[#allocation11 + $0x8] sm:$0xff]
    %v3629 = vld [vmem:[#allocation11 + $0x10] sm:$0xff]
    %v3630 = vld [vmem:[#allocation11 + $0x18] sm:$0xff]
    %v3631 = vld [vmem:[#allocation11 + $0x20] sm:$0xff]
    %v3632 = vld [vmem:[#allocation11 + $0x28] sm:$0xff]
    %v3633 = vld [vmem:[#allocation11 + $0x30] sm:$0xff]
    %v3634 = vld [vmem:[#allocation11 + $0x38] sm:$0xff]
    %v3635 = vld [vmem:[#allocation11 + $0x40] sm:$0xff]
    %v3636 = vld [vmem:[#allocation11 + $0x48] sm:$0xff]
    %v3637 = vld [vmem:[#allocation11 + $0x50] sm:$0xff]
    %v3638 = vld [vmem:[#allocation11 + $0x58] sm:$0xff]
    %v3639 = vld [vmem:[#allocation11 + $0x60] sm:$0xff]
    %v3640 = vld [vmem:[#allocation11 + $0x68] sm:$0xff]
    %v3641 = vld [vmem:[#allocation11 + $0x70] sm:$0xff]
    %v3642 = vld [vmem:[#allocation11 + $0x78] sm:$0xff]
    %v3643 = vld [vmem:[#allocation11 + $0x80] sm:$0xff]
    %v3644 = vld [vmem:[#allocation11 + $0x88] sm:$0xff]
    %v3645 = vld [vmem:[#allocation11 + $0x90] sm:$0xff]
    %v3646 = vld [vmem:[#allocation11 + $0x98] sm:$0xff]
    %v3647 = vld [vmem:[#allocation11 + $0xa0] sm:$0xff]
    %v3648 = vld [vmem:[#allocation11 + $0xa8] sm:$0xff]
    %v3649 = vld [vmem:[#allocation11 + $0xb0] sm:$0xff]
    %v3650 = vld [vmem:[#allocation11 + $0xb8] sm:$0xff]
    %v3651 = vld [vmem:[#allocation11 + $0xc0] sm:$0xff]
    %v3652 = vld [vmem:[#allocation11 + $0xc8] sm:$0xff]
    %v3653 = vld [vmem:[#allocation11 + $0xd0] sm:$0xff]
    %v3654 = vld [vmem:[#allocation11 + $0xd8] sm:$0xff]
    %v3655 = vld [vmem:[#allocation11 + $0xe0] sm:$0xff]
    %v3656 = vld [vmem:[#allocation11 + $0xe8] sm:$0xff]
    %v3657 = vld [vmem:[#allocation11 + $0xf0] sm:$0xff]
    %v3658 = vld [vmem:[#allocation11 + $0xf8] sm:$0xff]
    %v3659 = vld [vmem:[#allocation11 + $0x100] sm:$0xff]
    %v3660 = vld [vmem:[#allocation11 + $0x108] sm:$0xff]
    %v3661 = vld [vmem:[#allocation11 + $0x110] sm:$0xff]
    %v3662 = vld [vmem:[#allocation11 + $0x118] sm:$0xff]
    %v3663 = vld [vmem:[#allocation11 + $0x120] sm:$0xff]
    %v3664 = vld [vmem:[#allocation11 + $0x128] sm:$0xff]
    %v3665 = vld [vmem:[#allocation11 + $0x130] sm:$0xff]
    %v3666 = vld [vmem:[#allocation11 + $0x138] sm:$0xff]
    %v3667 = vld [vmem:[#allocation11 + $0x140] sm:$0xff]
    %v3668 = vld [vmem:[#allocation11 + $0x148] sm:$0xff]
    %v3669 = vld [vmem:[#allocation11 + $0x150] sm:$0xff]
    %v3670 = vld [vmem:[#allocation11 + $0x158] sm:$0xff]
    %v3671 = vld [vmem:[#allocation11 + $0x160] sm:$0xff]
    %v3672 = vld [vmem:[#allocation11 + $0x168] sm:$0xff]
    %v3673 = vld [vmem:[#allocation11 + $0x170] sm:$0xff]
    %v3674 = vld [vmem:[#allocation11 + $0x178] sm:$0xff]
    %v3675 = vld [vmem:[#allocation11 + $0x180] sm:$0xff]
    %v3676 = vld [vmem:[#allocation11 + $0x188] sm:$0xff]
    %v3677 = vld [vmem:[#allocation11 + $0x190] sm:$0xff]
    %v3678 = vld [vmem:[#allocation11 + $0x198] sm:$0xff]
    %v3679 = vld [vmem:[#allocation11 + $0x1a0] sm:$0xff]
    %v3680 = vld [vmem:[#allocation11 + $0x1a8] sm:$0xff]
    %v3681 = vld [vmem:[#allocation11 + $0x1b0] sm:$0xff]
    %v3682 = vld [vmem:[#allocation11 + $0x1b8] sm:$0xff]
    %v3683 = vld [vmem:[#allocation11 + $0x1c0] sm:$0xff]
    %v3684 = vld [vmem:[#allocation11 + $0x1c8] sm:$0xff]
    %v3685 = vld [vmem:[#allocation11 + $0x1d0] sm:$0xff]
    %v3686 = vld [vmem:[#allocation11 + $0x1d8] sm:$0xff]
    %v3687 = vld [vmem:[#allocation11 + $0x1e0] sm:$0xff]
    %v3688 = vld [vmem:[#allocation11 + $0x1e8] sm:$0xff]
    %v3689 = vld [vmem:[#allocation11 + $0x1f0] sm:$0xff]
    %v3690 = vld [vmem:[#allocation11 + $0x1f8] sm:$0xff]
    %v3691 = vld [vmem:[#allocation11 + $0x200] sm:$0xff]
    %v3692 = vld [vmem:[#allocation11 + $0x208] sm:$0xff]
    %v3693 = vld [vmem:[#allocation11 + $0x210] sm:$0xff]
    %v3694 = vld [vmem:[#allocation11 + $0x218] sm:$0xff]
    %v3695 = vld [vmem:[#allocation11 + $0x220] sm:$0xff]
    %v3696 = vld [vmem:[#allocation11 + $0x228] sm:$0xff]
    %v3697 = vld [vmem:[#allocation11 + $0x230] sm:$0xff]
    %v3698 = vld [vmem:[#allocation11 + $0x238] sm:$0xff]
    %v3699 = vld [vmem:[#allocation11 + $0x240] sm:$0xff]
    %v3700 = vld [vmem:[#allocation11 + $0x248] sm:$0xff]
    %v3701 = vld [vmem:[#allocation11 + $0x250] sm:$0xff]
    %v3702 = vld [vmem:[#allocation11 + $0x258] sm:$0xff]
    %v3703 = vld [vmem:[#allocation11 + $0x260] sm:$0xff]
    %v3704 = vld [vmem:[#allocation11 + $0x268] sm:$0xff]
    %v3705 = vld [vmem:[#allocation11 + $0x270] sm:$0xff]
    %v3706 = vld [vmem:[#allocation11 + $0x278] sm:$0xff]
    %v3707 = vld [vmem:[#allocation11 + $0x280] sm:$0xff]
    %v3708 = vld [vmem:[#allocation11 + $0x288] sm:$0xff]
    %v3709 = vld [vmem:[#allocation11 + $0x290] sm:$0xff]
    %v3710 = vld [vmem:[#allocation11 + $0x298] sm:$0xff]
    %v3711 = vld [vmem:[#allocation11 + $0x2a0] sm:$0xff]
    %v3712 = vld [vmem:[#allocation11 + $0x2a8] sm:$0xff]
    %v3713 = vld [vmem:[#allocation11 + $0x2b0] sm:$0xff]
    %v3714 = vld [vmem:[#allocation11 + $0x2b8] sm:$0xff]
    %v3715 = vld [vmem:[#allocation11 + $0x2c0] sm:$0xff]
    %v3716 = vld [vmem:[#allocation11 + $0x2c8] sm:$0xff]
    %v3717 = vld [vmem:[#allocation11 + $0x2d0] sm:$0xff]
    %v3718 = vld [vmem:[#allocation11 + $0x2d8] sm:$0xff]
    %v3719 = vld [vmem:[#allocation11 + $0x2e0] sm:$0xff]
    %v3720 = vld [vmem:[#allocation11 + $0x2e8] sm:$0xff]
    %v3721 = vld [vmem:[#allocation11 + $0x2f0] sm:$0xff]
    %v3722 = vld [vmem:[#allocation11 + $0x2f8] sm:$0xff]
    %v3723 = vld [vmem:[#allocation11 + $0x300] sm:$0xff]
    %v3724 = vld [vmem:[#allocation11 + $0x308] sm:$0xff]
    %v3725 = vld [vmem:[#allocation11 + $0x310] sm:$0xff]
    %v3726 = vld [vmem:[#allocation11 + $0x318] sm:$0xff]
    %v3727 = vld [vmem:[#allocation11 + $0x320] sm:$0xff]
    %v3728 = vld [vmem:[#allocation11 + $0x328] sm:$0xff]
    %v3729 = vld [vmem:[#allocation11 + $0x330] sm:$0xff]
    %v3730 = vld [vmem:[#allocation11 + $0x338] sm:$0xff]
    %v3731 = vld [vmem:[#allocation11 + $0x340] sm:$0xff]
    %v3732 = vld [vmem:[#allocation11 + $0x348] sm:$0xff]
    %v3733 = vld [vmem:[#allocation11 + $0x350] sm:$0xff]
    %v3734 = vld [vmem:[#allocation11 + $0x358] sm:$0xff]
    %v3735 = vld [vmem:[#allocation11 + $0x360] sm:$0xff]
    %v3736 = vld [vmem:[#allocation11 + $0x368] sm:$0xff]
    %v3737 = vld [vmem:[#allocation11 + $0x370] sm:$0xff]
    %v3738 = vld [vmem:[#allocation11 + $0x378] sm:$0xff]
    %v3739 = vld [vmem:[#allocation11 + $0x380] sm:$0xff]
    %v3740 = vld [vmem:[#allocation11 + $0x388] sm:$0xff]
    %v3741 = vld [vmem:[#allocation11 + $0x390] sm:$0xff]
    %v3742 = vld [vmem:[#allocation11 + $0x398] sm:$0xff]
    %v3743 = vld [vmem:[#allocation11 + $0x3a0] sm:$0xff]
    %v3744 = vld [vmem:[#allocation11 + $0x3a8] sm:$0xff]
    %v3745 = vld [vmem:[#allocation11 + $0x3b0] sm:$0xff]
    %v3746 = vld [vmem:[#allocation11 + $0x3b8] sm:$0xff]
    %v3747 = vld [vmem:[#allocation11 + $0x3c0] sm:$0xff]
    %v3748 = vld [vmem:[#allocation11 + $0x3c8] sm:$0xff]
    %v3749 = vld [vmem:[#allocation11 + $0x3d0] sm:$0xff]
    %v3750 = vld [vmem:[#allocation11 + $0x3d8] sm:$0xff]
    %v3751 = vld [vmem:[#allocation11 + $0x3e0] sm:$0xff]
    %v3752 = vld [vmem:[#allocation11 + $0x3e8] sm:$0xff]
    %v3753 = vld [vmem:[#allocation11 + $0x3f0] sm:$0xff]
    %v3754 = vld [vmem:[#allocation11 + $0x3f8] sm:$0xff]
    %v3755 = vld [vmem:[%s11] sm:$0x3]
    %v3757 = vlaneseq
    %v3758 = vshrl.u32 %v3757, 7
    %v3759 = vsub.s32 0, %v3758
    %v3760 = vrot.slane %v3755, %v3759
    %v3761 = vlaneseq
    %v3762 = vshrl.u32 %v3761, 7
    %v3763 = vsub.s32 1, %v3762
    %v3764 = vrot.slane %v3755, %v3763
    %v3895 = vunpack.c.l.b16 %v3627
    %v3896 = vunpack.c.h.b16 %v3627
    %v3897 = vunpack.c.l.b16 %v3628
    %v3898 = vunpack.c.h.b16 %v3628
    %v3899 = vunpack.c.l.b16 %v3629
    %v3900 = vunpack.c.h.b16 %v3629
    %v3901 = vunpack.c.l.b16 %v3630
    %v3902 = vunpack.c.h.b16 %v3630
    %v3903 = vunpack.c.l.b16 %v3631
    %v3904 = vunpack.c.h.b16 %v3631
    %v3905 = vunpack.c.l.b16 %v3632
    %v3906 = vunpack.c.h.b16 %v3632
    %v3907 = vunpack.c.l.b16 %v3633
    %v3908 = vunpack.c.h.b16 %v3633
    %v3909 = vunpack.c.l.b16 %v3634
    %v3910 = vunpack.c.h.b16 %v3634
    %v3911 = vunpack.c.l.b16 %v3635
    %v3912 = vunpack.c.h.b16 %v3635
    %v3913 = vunpack.c.l.b16 %v3636
    %v3914 = vunpack.c.h.b16 %v3636
    %v3915 = vunpack.c.l.b16 %v3637
    %v3916 = vunpack.c.h.b16 %v3637
    %v3917 = vunpack.c.l.b16 %v3638
    %v3918 = vunpack.c.h.b16 %v3638
    %v3919 = vunpack.c.l.b16 %v3639
    %v3920 = vunpack.c.h.b16 %v3639
    %v3921 = vunpack.c.l.b16 %v3640
    %v3922 = vunpack.c.h.b16 %v3640
    %v3923 = vunpack.c.l.b16 %v3641
    %v3924 = vunpack.c.h.b16 %v3641
    %v3925 = vunpack.c.l.b16 %v3642
    %v3926 = vunpack.c.h.b16 %v3642
    %v3927 = vunpack.c.l.b16 %v3643
    %v3928 = vunpack.c.h.b16 %v3643
    %v3929 = vunpack.c.l.b16 %v3644
    %v3930 = vunpack.c.h.b16 %v3644
    %v3931 = vunpack.c.l.b16 %v3645
    %v3932 = vunpack.c.h.b16 %v3645
    %v3933 = vunpack.c.l.b16 %v3646
    %v3934 = vunpack.c.h.b16 %v3646
    %v3935 = vunpack.c.l.b16 %v3647
    %v3936 = vunpack.c.h.b16 %v3647
    %v3937 = vunpack.c.l.b16 %v3648
    %v3938 = vunpack.c.h.b16 %v3648
    %v3939 = vunpack.c.l.b16 %v3649
    %v3940 = vunpack.c.h.b16 %v3649
    %v3941 = vunpack.c.l.b16 %v3650
    %v3942 = vunpack.c.h.b16 %v3650
    %v3943 = vunpack.c.l.b16 %v3651
    %v3944 = vunpack.c.h.b16 %v3651
    %v3945 = vunpack.c.l.b16 %v3652
    %v3946 = vunpack.c.h.b16 %v3652
    %v3947 = vunpack.c.l.b16 %v3653
    %v3948 = vunpack.c.h.b16 %v3653
    %v3949 = vunpack.c.l.b16 %v3654
    %v3950 = vunpack.c.h.b16 %v3654
    %v3951 = vunpack.c.l.b16 %v3655
    %v3952 = vunpack.c.h.b16 %v3655
    %v3953 = vunpack.c.l.b16 %v3656
    %v3954 = vunpack.c.h.b16 %v3656
    %v3955 = vunpack.c.l.b16 %v3657
    %v3956 = vunpack.c.h.b16 %v3657
    %v3957 = vunpack.c.l.b16 %v3658
    %v3958 = vunpack.c.h.b16 %v3658
    %v3959 = vunpack.c.l.b16 %v3659
    %v3960 = vunpack.c.h.b16 %v3659
    %v3961 = vunpack.c.l.b16 %v3660
    %v3962 = vunpack.c.h.b16 %v3660
    %v3963 = vunpack.c.l.b16 %v3661
    %v3964 = vunpack.c.h.b16 %v3661
    %v3965 = vunpack.c.l.b16 %v3662
    %v3966 = vunpack.c.h.b16 %v3662
    %v3967 = vunpack.c.l.b16 %v3663
    %v3968 = vunpack.c.h.b16 %v3663
    %v3969 = vunpack.c.l.b16 %v3664
    %v3970 = vunpack.c.h.b16 %v3664
    %v3971 = vunpack.c.l.b16 %v3665
    %v3972 = vunpack.c.h.b16 %v3665
    %v3973 = vunpack.c.l.b16 %v3666
    %v3974 = vunpack.c.h.b16 %v3666
    %v3975 = vunpack.c.l.b16 %v3667
    %v3976 = vunpack.c.h.b16 %v3667
    %v3977 = vunpack.c.l.b16 %v3668
    %v3978 = vunpack.c.h.b16 %v3668
    %v3979 = vunpack.c.l.b16 %v3669
    %v3980 = vunpack.c.h.b16 %v3669
    %v3981 = vunpack.c.l.b16 %v3670
    %v3982 = vunpack.c.h.b16 %v3670
    %v3983 = vunpack.c.l.b16 %v3671
    %v3984 = vunpack.c.h.b16 %v3671
    %v3985 = vunpack.c.l.b16 %v3672
    %v3986 = vunpack.c.h.b16 %v3672
    %v3987 = vunpack.c.l.b16 %v3673
    %v3988 = vunpack.c.h.b16 %v3673
    %v3989 = vunpack.c.l.b16 %v3674
    %v3990 = vunpack.c.h.b16 %v3674
    %v3991 = vunpack.c.l.b16 %v3675
    %v3992 = vunpack.c.h.b16 %v3675
    %v3993 = vunpack.c.l.b16 %v3676
    %v3994 = vunpack.c.h.b16 %v3676
    %v3995 = vunpack.c.l.b16 %v3677
    %v3996 = vunpack.c.h.b16 %v3677
    %v3997 = vunpack.c.l.b16 %v3678
    %v3998 = vunpack.c.h.b16 %v3678
    %v3999 = vunpack.c.l.b16 %v3679
    %v4000 = vunpack.c.h.b16 %v3679
    %v4001 = vunpack.c.l.b16 %v3680
    %v4002 = vunpack.c.h.b16 %v3680
    %v4003 = vunpack.c.l.b16 %v3681
    %v4004 = vunpack.c.h.b16 %v3681
    %v4005 = vunpack.c.l.b16 %v3682
    %v4006 = vunpack.c.h.b16 %v3682
    %v4007 = vunpack.c.l.b16 %v3683
    %v4008 = vunpack.c.h.b16 %v3683
    %v4009 = vunpack.c.l.b16 %v3684
    %v4010 = vunpack.c.h.b16 %v3684
    %v4011 = vunpack.c.l.b16 %v3685
    %v4012 = vunpack.c.h.b16 %v3685
    %v4013 = vunpack.c.l.b16 %v3686
    %v4014 = vunpack.c.h.b16 %v3686
    %v4015 = vunpack.c.l.b16 %v3687
    %v4016 = vunpack.c.h.b16 %v3687
    %v4017 = vunpack.c.l.b16 %v3688
    %v4018 = vunpack.c.h.b16 %v3688
    %v4019 = vunpack.c.l.b16 %v3689
    %v4020 = vunpack.c.h.b16 %v3689
    %v4021 = vunpack.c.l.b16 %v3690
    %v4022 = vunpack.c.h.b16 %v3690
    %v4023 = vunpack.c.l.b16 %v3691
    %v4024 = vunpack.c.h.b16 %v3691
    %v4025 = vunpack.c.l.b16 %v3692
    %v4026 = vunpack.c.h.b16 %v3692
    %v4027 = vunpack.c.l.b16 %v3693
    %v4028 = vunpack.c.h.b16 %v3693
    %v4029 = vunpack.c.l.b16 %v3694
    %v4030 = vunpack.c.h.b16 %v3694
    %v4031 = vunpack.c.l.b16 %v3695
    %v4032 = vunpack.c.h.b16 %v3695
    %v4033 = vunpack.c.l.b16 %v3696
    %v4034 = vunpack.c.h.b16 %v3696
    %v4035 = vunpack.c.l.b16 %v3697
    %v4036 = vunpack.c.h.b16 %v3697
    %v4037 = vunpack.c.l.b16 %v3698
    %v4038 = vunpack.c.h.b16 %v3698
    %v4039 = vunpack.c.l.b16 %v3699
    %v4040 = vunpack.c.h.b16 %v3699
    %v4041 = vunpack.c.l.b16 %v3700
    %v4042 = vunpack.c.h.b16 %v3700
    %v4043 = vunpack.c.l.b16 %v3701
    %v4044 = vunpack.c.h.b16 %v3701
    %v4045 = vunpack.c.l.b16 %v3702
    %v4046 = vunpack.c.h.b16 %v3702
    %v4047 = vunpack.c.l.b16 %v3703
    %v4048 = vunpack.c.h.b16 %v3703
    %v4049 = vunpack.c.l.b16 %v3704
    %v4050 = vunpack.c.h.b16 %v3704
    %v4051 = vunpack.c.l.b16 %v3705
    %v4052 = vunpack.c.h.b16 %v3705
    %v4053 = vunpack.c.l.b16 %v3706
    %v4054 = vunpack.c.h.b16 %v3706
    %v4055 = vunpack.c.l.b16 %v3707
    %v4056 = vunpack.c.h.b16 %v3707
    %v4057 = vunpack.c.l.b16 %v3708
    %v4058 = vunpack.c.h.b16 %v3708
    %v4059 = vunpack.c.l.b16 %v3709
    %v4060 = vunpack.c.h.b16 %v3709
    %v4061 = vunpack.c.l.b16 %v3710
    %v4062 = vunpack.c.h.b16 %v3710
    %v4063 = vunpack.c.l.b16 %v3711
    %v4064 = vunpack.c.h.b16 %v3711
    %v4065 = vunpack.c.l.b16 %v3712
    %v4066 = vunpack.c.h.b16 %v3712
    %v4067 = vunpack.c.l.b16 %v3713
    %v4068 = vunpack.c.h.b16 %v3713
    %v4069 = vunpack.c.l.b16 %v3714
    %v4070 = vunpack.c.h.b16 %v3714
    %v4071 = vunpack.c.l.b16 %v3715
    %v4072 = vunpack.c.h.b16 %v3715
    %v4073 = vunpack.c.l.b16 %v3716
    %v4074 = vunpack.c.h.b16 %v3716
    %v4075 = vunpack.c.l.b16 %v3717
    %v4076 = vunpack.c.h.b16 %v3717
    %v4077 = vunpack.c.l.b16 %v3718
    %v4078 = vunpack.c.h.b16 %v3718
    %v4079 = vunpack.c.l.b16 %v3719
    %v4080 = vunpack.c.h.b16 %v3719
    %v4081 = vunpack.c.l.b16 %v3720
    %v4082 = vunpack.c.h.b16 %v3720
    %v4083 = vunpack.c.l.b16 %v3721
    %v4084 = vunpack.c.h.b16 %v3721
    %v4085 = vunpack.c.l.b16 %v3722
    %v4086 = vunpack.c.h.b16 %v3722
    %v4087 = vunpack.c.l.b16 %v3723
    %v4088 = vunpack.c.h.b16 %v3723
    %v4089 = vunpack.c.l.b16 %v3724
    %v4090 = vunpack.c.h.b16 %v3724
    %v4091 = vunpack.c.l.b16 %v3725
    %v4092 = vunpack.c.h.b16 %v3725
    %v4093 = vunpack.c.l.b16 %v3726
    %v4094 = vunpack.c.h.b16 %v3726
    %v4095 = vunpack.c.l.b16 %v3727
    %v4096 = vunpack.c.h.b16 %v3727
    %v4097 = vunpack.c.l.b16 %v3728
    %v4098 = vunpack.c.h.b16 %v3728
    %v4099 = vunpack.c.l.b16 %v3729
    %v4100 = vunpack.c.h.b16 %v3729
    %v4101 = vunpack.c.l.b16 %v3730
    %v4102 = vunpack.c.h.b16 %v3730
    %v4103 = vunpack.c.l.b16 %v3731
    %v4104 = vunpack.c.h.b16 %v3731
    %v4105 = vunpack.c.l.b16 %v3732
    %v4106 = vunpack.c.h.b16 %v3732
    %v4107 = vunpack.c.l.b16 %v3733
    %v4108 = vunpack.c.h.b16 %v3733
    %v4109 = vunpack.c.l.b16 %v3734
    %v4110 = vunpack.c.h.b16 %v3734
    %v4111 = vunpack.c.l.b16 %v3735
    %v4112 = vunpack.c.h.b16 %v3735
    %v4113 = vunpack.c.l.b16 %v3736
    %v4114 = vunpack.c.h.b16 %v3736
    %v4115 = vunpack.c.l.b16 %v3737
    %v4116 = vunpack.c.h.b16 %v3737
    %v4117 = vunpack.c.l.b16 %v3738
    %v4118 = vunpack.c.h.b16 %v3738
    %v4119 = vunpack.c.l.b16 %v3739
    %v4120 = vunpack.c.h.b16 %v3739
    %v4121 = vunpack.c.l.b16 %v3740
    %v4122 = vunpack.c.h.b16 %v3740
    %v4123 = vunpack.c.l.b16 %v3741
    %v4124 = vunpack.c.h.b16 %v3741
    %v4125 = vunpack.c.l.b16 %v3742
    %v4126 = vunpack.c.h.b16 %v3742
    %v4127 = vunpack.c.l.b16 %v3743
    %v4128 = vunpack.c.h.b16 %v3743
    %v4129 = vunpack.c.l.b16 %v3744
    %v4130 = vunpack.c.h.b16 %v3744
    %v4131 = vunpack.c.l.b16 %v3745
    %v4132 = vunpack.c.h.b16 %v3745
    %v4133 = vunpack.c.l.b16 %v3746
    %v4134 = vunpack.c.h.b16 %v3746
    %v4135 = vunpack.c.l.b16 %v3747
    %v4136 = vunpack.c.h.b16 %v3747
    %v4137 = vunpack.c.l.b16 %v3748
    %v4138 = vunpack.c.h.b16 %v3748
    %v4139 = vunpack.c.l.b16 %v3749
    %v4140 = vunpack.c.h.b16 %v3749
    %v4141 = vunpack.c.l.b16 %v3750
    %v4142 = vunpack.c.h.b16 %v3750
    %v4143 = vunpack.c.l.b16 %v3751
    %v4144 = vunpack.c.h.b16 %v3751
    %v4145 = vunpack.c.l.b16 %v3752
    %v4146 = vunpack.c.h.b16 %v3752
    %v4147 = vunpack.c.l.b16 %v3753
    %v4148 = vunpack.c.h.b16 %v3753
    %v4149 = vunpack.c.l.b16 %v3754
    %v4150 = vunpack.c.h.b16 %v3754
    %v4151 = vpack.c.b16 %v3897, %v3895
    %v4152 = vpack.c.b16 %v3898, %v3896
    %v4153 = vpack.c.b16 %v3901, %v3899
    %v4154 = vpack.c.b16 %v3902, %v3900
    %v4155 = vpack.c.b16 %v3905, %v3903
    %v4156 = vpack.c.b16 %v3906, %v3904
    %v4157 = vpack.c.b16 %v3909, %v3907
    %v4158 = vpack.c.b16 %v3910, %v3908
    %v4159 = vpack.c.b16 %v3913, %v3911
    %v4160 = vpack.c.b16 %v3914, %v3912
    %v4161 = vpack.c.b16 %v3917, %v3915
    %v4162 = vpack.c.b16 %v3918, %v3916
    %v4163 = vpack.c.b16 %v3921, %v3919
    %v4164 = vpack.c.b16 %v3922, %v3920
    %v4165 = vpack.c.b16 %v3925, %v3923
    %v4166 = vpack.c.b16 %v3926, %v3924
    %v4167 = vpack.c.b16 %v3929, %v3927
    %v4168 = vpack.c.b16 %v3930, %v3928
    %v4169 = vpack.c.b16 %v3933, %v3931
    %v4170 = vpack.c.b16 %v3934, %v3932
    %v4171 = vpack.c.b16 %v3937, %v3935
    %v4172 = vpack.c.b16 %v3938, %v3936
    %v4173 = vpack.c.b16 %v3941, %v3939
    %v4174 = vpack.c.b16 %v3942, %v3940
    %v4175 = vpack.c.b16 %v3945, %v3943
    %v4176 = vpack.c.b16 %v3946, %v3944
    %v4177 = vpack.c.b16 %v3949, %v3947
    %v4178 = vpack.c.b16 %v3950, %v3948
    %v4179 = vpack.c.b16 %v3953, %v3951
    %v4180 = vpack.c.b16 %v3954, %v3952
    %v4181 = vpack.c.b16 %v3957, %v3955
    %v4182 = vpack.c.b16 %v3958, %v3956
    %v4183 = vpack.c.b16 %v3961, %v3959
    %v4184 = vpack.c.b16 %v3962, %v3960
    %v4185 = vpack.c.b16 %v3965, %v3963
    %v4186 = vpack.c.b16 %v3966, %v3964
    %v4187 = vpack.c.b16 %v3969, %v3967
    %v4188 = vpack.c.b16 %v3970, %v3968
    %v4189 = vpack.c.b16 %v3973, %v3971
    %v4190 = vpack.c.b16 %v3974, %v3972
    %v4191 = vpack.c.b16 %v3977, %v3975
    %v4192 = vpack.c.b16 %v3978, %v3976
    %v4193 = vpack.c.b16 %v3981, %v3979
    %v4194 = vpack.c.b16 %v3982, %v3980
    %v4195 = vpack.c.b16 %v3985, %v3983
    %v4196 = vpack.c.b16 %v3986, %v3984
    %v4197 = vpack.c.b16 %v3989, %v3987
    %v4198 = vpack.c.b16 %v3990, %v3988
    %v4199 = vpack.c.b16 %v3993, %v3991
    %v4200 = vpack.c.b16 %v3994, %v3992
    %v4201 = vpack.c.b16 %v3997, %v3995
    %v4202 = vpack.c.b16 %v3998, %v3996
    %v4203 = vpack.c.b16 %v4001, %v3999
    %v4204 = vpack.c.b16 %v4002, %v4000
    %v4205 = vpack.c.b16 %v4005, %v4003
    %v4206 = vpack.c.b16 %v4006, %v4004
    %v4207 = vpack.c.b16 %v4009, %v4007
    %v4208 = vpack.c.b16 %v4010, %v4008
    %v4209 = vpack.c.b16 %v4013, %v4011
    %v4210 = vpack.c.b16 %v4014, %v4012
    %v4211 = vpack.c.b16 %v4017, %v4015
    %v4212 = vpack.c.b16 %v4018, %v4016
    %v4213 = vpack.c.b16 %v4021, %v4019
    %v4214 = vpack.c.b16 %v4022, %v4020
    %v4215 = vpack.c.b16 %v4025, %v4023
    %v4216 = vpack.c.b16 %v4026, %v4024
    %v4217 = vpack.c.b16 %v4029, %v4027
    %v4218 = vpack.c.b16 %v4030, %v4028
    %v4219 = vpack.c.b16 %v4033, %v4031
    %v4220 = vpack.c.b16 %v4034, %v4032
    %v4221 = vpack.c.b16 %v4037, %v4035
    %v4222 = vpack.c.b16 %v4038, %v4036
    %v4223 = vpack.c.b16 %v4041, %v4039
    %v4224 = vpack.c.b16 %v4042, %v4040
    %v4225 = vpack.c.b16 %v4045, %v4043
    %v4226 = vpack.c.b16 %v4046, %v4044
    %v4227 = vpack.c.b16 %v4049, %v4047
    %v4228 = vpack.c.b16 %v4050, %v4048
    %v4229 = vpack.c.b16 %v4053, %v4051
    %v4230 = vpack.c.b16 %v4054, %v4052
    %v4231 = vpack.c.b16 %v4057, %v4055
    %v4232 = vpack.c.b16 %v4058, %v4056
    %v4233 = vpack.c.b16 %v4061, %v4059
    %v4234 = vpack.c.b16 %v4062, %v4060
    %v4235 = vpack.c.b16 %v4065, %v4063
    %v4236 = vpack.c.b16 %v4066, %v4064
    %v4237 = vpack.c.b16 %v4069, %v4067
    %v4238 = vpack.c.b16 %v4070, %v4068
    %v4239 = vpack.c.b16 %v4073, %v4071
    %v4240 = vpack.c.b16 %v4074, %v4072
    %v4241 = vpack.c.b16 %v4077, %v4075
    %v4242 = vpack.c.b16 %v4078, %v4076
    %v4243 = vpack.c.b16 %v4081, %v4079
    %v4244 = vpack.c.b16 %v4082, %v4080
    %v4245 = vpack.c.b16 %v4085, %v4083
    %v4246 = vpack.c.b16 %v4086, %v4084
    %v4247 = vpack.c.b16 %v4089, %v4087
    %v4248 = vpack.c.b16 %v4090, %v4088
    %v4249 = vpack.c.b16 %v4093, %v4091
    %v4250 = vpack.c.b16 %v4094, %v4092
    %v4251 = vpack.c.b16 %v4097, %v4095
    %v4252 = vpack.c.b16 %v4098, %v4096
    %v4253 = vpack.c.b16 %v4101, %v4099
    %v4254 = vpack.c.b16 %v4102, %v4100
    %v4255 = vpack.c.b16 %v4105, %v4103
    %v4256 = vpack.c.b16 %v4106, %v4104
    %v4257 = vpack.c.b16 %v4109, %v4107
    %v4258 = vpack.c.b16 %v4110, %v4108
    %v4259 = vpack.c.b16 %v4113, %v4111
    %v4260 = vpack.c.b16 %v4114, %v4112
    %v4261 = vpack.c.b16 %v4117, %v4115
    %v4262 = vpack.c.b16 %v4118, %v4116
    %v4263 = vpack.c.b16 %v4121, %v4119
    %v4264 = vpack.c.b16 %v4122, %v4120
    %v4265 = vpack.c.b16 %v4125, %v4123
    %v4266 = vpack.c.b16 %v4126, %v4124
    %v4267 = vpack.c.b16 %v4129, %v4127
    %v4268 = vpack.c.b16 %v4130, %v4128
    %v4269 = vpack.c.b16 %v4133, %v4131
    %v4270 = vpack.c.b16 %v4134, %v4132
    %v4271 = vpack.c.b16 %v4137, %v4135
    %v4272 = vpack.c.b16 %v4138, %v4136
    %v4273 = vpack.c.b16 %v4141, %v4139
    %v4274 = vpack.c.b16 %v4142, %v4140
    %v4275 = vpack.c.b16 %v4145, %v4143
    %v4276 = vpack.c.b16 %v4146, %v4144
    %v4277 = vpack.c.b16 %v4149, %v4147
    %v4278 = vpack.c.b16 %v4150, %v4148
    %4407 = vmatprep.subr.bf16.mxu0 %v4152
    %4408 = vmatpush1.bf16.msra.mxu0 %v4151
    %4409 = vmatprep.subr.bf16.mxu0 %v4154
    %4410 = vmatpush1.bf16.msra.mxu0 %v4153
    %4411 = vmatprep.subr.bf16.mxu0 %v4156
    %4412 = vmatpush1.bf16.msra.mxu0 %v4155
    %4413 = vmatprep.subr.bf16.mxu0 %v4158
    %4414 = vmatpush1.bf16.msra.mxu0 %v4157
    %4415 = vmatprep.subr.bf16.mxu0 %v4160
    %4416 = vmatpush1.bf16.msra.mxu0 %v4159
    %4417 = vmatprep.subr.bf16.mxu0 %v4162
    %4418 = vmatpush1.bf16.msra.mxu0 %v4161
    %4419 = vmatprep.subr.bf16.mxu0 %v4164
    %4420 = vmatpush1.bf16.msra.mxu0 %v4163
    %4421 = vmatprep.subr.bf16.mxu0 %v4166
    %4422 = vmatpush1.bf16.msra.mxu0 %v4165
    %4423 = vmatprep.subr.bf16.mxu0 %v4168
    %4424 = vmatpush1.bf16.msra.mxu0 %v4167
    %4425 = vmatprep.subr.bf16.mxu0 %v4170
    %4426 = vmatpush1.bf16.msra.mxu0 %v4169
    %4427 = vmatprep.subr.bf16.mxu0 %v4172
    %4428 = vmatpush1.bf16.msra.mxu0 %v4171
    %4429 = vmatprep.subr.bf16.mxu0 %v4174
    %4430 = vmatpush1.bf16.msra.mxu0 %v4173
    %4431 = vmatprep.subr.bf16.mxu0 %v4176
    %4432 = vmatpush1.bf16.msra.mxu0 %v4175
    %4433 = vmatprep.subr.bf16.mxu0 %v4178
    %4434 = vmatpush1.bf16.msra.mxu0 %v4177
    %4435 = vmatprep.subr.bf16.mxu0 %v4180
    %4436 = vmatpush1.bf16.msra.mxu0 %v4179
    %4437 = vmatprep.subr.bf16.mxu0 %v4182
    %4438 = vmatpush1.bf16.msra.mxu0 %v4181
    %4439 = vmatprep.mubr.bf16.mxu0 %v3612
    %4440 = vmatmul.mubr.bf16.gmra.mrb[0].mxu0 %v3611
    %v4441 = vpop.f32.mrb[0].mxu0
    %v4442 = vadd.f32 %v3760, %v4441
    %v4443 = vpop.f32.mrb[0].mxu0
    %v4444 = vadd.f32 %v3764, %v4443
    %v4445 = vpop.f32.mrb[0].mxu0
    %v4446 = vadd.f32 %v3760, %v4445
    %v4447 = vpop.f32.mrb[0].mxu0
    %v4448 = vadd.f32 %v3764, %v4447
    %4449 = vmatprep.mubr.bf16.mxu0 %v3620
    %4450 = vmatmul.mubr.bf16.gmra.mrb[0].mxu0 %v3619
    %v4451 = vpop.f32.mrb[0].mxu0
    %v4452 = vadd.f32 %v3760, %v4451
    %v4453 = vpop.f32.mrb[0].mxu0
    %v4454 = vadd.f32 %v3764, %v4453
    %v4455 = vpop.f32.mrb[0].mxu0
    %v4456 = vadd.f32 %v3760, %v4455
    %v4457 = vpop.f32.mrb[0].mxu0
    %v4458 = vadd.f32 %v3764, %v4457
    %4459 = vdwg.mxu0
    %4460 = vmatprep.subr.bf16.mxu0 %v4184
    %4461 = vmatpush1.bf16.msra.mxu0 %v4183
    %4462 = vmatprep.subr.bf16.mxu0 %v4186
    %4463 = vmatpush1.bf16.msra.mxu0 %v4185
    %4464 = vmatprep.subr.bf16.mxu0 %v4188
    %4465 = vmatpush1.bf16.msra.mxu0 %v4187
    %4466 = vmatprep.subr.bf16.mxu0 %v4190
    %4467 = vmatpush1.bf16.msra.mxu0 %v4189
    %4468 = vmatprep.subr.bf16.mxu0 %v4192
    %4469 = vmatpush1.bf16.msra.mxu0 %v4191
    %4470 = vmatprep.subr.bf16.mxu0 %v4194
    %4471 = vmatpush1.bf16.msra.mxu0 %v4193
    %4472 = vmatprep.subr.bf16.mxu0 %v4196
    %4473 = vmatpush1.bf16.msra.mxu0 %v4195
    %4474 = vmatprep.subr.bf16.mxu0 %v4198
    %4475 = vmatpush1.bf16.msra.mxu0 %v4197
    %4476 = vmatprep.subr.bf16.mxu0 %v4200
    %4477 = vmatpush1.bf16.msra.mxu0 %v4199
    %4478 = vmatprep.subr.bf16.mxu0 %v4202
    %4479 = vmatpush1.bf16.msra.mxu0 %v4201
    %4480 = vmatprep.subr.bf16.mxu0 %v4204
    %4481 = vmatpush1.bf16.msra.mxu0 %v4203
    %4482 = vmatprep.subr.bf16.mxu0 %v4206
    %4483 = vmatpush1.bf16.msra.mxu0 %v4205
    %4484 = vmatprep.subr.bf16.mxu0 %v4208
    %4485 = vmatpush1.bf16.msra.mxu0 %v4207
    %4486 = vmatprep.subr.bf16.mxu0 %v4210
    %4487 = vmatpush1.bf16.msra.mxu0 %v4209
    %4488 = vmatprep.subr.bf16.mxu0 %v4212
    %4489 = vmatpush1.bf16.msra.mxu0 %v4211
    %4490 = vmatprep.subr.bf16.mxu0 %v4214
    %4491 = vmatpush1.bf16.msra.mxu0 %v4213
    %4492 = vmatprep.mubr.bf16.mxu0 %v3614
    %4493 = vmatmul.mubr.bf16.gmra.mrb[0].mxu0 %v3613
    %v4494 = vpop.f32.mrb[0].mxu0
    %v4495 = vadd.f32 %v4442, %v4494
    %v4496 = vpop.f32.mrb[0].mxu0
    %v4497 = vadd.f32 %v4444, %v4496
    %v4498 = vpop.f32.mrb[0].mxu0
    %v4499 = vadd.f32 %v4446, %v4498
    %v4500 = vpop.f32.mrb[0].mxu0
    %v4501 = vadd.f32 %v4448, %v4500
    %4502 = vmatprep.mubr.bf16.mxu0 %v3622
    %4503 = vmatmul.mubr.bf16.gmra.mrb[0].mxu0 %v3621
    %v4504 = vpop.f32.mrb[0].mxu0
    %v4505 = vadd.f32 %v4452, %v4504
    %v4506 = vpop.f32.mrb[0].mxu0
    %v4507 = vadd.f32 %v4454, %v4506
    %v4508 = vpop.f32.mrb[0].mxu0
    %v4509 = vadd.f32 %v4456, %v4508
    %v4510 = vpop.f32.mrb[0].mxu0
    %v4511 = vadd.f32 %v4458, %v4510
    %4512 = vdwg.mxu0
    %4513 = vmatprep.subr.bf16.mxu0 %v4216
    %4514 = vmatpush1.bf16.msra.mxu0 %v4215
    %4515 = vmatprep.subr.bf16.mxu0 %v4218
    %4516 = vmatpush1.bf16.msra.mxu0 %v4217
    %4517 = vmatprep.subr.bf16.mxu0 %v4220
    %4518 = vmatpush1.bf16.msra.mxu0 %v4219
    %4519 = vmatprep.subr.bf16.mxu0 %v4222
    %4520 = vmatpush1.bf16.msra.mxu0 %v4221
    %4521 = vmatprep.subr.bf16.mxu0 %v4224
    %4522 = vmatpush1.bf16.msra.mxu0 %v4223
    %4523 = vmatprep.subr.bf16.mxu0 %v4226
    %4524 = vmatpush1.bf16.msra.mxu0 %v4225
    %4525 = vmatprep.subr.bf16.mxu0 %v4228
    %4526 = vmatpush1.bf16.msra.mxu0 %v4227
    %4527 = vmatprep.subr.bf16.mxu0 %v4230
    %4528 = vmatpush1.bf16.msra.mxu0 %v4229
    %4529 = vmatprep.subr.bf16.mxu0 %v4232
    %4530 = vmatpush1.bf16.msra.mxu0 %v4231
    %4531 = vmatprep.subr.bf16.mxu0 %v4234
    %4532 = vmatpush1.bf16.msra.mxu0 %v4233
    %4533 = vmatprep.subr.bf16.mxu0 %v4236
    %4534 = vmatpush1.bf16.msra.mxu0 %v4235
    %4535 = vmatprep.subr.bf16.mxu0 %v4238
    %4536 = vmatpush1.bf16.msra.mxu0 %v4237
    %4537 = vmatprep.subr.bf16.mxu0 %v4240
    %4538 = vmatpush1.bf16.msra.mxu0 %v4239
    %4539 = vmatprep.subr.bf16.mxu0 %v4242
    %4540 = vmatpush1.bf16.msra.mxu0 %v4241
    %4541 = vmatprep.subr.bf16.mxu0 %v4244
    %4542 = vmatpush1.bf16.msra.mxu0 %v4243
    %4543 = vmatprep.subr.bf16.mxu0 %v4246
    %4544 = vmatpush1.bf16.msra.mxu0 %v4245
    %4545 = vmatprep.mubr.bf16.mxu0 %v3616
    %4546 = vmatmul.mubr.bf16.gmra.mrb[0].mxu0 %v3615
    %v4547 = vpop.f32.mrb[0].mxu0
    %v4548 = vadd.f32 %v4495, %v4547
    %v4549 = vpop.f32.mrb[0].mxu0
    %v4550 = vadd.f32 %v4497, %v4549
    %v4551 = vpop.f32.mrb[0].mxu0
    %v4552 = vadd.f32 %v4499, %v4551
    %v4553 = vpop.f32.mrb[0].mxu0
    %v4554 = vadd.f32 %v4501, %v4553
    %4555 = vmatprep.mubr.bf16.mxu0 %v3624
    %4556 = vmatmul.mubr.bf16.gmra.mrb[0].mxu0 %v3623
    %v4557 = vpop.f32.mrb[0].mxu0
    %v4558 = vadd.f32 %v4505, %v4557
    %v4559 = vpop.f32.mrb[0].mxu0
    %v4560 = vadd.f32 %v4507, %v4559
    %v4561 = vpop.f32.mrb[0].mxu0
    %v4562 = vadd.f32 %v4509, %v4561
    %v4563 = vpop.f32.mrb[0].mxu0
    %v4564 = vadd.f32 %v4511, %v4563
    %4565 = vdwg.mxu0
    %4566 = vmatprep.subr.bf16.mxu0 %v4248
    %4567 = vmatpush1.bf16.msra.mxu0 %v4247
    %4568 = vmatprep.subr.bf16.mxu0 %v4250
    %4569 = vmatpush1.bf16.msra.mxu0 %v4249
    %4570 = vmatprep.subr.bf16.mxu0 %v4252
    %4571 = vmatpush1.bf16.msra.mxu0 %v4251
    %4572 = vmatprep.subr.bf16.mxu0 %v4254
    %4573 = vmatpush1.bf16.msra.mxu0 %v4253
    %4574 = vmatprep.subr.bf16.mxu0 %v4256
    %4575 = vmatpush1.bf16.msra.mxu0 %v4255
    %4576 = vmatprep.subr.bf16.mxu0 %v4258
    %4577 = vmatpush1.bf16.msra.mxu0 %v4257
    %4578 = vmatprep.subr.bf16.mxu0 %v4260
    %4579 = vmatpush1.bf16.msra.mxu0 %v4259
    %4580 = vmatprep.subr.bf16.mxu0 %v4262
    %4581 = vmatpush1.bf16.msra.mxu0 %v4261
    %4582 = vmatprep.subr.bf16.mxu0 %v4264
    %4583 = vmatpush1.bf16.msra.mxu0 %v4263
    %4584 = vmatprep.subr.bf16.mxu0 %v4266
    %4585 = vmatpush1.bf16.msra.mxu0 %v4265
    %4586 = vmatprep.subr.bf16.mxu0 %v4268
    %4587 = vmatpush1.bf16.msra.mxu0 %v4267
    %4588 = vmatprep.subr.bf16.mxu0 %v4270
    %4589 = vmatpush1.bf16.msra.mxu0 %v4269
    %4590 = vmatprep.subr.bf16.mxu0 %v4272
    %4591 = vmatpush1.bf16.msra.mxu0 %v4271
    %4592 = vmatprep.subr.bf16.mxu0 %v4274
    %4593 = vmatpush1.bf16.msra.mxu0 %v4273
    %4594 = vmatprep.subr.bf16.mxu0 %v4276
    %4595 = vmatpush1.bf16.msra.mxu0 %v4275
    %4596 = vmatprep.subr.bf16.mxu0 %v4278
    %4597 = vmatpush1.bf16.msra.mxu0 %v4277
    %4598 = vmatprep.mubr.bf16.mxu0 %v3618
    %4599 = vmatmul.mubr.bf16.gmra.mrb[0].mxu0 %v3617
    %v4600 = vpop.f32.mrb[0].mxu0
    %v4601 = vadd.f32 %v4548, %v4600
    %v4602 = vpop.f32.mrb[0].mxu0
    %v4603 = vadd.f32 %v4550, %v4602
    %v4604 = vpop.f32.mrb[0].mxu0
    %v4605 = vadd.f32 %v4552, %v4604
    %v4606 = vpop.f32.mrb[0].mxu0
    %v4607 = vadd.f32 %v4554, %v4606
    %4608 = vmatprep.mubr.bf16.mxu0 %v3626
    %4609 = vmatmul.mubr.bf16.gmra.mrb[0].mxu0 %v3625
    %v4610 = vpop.f32.mrb[0].mxu0
    %v4611 = vadd.f32 %v4558, %v4610
    %v4612 = vpop.f32.mrb[0].mxu0
    %v4613 = vadd.f32 %v4560, %v4612
    %v4614 = vpop.f32.mrb[0].mxu0
    %v4615 = vadd.f32 %v4562, %v4614
    %v4616 = vpop.f32.mrb[0].mxu0
    %v4617 = vadd.f32 %v4564, %v4616
    %4618 = vdwg.mxu0
    %v4619 = vadd.f32 %v4601, %v2417
    %v4620 = vadd.f32 %v4603, %v2418
    %v4621 = vadd.f32 %v4605, %v2419
    %v4622 = vadd.f32 %v4607, %v2420
    %v4623 = vadd.f32 %v4611, %v2421
    %v4624 = vadd.f32 %v4613, %v2422
    %v4625 = vadd.f32 %v4615, %v2423
    %v4626 = vadd.f32 %v4617, %v2424
    %v4627 = vld [vmem:[%s12] sm:$0x3]
    %v4628 = vld [vmem:[%s13] sm:$0x3]
    %v4629 = vadd.f32 %v4619, %v4620
    %4630 = vadd.xlane.f32.xlu0 %v4629
    %v4631 = vpop.xlane.xlu0 %4630
    %v4632 = vadd.f32 %v4621, %v4622
    %4633 = vadd.xlane.f32.xlu0 %v4632
    %v4634 = vpop.xlane.xlu0 %4633
    %v4635 = vadd.f32 %v4623, %v4624
    %4636 = vadd.xlane.f32.xlu0 %v4635
    %v4637 = vpop.xlane.xlu0 %4636
    %v4638 = vadd.f32 %v4625, %v4626
    %4639 = vadd.xlane.f32.xlu0 %v4638
    %v4640 = vpop.xlane.xlu0 %4639
    %v4641 = vmul.f32 %v4631, %v2334
    %v4642 = vmul.f32 %v4634, %v2334
    %v4643 = vmul.f32 %v4637, %v2334
    %v4644 = vmul.f32 %v4640, %v2334
    %v4645 = vsub.f32 %v4619, %v4641
    %v4646 = vsub.f32 %v4620, %v4641
    %v4647 = vsub.f32 %v4621, %v4642
    %v4648 = vsub.f32 %v4622, %v4642
    %v4649 = vsub.f32 %v4623, %v4643
    %v4650 = vsub.f32 %v4624, %v4643
    %v4651 = vsub.f32 %v4625, %v4644
    %v4652 = vsub.f32 %v4626, %v4644
    %v4653 = vmul.f32 %v4645, %v4645
    %v4654 = vmul.f32 %v4646, %v4646
    %v4655 = vmul.f32 %v4647, %v4647
    %v4656 = vmul.f32 %v4648, %v4648
    %v4657 = vmul.f32 %v4649, %v4649
    %v4658 = vmul.f32 %v4650, %v4650
    %v4659 = vmul.f32 %v4651, %v4651
    %v4660 = vmul.f32 %v4652, %v4652
    %v4661 = vadd.f32 %v4653, %v4654
    %4662 = vadd.xlane.f32.xlu0 %v4661
    %v4663 = vpop.xlane.xlu0 %4662
    %v4664 = vadd.f32 %v4655, %v4656
    %4665 = vadd.xlane.f32.xlu0 %v4664
    %v4666 = vpop.xlane.xlu0 %4665
    %v4667 = vadd.f32 %v4657, %v4658
    %4668 = vadd.xlane.f32.xlu0 %v4667
    %v4669 = vpop.xlane.xlu0 %4668
    %v4670 = vadd.f32 %v4659, %v4660
    %4671 = vadd.xlane.f32.xlu0 %v4670
    %v4672 = vpop.xlane.xlu0 %4671
    %v4673 = vmul.f32 %v4663, %v2334
    %v4674 = vmul.f32 %v4666, %v2334
    %v4675 = vmul.f32 %v4669, %v2334
    %v4676 = vmul.f32 %v4672, %v2334
    %v4677 = vadd.f32 %v4673, 1e-12
    %v4678 = vadd.f32 %v4674, 1e-12
    %v4679 = vadd.f32 %v4675, 1e-12
    %v4680 = vadd.f32 %v4676, 1e-12
    %v4681 = vrsqrt.pop %v4677
    %v4682 = vrsqrt.pop %v4678
    %v4683 = vrsqrt.pop %v4679
    %v4684 = vrsqrt.pop %v4680
    %v4685 = vmul.f32 %v4645, %v4681
    %v4686 = vmul.f32 %v4646, %v4681
    %v4687 = vmul.f32 %v4647, %v4682
    %v4688 = vmul.f32 %v4648, %v4682
    %v4689 = vmul.f32 %v4649, %v4683
    %v4690 = vmul.f32 %v4650, %v4683
    %v4691 = vmul.f32 %v4651, %v4684
    %v4692 = vmul.f32 %v4652, %v4684
    %v4694 = vlaneseq
    %v4695 = vshrl.u32 %v4694, 7
    %v4696 = vsub.s32 0, %v4695
    %v4697 = vrot.slane %v4627, %v4696
    %v4698 = vlaneseq
    %v4699 = vshrl.u32 %v4698, 7
    %v4700 = vsub.s32 1, %v4699
    %v4701 = vrot.slane %v4627, %v4700
    %v4704 = vmul.f32 %v4685, %v4697
    %v4705 = vmul.f32 %v4686, %v4701
    %v4706 = vmul.f32 %v4687, %v4697
    %v4707 = vmul.f32 %v4688, %v4701
    %v4708 = vmul.f32 %v4689, %v4697
    %v4709 = vmul.f32 %v4690, %v4701
    %v4710 = vmul.f32 %v4691, %v4697
    %v4711 = vmul.f32 %v4692, %v4701
    %v4713 = vlaneseq
    %v4714 = vshrl.u32 %v4713, 7
    %v4715 = vsub.s32 0, %v4714
    %v4716 = vrot.slane %v4628, %v4715
    %v4717 = vlaneseq
    %v4718 = vshrl.u32 %v4717, 7
    %v4719 = vsub.s32 1, %v4718
    %v4720 = vrot.slane %v4628, %v4719
    %v4723 = vadd.f32 %v4704, %v4716
    %v4724 = vadd.f32 %v4705, %v4720
    %v4725 = vadd.f32 %v4706, %v4716
    %v4726 = vadd.f32 %v4707, %v4720
    %v4727 = vadd.f32 %v4708, %v4716
    %v4728 = vadd.f32 %v4709, %v4720
    %v4729 = vadd.f32 %v4710, %v4716
    %v4730 = vadd.f32 %v4711, %v4720
    %4731 = vst [vmem:[#allocation13] sm:$0xff] %v4723
    %4732 = vst [vmem:[#allocation13 + $0x8] sm:$0xff] %v4724
    %4733 = vst [vmem:[#allocation13 + $0x10] sm:$0xff] %v4725
    %4734 = vst [vmem:[#allocation13 + $0x18] sm:$0xff] %v4726
    %4735 = vst [vmem:[#allocation13 + $0x20] sm:$0xff] %v4727
    %4736 = vst [vmem:[#allocation13 + $0x28] sm:$0xff] %v4728
    %4737 = vst [vmem:[#allocation13 + $0x30] sm:$0xff] %v4729
    %4738 = vst [vmem:[#allocation13 + $0x38] sm:$0xff] %v4730
    // Predicated region
    $region82: #{tpu_custom_call.1} parent=1 // pred_check
      _
    $region83: #{tpu_custom_call.1} parent=1 // pred_check_branch
      %4740 = sbr.rel (0) target = $region85
    $region84: #{tpu_custom_call.1} parent=1 // pred_region
      %s4742 = ssub.s32 1024, 1024
      %4743 = vsyncadd [#allocation4], %s4742
      %s4744 = sshll.u32 [#allocation13], 4
      %s4745 = int_to_ptr.vmem [resolvable:$true] %s4744
      %4750 = dma.vmem_to_hbm [thread:$0]  %s4745, 1024, %s14, [#allocation4], 256, 256, 16
    $region85: #{tpu_custom_call.1} parent=1 // pred_fallthru
      _
    // Predicated region
    $region86: #{tpu_custom_call.1} parent=1 // pred_check
      _
    $region87: #{tpu_custom_call.1} parent=1 // pred_check_branch
      %4752 = sbr.rel (0) target = $region89
    $region88: #{tpu_custom_call.1} parent=1 // pred_region
      %s4754 = ssub.s32 2048, 2048
      %4755 = vsyncadd [#allocation15], %s4754
      %s4756 = sshll.u32 [#allocation14], 4
      %s4757 = int_to_ptr.vmem [resolvable:$true] %s4756
      %4762 = dma.vmem_to_hbm [thread:$0]  %s4757, 2048, %s15, [#allocation15], 128, 128, 8
    $region89: #{tpu_custom_call.1} parent=1 // pred_fallthru
      _
    // Predicated region
    $region90: #{tpu_custom_call.1} parent=1 // pred_check
      _
    $region91: #{tpu_custom_call.1} parent=1 // pred_check_branch
      %4764 = sbr.rel (0) target = $region93
    $region92: #{tpu_custom_call.1} parent=1 // pred_region
      %4765 = dma.done [#allocation4], 1024
    $region93: #{tpu_custom_call.1} parent=1 // pred_fallthru
      _
    // Predicated region
    $region94: #{tpu_custom_call.1} parent=1 // pred_check
      _
    $region95: #{tpu_custom_call.1} parent=1 // pred_check_branch
      %4767 = sbr.rel (0) target = $region97
    $region96: #{tpu_custom_call.1} parent=1 // pred_region
      %4768 = dma.done [#allocation15], 2048
    $region97: #{tpu_custom_call.1} parent=1 // pred_fallthru
      _
    %4769 = vsyncpa [#allocation3], 1
    %4770 = vsyncpa [#allocation6], 1
    %4771 = vsyncpa [#allocation9], 1
    %4772 = vsyncpa [#allocation12], 1
    %4773 = vsyncpa [#allocation4], 1
    %4774 = vsyncpa [#allocation15], 1

</llo_original>
